<compile_context>
chip_gen: v6e
topology: v6e:2x2x1
jax: 0.10.0
libtpu: 0.0.40
codegen_flags: <defaults>
</compile_context>

<pallas_src>
import functools
import math

import jax
import jax.numpy as jnp
from jax import lax
from jax.experimental import pallas as pl
from jax.experimental.pallas import tpu as pltpu

_HI = jax.lax.Precision.HIGHEST


def _self_attention_kernel(x_ref, nbr_ref, coord_ref,
                           wq_ref, wk_ref, wv_ref,
                           wlq_ref, blq_ref, wlk_ref, blk_ref,
                           wlv_ref, blv_ref, wle_ref, ble_ref,
                           o_ref, *, pos_method, inv_scale):
    """One (batch, head) tile, channels-first: activations are (channels, N)
    with N on lanes.  The attention matrix is kept transposed,
    att_t[j, i] == attention[i, j] (keys j on sublanes, queries i on lanes),
    so the final `attention * v_context` lands directly in the (depth, N)
    output layout with no transposes."""
    f32 = jnp.float32
    x = x_ref[0]            # (q_in, N)
    nbr = nbr_ref[0]        # (k_in, N)
    coord = coord_ref[0]    # (3, N)

    # Per-head 1x1-conv projections (pure channel matmuls), N stays on lanes.
    q_cn = jnp.dot(wq_ref[...], x, precision=_HI, preferred_element_type=f32)    # (d, N)
    k_cn = jnp.dot(wk_ref[...], nbr, precision=_HI, preferred_element_type=f32)  # (d, N)
    v_cn = jnp.dot(wv_ref[...], nbr, precision=_HI, preferred_element_type=f32)  # (d, N)

    # energy_t[j, i] = sum_c k[c, j] * q[c, i]   ( == (q @ k^T)^T )
    energy_t = lax.dot_general(k_cn, q_cn, (((0,), (0,)), ((), ())),
                               precision=_HI, preferred_element_type=f32)         # (N, N)

    if pos_method == "method_i":
        # pe_type_energy: energy += Linear_energy(coord) (per-head slice).
        pos_e_t = jnp.dot(wle_ref[...], coord, precision=_HI,
                          preferred_element_type=f32)                             # (N, N)
        energy_t = energy_t + pos_e_t + ble_ref[...]
    if pos_method in ("method_ii", "method_iii"):
        # pe_type_q_comb: energy += q @ pos_q^T.
        pos_q_cn = (jnp.dot(wlq_ref[...], coord, precision=_HI,
                            preferred_element_type=f32) + blq_ref[...])           # (d, N)
        energy_t = energy_t + lax.dot_general(
            pos_q_cn, q_cn, (((0,), (0,)), ((), ())),
            precision=_HI, preferred_element_type=f32)
    if pos_method == "method_iii":
        # pe_type_k_comb: energy += k^T @ pos_k^T (valid iff depth == N, exactly
        # like the PyTorch code).
        pos_k_cn = (jnp.dot(wlk_ref[...], coord, precision=_HI,
                            preferred_element_type=f32) + blk_ref[...])           # (d, N)
        energy_t = energy_t + lax.dot_general(
            pos_k_cn, k_cn, (((0,), (1,)), ((), ())),
            precision=_HI, preferred_element_type=f32)

    # pe_type_v_comb: v_context = v + Linear_v(coord) (per-head slice).
    pos_v_cn = (jnp.dot(wlv_ref[...], coord, precision=_HI,
                        preferred_element_type=f32) + blv_ref[...])               # (d, N)
    v_ctx_cn = v_cn + pos_v_cn

    # softmax over keys == axis 0 of the transposed energy (sublane reduction).
    e = energy_t * inv_scale
    e_max = jnp.max(e, axis=0, keepdims=True)
    p = jnp.exp(e - e_max)
    att_t = p / jnp.sum(p, axis=0, keepdims=True)                                 # (N, N)

    # attention * v_context (elementwise, per the PyTorch module; needs d == N)
    # is already in the merged-head (v_out, N) output layout.
    o_ref[0] = (att_t * v_ctx_cn).astype(o_ref.dtype)


def _as_bcn(t):
    t = jnp.asarray(t, jnp.float32)
    if t.ndim == 4:          # PyTorch feeds (B, C, N, 1) to the 1x1 Conv2d.
        t = jnp.squeeze(t, axis=-1)
    return t


def self_attention_forward(coordinate, x, neighbors, params, num_heads,
                           att_score_method="dot_product",
                           pos_method="method_ii"):
    """coordinate: (B, 3, N); x: (B, q_in, N[, 1]); neighbors: (B, k_in, N[, 1]).
    Returns (B, v_out, N), matching the PyTorch module's output layout."""
    if att_score_method != "dot_product":
        raise NotImplementedError(
            "only Att_Score_method='dot_product' is implemented")
    if pos_method not in ("method_i", "method_ii", "method_iii"):
        raise ValueError(pos_method)

    wq, wk, wv, wlq, blq, wlk, blk, wlv, blv, wle, ble = params
    x = _as_bcn(x)
    neighbors = _as_bcn(neighbors)
    coordinate = _as_bcn(coordinate)

    B, q_in, N = x.shape
    k_in, v_in = wk.shape[1], wv.shape[1]
    q_out, k_out, v_out = wq.shape[0], wk.shape[0], wv.shape[0]
    if q_out != k_out or q_out != v_out:
        raise ValueError("q_out, k_out, v_out must match")
    if q_out % num_heads:
        raise ValueError("please set another value for num_heads!")
    d = q_out // num_heads
    if d != N:
        # The module's `attention * v_context` elementwise product only
        # broadcasts when head depth == num_points.
        raise ValueError(f"head depth ({d}) must equal num_points ({N})")
    if wle.shape[0] != num_heads * N:
        raise ValueError("linear_energy must map 3 -> num_points * num_heads")

    kernel = functools.partial(_self_attention_kernel,
                               pos_method=pos_method,
                               inv_scale=1.0 / math.sqrt(d))
    return pl.pallas_call(
        kernel,
        out_shape=jax.ShapeDtypeStruct((B, v_out, N), jnp.float32),
        grid_spec=pltpu.PrefetchScalarGridSpec(
            num_scalar_prefetch=0,
            grid=(B, num_heads),
            in_specs=[
                pl.BlockSpec((1, q_in, N), lambda b, h: (b, 0, 0)),
                pl.BlockSpec((1, k_in, N), lambda b, h: (b, 0, 0)),
                pl.BlockSpec((1, 3, N), lambda b, h: (b, 0, 0)),
                pl.BlockSpec((d, q_in), lambda b, h: (h, 0)),   # Wq (per head)
                pl.BlockSpec((d, k_in), lambda b, h: (h, 0)),   # Wk
                pl.BlockSpec((d, v_in), lambda b, h: (h, 0)),   # Wv
                pl.BlockSpec((d, 3), lambda b, h: (h, 0)),      # W linear_q
                pl.BlockSpec((d, 1), lambda b, h: (h, 0)),      # b linear_q
                pl.BlockSpec((d, 3), lambda b, h: (h, 0)),      # W linear_k
                pl.BlockSpec((d, 1), lambda b, h: (h, 0)),      # b linear_k
                pl.BlockSpec((d, 3), lambda b, h: (h, 0)),      # W linear_v
                pl.BlockSpec((d, 1), lambda b, h: (h, 0)),      # b linear_v
                pl.BlockSpec((N, 3), lambda b, h: (h, 0)),      # W linear_energy
                pl.BlockSpec((N, 1), lambda b, h: (h, 0)),      # b linear_energy
            ],
            out_specs=pl.BlockSpec((1, d, N), lambda b, h: (b, h, 0)),
        ),
        compiler_params=pltpu.CompilerParams(
            dimension_semantics=("parallel", "parallel")),
    )(x, neighbors, coordinate,
      wq, wk, wv, wlq, blq, wlk, blk, wlv, blv, wle, ble)


def init_params(key, q_in, k_in, v_in, q_out, k_out, v_out, num_heads,
                num_points):
    """Deterministic synthetic parameters (PyTorch-like uniform init)."""
    if k_in != v_in:
        raise ValueError("k_in and v_in should be the same!")
    ks = jax.random.split(key, 11)

    def u(k, shape, fan_in):
        bound = 1.0 / math.sqrt(fan_in)
        return jax.random.uniform(k, shape, jnp.float32, -bound, bound)

    wq = u(ks[0], (q_out, q_in), q_in)
    wk = u(ks[1], (k_out, k_in), k_in)
    wv = u(ks[2], (v_out, v_in), v_in)
    wlq = u(ks[3], (q_out, 3), 3)
    blq = u(ks[4], (q_out, 1), 3)
    wlk = u(ks[5], (k_out, 3), 3)
    blk = u(ks[6], (k_out, 1), 3)
    wlv = u(ks[7], (v_out, 3), 3)
    blv = u(ks[8], (v_out, 1), 3)
    wle = u(ks[9], (num_points * num_heads, 3), 3)
    ble = u(ks[10], (num_points * num_heads, 1), 3)
    return (wq, wk, wv, wlq, blq, wlk, blk, wlv, blv, wle, ble)


def reference_forward(coordinate, x, neighbors, params, num_heads, pos_method):
    """Pure-JAX mirror of the PyTorch forward ('dot_product' branch)."""
    wq, wk, wv, wlq, blq, wlk, blk, wlv, blv, wle, ble = params
    x = _as_bcn(x)
    neighbors = _as_bcn(neighbors)
    coord = _as_bcn(coordinate)
    B, _, N = x.shape
    H = num_heads
    d = wq.shape[0] // H

    def conv(w, inp):                          # (B, C_out, N)
        return jnp.einsum("oc,bcn->bon", w, inp, precision=_HI)

    def split_heads(t, depth):                 # (B, C, N) -> (B, H, N, depth)
        return t.reshape(t.shape[0], H, depth, t.shape[2]).transpose(0, 1, 3, 2)

    def linear_pos(w, b, depth):               # -> (B, H, N, depth)
        pos = jnp.einsum("bcn,oc->bon", coord, w, precision=_HI) + b.reshape(1, -1, 1)
        return split_heads(pos, depth)

    q = split_heads(conv(wq, x), d)
    k = split_heads(conv(wk, neighbors), d)
    v = split_heads(conv(wv, neighbors), d)
    kT = k.transpose(0, 1, 3, 2)

    v_ctx = v + linear_pos(wlv, blv, d)
    energy = jnp.matmul(q, kT, precision=_HI)
    if pos_method == "method_i":
        energy = energy + linear_pos(wle, ble, N)
    if pos_method in ("method_ii", "method_iii"):
        pos_q = linear_pos(wlq, blq, d)
        energy = energy + jnp.matmul(q, pos_q.transpose(0, 1, 3, 2), precision=_HI)
    if pos_method == "method_iii":
        pos_k = linear_pos(wlk, blk, d)
        energy = energy + jnp.matmul(kT, pos_k.transpose(0, 1, 3, 2), precision=_HI)

    att = jax.nn.softmax(energy / math.sqrt(d), axis=-1)
    out = (att * v_ctx).transpose(0, 2, 1, 3)            # (B, N, H, d)
    out = out.reshape(B, N, H * d).transpose(0, 2, 1)    # (B, H*d, N)
    return out


if __name__ == "__main__":
    B, N, H = 2, 8, 2
    q_in = k_in = v_in = 16
    q_out = k_out = v_out = 16     # head depth = 8 == num_points (required by
                                   # the module's `attention * v_context`)

    key = jax.random.PRNGKey(0)
    kx, kn, kc, kp = jax.random.split(key, 4)
    x = jax.random.normal(kx, (B, q_in, N, 1), jnp.float32)      # Conv2d input
    neighbors = jax.random.normal(kn, (B, k_in, N, 1), jnp.float32)
    coordinate = jax.random.normal(kc, (B, 3, N), jnp.float32)
    params = init_params(kp, q_in, k_in, v_in, q_out, k_out, v_out, H, N)

    for pm in ("method_i", "method_ii", "method_iii"):
        out = self_attention_forward(coordinate, x, neighbors, params, H,
                                     att_score_method="dot_product",
                                     pos_method=pm)
        out = jax.block_until_ready(out)
        ref = reference_forward(coordinate, x, neighbors, params, H, pm)
        assert out.shape == (B, v_out, N), out.shape
        err = float(jnp.max(jnp.abs(out - ref)))
        assert jnp.allclose(out, ref, rtol=1e-4, atol=1e-4), (pm, err)
    print("KERNEL_OK")
</pallas_src>

<mosaic_0001>
module attributes {stable_mosaic.version = 11 : i64} {
  func.func @_self_attention_kernel(%arg0: i32, %arg1: i32, %arg2: memref<1x16x8xf32, #tpu.memory_space<vmem>>, %arg3: memref<1x16x8xf32, #tpu.memory_space<vmem>>, %arg4: memref<1x3x8xf32, #tpu.memory_space<vmem>>, %arg5: memref<8x16xf32, #tpu.memory_space<vmem>>, %arg6: memref<8x16xf32, #tpu.memory_space<vmem>>, %arg7: memref<8x16xf32, #tpu.memory_space<vmem>>, %arg8: memref<8x3xf32, #tpu.memory_space<vmem>>, %arg9: memref<8x1xf32, #tpu.memory_space<vmem>>, %arg10: memref<8x3xf32, #tpu.memory_space<vmem>>, %arg11: memref<8x1xf32, #tpu.memory_space<vmem>>, %arg12: memref<8x3xf32, #tpu.memory_space<vmem>>, %arg13: memref<8x1xf32, #tpu.memory_space<vmem>>, %arg14: memref<8x3xf32, #tpu.memory_space<vmem>>, %arg15: memref<8x1xf32, #tpu.memory_space<vmem>>, %arg16: memref<1x8x8xf32, #tpu.memory_space<vmem>>) attributes {dimension_semantics = [#tpu.dimension_semantics<parallel>, #tpu.dimension_semantics<parallel>], iteration_bounds = array<i64: 2, 2>, scalar_prefetch = 0 : i64, scratch_operands = 0 : i64, tpu.core_type = #tpu.core_type<tc>, window_params = [{transform_indices = @transform_0, window_bounds = array<i64: 1, 16, 8>}, {transform_indices = @transform_1, window_bounds = array<i64: 1, 16, 8>}, {transform_indices = @transform_2, window_bounds = array<i64: 1, 3, 8>}, {transform_indices = @transform_3, window_bounds = array<i64: 8, 16>}, {transform_indices = @transform_4, window_bounds = array<i64: 8, 16>}, {transform_indices = @transform_5, window_bounds = array<i64: 8, 16>}, {transform_indices = @transform_6, window_bounds = array<i64: 8, 3>}, {transform_indices = @transform_7, window_bounds = array<i64: 8, 1>}, {transform_indices = @transform_8, window_bounds = array<i64: 8, 3>}, {transform_indices = @transform_9, window_bounds = array<i64: 8, 1>}, {transform_indices = @transform_10, window_bounds = array<i64: 8, 3>}, {transform_indices = @transform_11, window_bounds = array<i64: 8, 1>}, {transform_indices = @transform_12, window_bounds = array<i64: 8, 3>}, {transform_indices = @transform_13, window_bounds = array<i64: 8, 1>}, {transform_indices = @transform_14, window_bounds = array<i64: 1, 8, 8>}]} {
    %c0 = arith.constant 0 : index
    %c0_0 = arith.constant 0 : index
    %c0_1 = arith.constant 0 : index
    %0 = vector.load %arg2[%c0, %c0_0, %c0_1] : memref<1x16x8xf32, #tpu.memory_space<vmem>>, vector<1x16x8xf32>
    %1 = vector.shape_cast %0 : vector<1x16x8xf32> to vector<16x8xf32>
    %c0_2 = arith.constant 0 : index
    %c0_3 = arith.constant 0 : index
    %c0_4 = arith.constant 0 : index
    %2 = vector.load %arg3[%c0_2, %c0_3, %c0_4] : memref<1x16x8xf32, #tpu.memory_space<vmem>>, vector<1x16x8xf32>
    %3 = vector.shape_cast %2 : vector<1x16x8xf32> to vector<16x8xf32>
    %c0_5 = arith.constant 0 : index
    %c0_6 = arith.constant 0 : index
    %c0_7 = arith.constant 0 : index
    %4 = vector.load %arg4[%c0_5, %c0_6, %c0_7] : memref<1x3x8xf32, #tpu.memory_space<vmem>>, vector<1x3x8xf32>
    %5 = vector.shape_cast %4 : vector<1x3x8xf32> to vector<3x8xf32>
    %c0_8 = arith.constant 0 : index
    %c0_9 = arith.constant 0 : index
    %6 = vector.load %arg5[%c0_8, %c0_9] : memref<8x16xf32, #tpu.memory_space<vmem>>, vector<8x16xf32>
    %cst = arith.constant dense<0.000000e+00> : vector<8x8xf32>
    %7 = tpu.matmul %6, %1, %cst {dimension_numbers = #tpu.dot_dimension_numbers<[1], [0], [0], [1], [0, 0, 1, 1], [], []>, precision = #tpu.contract_precision<fp32>} : vector<8x16xf32>, vector<16x8xf32>, vector<8x8xf32> -> vector<8x8xf32>
    %c0_10 = arith.constant 0 : index
    %c0_11 = arith.constant 0 : index
    %8 = vector.load %arg6[%c0_10, %c0_11] : memref<8x16xf32, #tpu.memory_space<vmem>>, vector<8x16xf32>
    %cst_12 = arith.constant dense<0.000000e+00> : vector<8x8xf32>
    %9 = tpu.matmul %8, %3, %cst_12 {dimension_numbers = #tpu.dot_dimension_numbers<[1], [0], [0], [1], [0, 0, 1, 1], [], []>, precision = #tpu.contract_precision<fp32>} : vector<8x16xf32>, vector<16x8xf32>, vector<8x8xf32> -> vector<8x8xf32>
    %c0_13 = arith.constant 0 : index
    %c0_14 = arith.constant 0 : index
    %10 = vector.load %arg7[%c0_13, %c0_14] : memref<8x16xf32, #tpu.memory_space<vmem>>, vector<8x16xf32>
    %cst_15 = arith.constant dense<0.000000e+00> : vector<8x8xf32>
    %11 = tpu.matmul %10, %3, %cst_15 {dimension_numbers = #tpu.dot_dimension_numbers<[1], [0], [0], [1], [0, 0, 1, 1], [], []>, precision = #tpu.contract_precision<fp32>} : vector<8x16xf32>, vector<16x8xf32>, vector<8x8xf32> -> vector<8x8xf32>
    %cst_16 = arith.constant dense<0.000000e+00> : vector<8x8xf32>
    %12 = tpu.matmul %9, %7, %cst_16 {dimension_numbers = #tpu.dot_dimension_numbers<[0], [0], [1], [1], [0, 1, 1, 1], [], []>, precision = #tpu.contract_precision<fp32>} : vector<8x8xf32>, vector<8x8xf32>, vector<8x8xf32> -> vector<8x8xf32>
    %c0_17 = arith.constant 0 : index
    %c0_18 = arith.constant 0 : index
    %13 = vector.load %arg14[%c0_17, %c0_18] : memref<8x3xf32, #tpu.memory_space<vmem>>, vector<8x3xf32>
    %cst_19 = arith.constant dense<0.000000e+00> : vector<8x8xf32>
    %14 = tpu.matmul %13, %5, %cst_19 {dimension_numbers = #tpu.dot_dimension_numbers<[1], [0], [0], [1], [0, 0, 1, 1], [], []>, precision = #tpu.contract_precision<fp32>} : vector<8x3xf32>, vector<3x8xf32>, vector<8x8xf32> -> vector<8x8xf32>
    %15 = arith.addf %12, %14 : vector<8x8xf32>
    %c0_20 = arith.constant 0 : index
    %c0_21 = arith.constant 0 : index
    %16 = vector.load %arg15[%c0_20, %c0_21] : memref<8x1xf32, #tpu.memory_space<vmem>>, vector<8x1xf32>
    %17 = vector.broadcast %16 : vector<8x1xf32> to vector<8x8xf32>
    %18 = arith.addf %15, %17 : vector<8x8xf32>
    %c0_22 = arith.constant 0 : index
    %c0_23 = arith.constant 0 : index
    %19 = vector.load %arg12[%c0_22, %c0_23] : memref<8x3xf32, #tpu.memory_space<vmem>>, vector<8x3xf32>
    %cst_24 = arith.constant dense<0.000000e+00> : vector<8x8xf32>
    %20 = tpu.matmul %19, %5, %cst_24 {dimension_numbers = #tpu.dot_dimension_numbers<[1], [0], [0], [1], [0, 0, 1, 1], [], []>, precision = #tpu.contract_precision<fp32>} : vector<8x3xf32>, vector<3x8xf32>, vector<8x8xf32> -> vector<8x8xf32>
    %c0_25 = arith.constant 0 : index
    %c0_26 = arith.constant 0 : index
    %21 = vector.load %arg13[%c0_25, %c0_26] : memref<8x1xf32, #tpu.memory_space<vmem>>, vector<8x1xf32>
    %22 = vector.broadcast %21 : vector<8x1xf32> to vector<8x8xf32>
    %23 = arith.addf %20, %22 : vector<8x8xf32>
    %24 = arith.addf %11, %23 : vector<8x8xf32>
    %cst_27 = arith.constant 0.353553385 : f32
    %25 = vector.broadcast %cst_27 : f32 to vector<8x8xf32>
    %26 = arith.mulf %18, %25 : vector<8x8xf32>
    %cst_28 = arith.constant dense<0xFF800000> : vector<8xf32>
    %27 = vector.multi_reduction <maximumf>, %26, %cst_28 [0] : vector<8x8xf32> to vector<8xf32>
    %28 = vector.shape_cast %27 : vector<8xf32> to vector<1x8xf32>
    %29 = vector.broadcast %28 : vector<1x8xf32> to vector<8x8xf32>
    %30 = arith.subf %26, %29 : vector<8x8xf32>
    %31 = math.exp %30 : vector<8x8xf32>
    %cst_29 = arith.constant dense<0.000000e+00> : vector<8xf32>
    %32 = vector.multi_reduction <add>, %31, %cst_29 [0] : vector<8x8xf32> to vector<8xf32>
    %33 = vector.shape_cast %32 : vector<8xf32> to vector<1x8xf32>
    %34 = vector.broadcast %33 : vector<1x8xf32> to vector<8x8xf32>
    %35 = arith.divf %31, %34 : vector<8x8xf32>
    %36 = arith.mulf %35, %24 : vector<8x8xf32>
    %c0_30 = arith.constant 0 : index
    %c0_31 = arith.constant 0 : index
    %c0_32 = arith.constant 0 : index
    %37 = vector.load %arg16[%c0_30, %c0_31, %c0_32] : memref<1x8x8xf32, #tpu.memory_space<vmem>>, vector<1x8x8xf32>
    %38 = vector.shape_cast %37 : vector<1x8x8xf32> to vector<8x8xf32>
    %39 = vector.shape_cast %36 : vector<8x8xf32> to vector<1x8x8xf32>
    tpu.vector_store %arg16[%c0_30, %c0_31, %c0_32], %39 {strides = array<i32>} : memref<1x8x8xf32, #tpu.memory_space<vmem>>, vector<1x8x8xf32>,
    return
  }
  func.func @transform_0(%arg0: i32, %arg1: i32) -> (i32, i32, i32) {
    %c0_i32 = arith.constant 0 : i32
    %c0_i32_0 = arith.constant 0 : i32
    %c0_i32_1 = arith.constant 0 : i32
    return %arg0, %c0_i32, %c0_i32_0 : i32, i32, i32
  }
  func.func @transform_1(%arg0: i32, %arg1: i32) -> (i32, i32, i32) {
    %c0_i32 = arith.constant 0 : i32
    %c0_i32_0 = arith.constant 0 : i32
    %c0_i32_1 = arith.constant 0 : i32
    return %arg0, %c0_i32, %c0_i32_0 : i32, i32, i32
  }
  func.func @transform_2(%arg0: i32, %arg1: i32) -> (i32, i32, i32) {
    %c0_i32 = arith.constant 0 : i32
    %c0_i32_0 = arith.constant 0 : i32
    %c0_i32_1 = arith.constant 0 : i32
    return %arg0, %c0_i32, %c0_i32_0 : i32, i32, i32
  }
  func.func @transform_3(%arg0: i32, %arg1: i32) -> (i32, i32) {
    %c0_i32 = arith.constant 0 : i32
    %c0_i32_0 = arith.constant 0 : i32
    return %arg1, %c0_i32 : i32, i32
  }
  func.func @transform_4(%arg0: i32, %arg1: i32) -> (i32, i32) {
    %c0_i32 = arith.constant 0 : i32
    %c0_i32_0 = arith.constant 0 : i32
    return %arg1, %c0_i32 : i32, i32
  }
  func.func @transform_5(%arg0: i32, %arg1: i32) -> (i32, i32) {
    %c0_i32 = arith.constant 0 : i32
    %c0_i32_0 = arith.constant 0 : i32
    return %arg1, %c0_i32 : i32, i32
  }
  func.func @transform_6(%arg0: i32, %arg1: i32) -> (i32, i32) {
    %c0_i32 = arith.constant 0 : i32
    %c0_i32_0 = arith.constant 0 : i32
    return %arg1, %c0_i32 : i32, i32
  }
  func.func @transform_7(%arg0: i32, %arg1: i32) -> (i32, i32) {
    %c0_i32 = arith.constant 0 : i32
    %c0_i32_0 = arith.constant 0 : i32
    return %arg1, %c0_i32 : i32, i32
  }
  func.func @transform_8(%arg0: i32, %arg1: i32) -> (i32, i32) {
    %c0_i32 = arith.constant 0 : i32
    %c0_i32_0 = arith.constant 0 : i32
    return %arg1, %c0_i32 : i32, i32
  }
  func.func @transform_9(%arg0: i32, %arg1: i32) -> (i32, i32) {
    %c0_i32 = arith.constant 0 : i32
    %c0_i32_0 = arith.constant 0 : i32
    return %arg1, %c0_i32 : i32, i32
  }
  func.func @transform_10(%arg0: i32, %arg1: i32) -> (i32, i32) {
    %c0_i32 = arith.constant 0 : i32
    %c0_i32_0 = arith.constant 0 : i32
    return %arg1, %c0_i32 : i32, i32
  }
  func.func @transform_11(%arg0: i32, %arg1: i32) -> (i32, i32) {
    %c0_i32 = arith.constant 0 : i32
    %c0_i32_0 = arith.constant 0 : i32
    return %arg1, %c0_i32 : i32, i32
  }
  func.func @transform_12(%arg0: i32, %arg1: i32) -> (i32, i32) {
    %c0_i32 = arith.constant 0 : i32
    %c0_i32_0 = arith.constant 0 : i32
    return %arg1, %c0_i32 : i32, i32
  }
  func.func @transform_13(%arg0: i32, %arg1: i32) -> (i32, i32) {
    %c0_i32 = arith.constant 0 : i32
    %c0_i32_0 = arith.constant 0 : i32
    return %arg1, %c0_i32 : i32, i32
  }
  func.func @transform_14(%arg0: i32, %arg1: i32) -> (i32, i32, i32) {
    %c0_i32 = arith.constant 0 : i32
    %c0_i32_0 = arith.constant 0 : i32
    return %arg0, %arg1, %c0_i32 : i32, i32, i32
  }
}

</mosaic_0001>

<llo_original>
// kernel: tpu_custom_call.1
$region0: #{tpu_custom_call.1}
  #allocation0 [shape = 'u32[]', space=smem, size = 0x4, offset = 0x4, fixed_abs, tag = 'smem constant byte address 0x4 - core index']
  #allocation1 [shape = 'u32[144,128]{1,0:T(1,128)}', space=vmem, size = 0x12000, scoped, tag = 'internal scratch']
  %s0 = inlined_call_operand.vmem [shape: f32[2,16,8], index: 0, kind: input, shape index: {}]
  %s1 = inlined_call_operand.vmem [shape: f32[2,16,8], index: 1, kind: input, shape index: {}]
  %s2 = inlined_call_operand.vmem [shape: f32[2,3,8], index: 2, kind: input, shape index: {}]
  %s3 = inlined_call_operand.vmem [shape: f32[16,16], index: 3, kind: input, shape index: {}]
  %s4 = inlined_call_operand.vmem [shape: f32[16,16], index: 4, kind: input, shape index: {}]
  %s5 = inlined_call_operand.vmem [shape: f32[16,16], index: 5, kind: input, shape index: {}]
  %s6 = inlined_call_operand.vmem [shape: f32[16,3], index: 6, kind: input, shape index: {}]
  %s7 = inlined_call_operand.vmem [shape: f32[16,1], index: 7, kind: input, shape index: {}]
  %s8 = inlined_call_operand.vmem [shape: f32[16,3], index: 8, kind: input, shape index: {}]
  %s9 = inlined_call_operand.vmem [shape: f32[16,1], index: 9, kind: input, shape index: {}]
  %s10 = inlined_call_operand.vmem [shape: f32[16,3], index: 10, kind: input, shape index: {}]
  %s11 = inlined_call_operand.vmem [shape: f32[16,1], index: 11, kind: input, shape index: {}]
  %s12 = inlined_call_operand.vmem [shape: f32[16,3], index: 12, kind: input, shape index: {}]
  %s13 = inlined_call_operand.vmem [shape: f32[16,1], index: 13, kind: input, shape index: {}]
  %s14 = inlined_call_operand.vmem [shape: f32[2,16,8], index: 14, kind: output, shape index: {}]
  %s15 = sld [smem:[#allocation0]]
  $region89: #{tpu_custom_call.1} parent=0
    _
  %s17 = ssub.s32 1, %s15
  %s18 = scalar_select 0, %s17, %s15
  loop: start=0, step=1, limit=6
  $region2: #{tpu_custom_call.1} parent=0 // loop_pre_header
    _
  $region3: #{tpu_custom_call.1} parent=0 // loop_header
    %s20 = sphi 0, %s24
    %p21 = scmp.ge.s32.totalorder %s20, 6
    %s27 = sphi 0, %s39
    %s28 = sphi 0, %s35
    %s29 = sphi 0, %s27
    %s30 = sphi 0, %s28
    %s31 = sphi 0, %s29
    %s32 = sphi 0, %s30
    %s42 = sphi 0, %s44
    %s45 = sphi 0, %s42
    %s46 = sphi 0, %s45
    %s62 = sphi 0, %s46
    %s68 = sphi 0, %s70
    %s71 = sphi 0, %s68
    %s72 = sphi 0, %s71
    %s88 = sphi 0, %s72
    %s94 = sphi 0, %s96
    %s97 = sphi 0, %s94
    %s98 = sphi 0, %s97
    %s114 = sphi 0, %s98
    %s120 = sphi 0, %s122
    %s123 = sphi 0, %s120
    %s124 = sphi 0, %s123
    %s140 = sphi 0, %s124
    %s146 = sphi 0, %s148
    %s149 = sphi 0, %s146
    %s150 = sphi 0, %s149
    %s166 = sphi 0, %s150
    %s172 = sphi 0, %s174
    %s175 = sphi 0, %s172
    %s176 = sphi 0, %s175
    %s192 = sphi 0, %s176
    %s198 = sphi 0, %s200
    %s201 = sphi 0, %s198
    %s202 = sphi 0, %s201
    %s218 = sphi 0, %s202
    %s224 = sphi 0, %s226
    %s227 = sphi 0, %s224
    %s228 = sphi 0, %s227
    %s244 = sphi 0, %s228
    %s250 = sphi 0, %s252
    %s253 = sphi 0, %s250
    %s254 = sphi 0, %s253
    %s270 = sphi 0, %s254
    %s276 = sphi 0, %s278
    %s279 = sphi 0, %s276
    %s280 = sphi 0, %s279
    %s296 = sphi 0, %s280
    %s302 = sphi 0, %s304
    %s305 = sphi 0, %s302
    %s306 = sphi 0, %s305
    %s322 = sphi 0, %s306
    %s328 = sphi 0, %s330
    %s331 = sphi 0, %s328
    %s332 = sphi 0, %s331
    %s348 = sphi 0, %s332
    %s354 = sphi 0, %s356
    %s357 = sphi 0, %s354
    %s358 = sphi 0, %s357
    %s374 = sphi 0, %s358
    %s380 = sphi 0, %s382
    %s383 = sphi 0, %s380
    %s384 = sphi 0, %s383
    %s400 = sphi 0, %s384
    %s408 = sphi 0, %s410
    %s411 = sphi 0, %s408
    %s412 = sphi 0, %s411
    %s428 = sphi 0, %s412
  $region4: #{tpu_custom_call.1} parent=0 // loop_header_branch
    %23 = sbr.rel (%p21) target = $region8
  $region5: #{tpu_custom_call.1} parent=0 // loop_body
    %s25 = ssub.s32 %s20, 1
    %s26 = ssub.s32 %s20, 2
    %s33 = sadd.s32 1, %s28
    %p34 = scmp.ge.s32.totalorder %s33, 2
    %s35 = scalar_select %p34, 0, %s33
    %s36 = sadd.s32 1, %s27
    %s37 = scalar_select %p34, %s36, %s27
    %p38 = scmp.ge.s32.totalorder %s37, 2
    %s39 = scalar_select %p38, 0, %s37
    %s40 = ssub.s32 %s27, %s39
    %p41 = scmp.eq.s32.totalorder %s40, 0
    %s43 = sadd.s32 %s42, 1
    %s44 = scalar_select %p41, %s42, %s43
    %p47 = pneg %p41
    %p48 = scmp.eq.s32.totalorder %s20, 3
    %p49 = por %p47, %p48
    %p50 = scmp.ne.s32.totalorder %s42, %s45
    %p51 = scmp.eq.s32.totalorder %s20, 0
    %p52 = por %p50, %p51
    %p53 = scmp.ne.s32.totalorder %s42, %s45
    %p54 = scmp.eq.s32.totalorder %s25, 3
    %p55 = por %p53, %p54
    %p56 = scmp.ne.s32.totalorder %s45, %s46
    %p57 = scmp.eq.s32.totalorder %s25, 0
    %p58 = por %p56, %p57
    %p59 = scmp.ne.s32.totalorder %s45, %s46
    %p60 = scmp.eq.s32.totalorder %s26, 3
    %p61 = por %p59, %p60
    %p63 = scmp.ne.s32.totalorder %s46, %s62
    %p64 = scmp.eq.s32.totalorder %s26, 0
    %p65 = por %p63, %p64
    %s66 = ssub.s32 %s27, %s39
    %p67 = scmp.eq.s32.totalorder %s66, 0
    %s69 = sadd.s32 %s68, 1
    %s70 = scalar_select %p67, %s68, %s69
    %p73 = pneg %p67
    %p74 = scmp.eq.s32.totalorder %s20, 3
    %p75 = por %p73, %p74
    %p76 = scmp.ne.s32.totalorder %s68, %s71
    %p77 = scmp.eq.s32.totalorder %s20, 0
    %p78 = por %p76, %p77
    %p79 = scmp.ne.s32.totalorder %s68, %s71
    %p80 = scmp.eq.s32.totalorder %s25, 3
    %p81 = por %p79, %p80
    %p82 = scmp.ne.s32.totalorder %s71, %s72
    %p83 = scmp.eq.s32.totalorder %s25, 0
    %p84 = por %p82, %p83
    %p85 = scmp.ne.s32.totalorder %s71, %s72
    %p86 = scmp.eq.s32.totalorder %s26, 3
    %p87 = por %p85, %p86
    %p89 = scmp.ne.s32.totalorder %s72, %s88
    %p90 = scmp.eq.s32.totalorder %s26, 0
    %p91 = por %p89, %p90
    %s92 = ssub.s32 %s27, %s39
    %p93 = scmp.eq.s32.totalorder %s92, 0
    %s95 = sadd.s32 %s94, 1
    %s96 = scalar_select %p93, %s94, %s95
    %p99 = pneg %p93
    %p100 = scmp.eq.s32.totalorder %s20, 3
    %p101 = por %p99, %p100
    %p102 = scmp.ne.s32.totalorder %s94, %s97
    %p103 = scmp.eq.s32.totalorder %s20, 0
    %p104 = por %p102, %p103
    %p105 = scmp.ne.s32.totalorder %s94, %s97
    %p106 = scmp.eq.s32.totalorder %s25, 3
    %p107 = por %p105, %p106
    %p108 = scmp.ne.s32.totalorder %s97, %s98
    %p109 = scmp.eq.s32.totalorder %s25, 0
    %p110 = por %p108, %p109
    %p111 = scmp.ne.s32.totalorder %s97, %s98
    %p112 = scmp.eq.s32.totalorder %s26, 3
    %p113 = por %p111, %p112
    %p115 = scmp.ne.s32.totalorder %s98, %s114
    %p116 = scmp.eq.s32.totalorder %s26, 0
    %p117 = por %p115, %p116
    %s118 = ssub.s32 %s28, %s35
    %p119 = scmp.eq.s32.totalorder %s118, 0
    %s121 = sadd.s32 %s120, 1
    %s122 = scalar_select %p119, %s120, %s121
    %p125 = pneg %p119
    %p126 = scmp.eq.s32.totalorder %s20, 3
    %p127 = por %p125, %p126
    %p128 = scmp.ne.s32.totalorder %s120, %s123
    %p129 = scmp.eq.s32.totalorder %s20, 0
    %p130 = por %p128, %p129
    %p131 = scmp.ne.s32.totalorder %s120, %s123
    %p132 = scmp.eq.s32.totalorder %s25, 3
    %p133 = por %p131, %p132
    %p134 = scmp.ne.s32.totalorder %s123, %s124
    %p135 = scmp.eq.s32.totalorder %s25, 0
    %p136 = por %p134, %p135
    %p137 = scmp.ne.s32.totalorder %s123, %s124
    %p138 = scmp.eq.s32.totalorder %s26, 3
    %p139 = por %p137, %p138
    %p141 = scmp.ne.s32.totalorder %s124, %s140
    %p142 = scmp.eq.s32.totalorder %s26, 0
    %p143 = por %p141, %p142
    %s144 = ssub.s32 %s28, %s35
    %p145 = scmp.eq.s32.totalorder %s144, 0
    %s147 = sadd.s32 %s146, 1
    %s148 = scalar_select %p145, %s146, %s147
    %p151 = pneg %p145
    %p152 = scmp.eq.s32.totalorder %s20, 3
    %p153 = por %p151, %p152
    %p154 = scmp.ne.s32.totalorder %s146, %s149
    %p155 = scmp.eq.s32.totalorder %s20, 0
    %p156 = por %p154, %p155
    %p157 = scmp.ne.s32.totalorder %s146, %s149
    %p158 = scmp.eq.s32.totalorder %s25, 3
    %p159 = por %p157, %p158
    %p160 = scmp.ne.s32.totalorder %s149, %s150
    %p161 = scmp.eq.s32.totalorder %s25, 0
    %p162 = por %p160, %p161
    %p163 = scmp.ne.s32.totalorder %s149, %s150
    %p164 = scmp.eq.s32.totalorder %s26, 3
    %p165 = por %p163, %p164
    %p167 = scmp.ne.s32.totalorder %s150, %s166
    %p168 = scmp.eq.s32.totalorder %s26, 0
    %p169 = por %p167, %p168
    %s170 = ssub.s32 %s28, %s35
    %p171 = scmp.eq.s32.totalorder %s170, 0
    %s173 = sadd.s32 %s172, 1
    %s174 = scalar_select %p171, %s172, %s173
    %p177 = pneg %p171
    %p178 = scmp.eq.s32.totalorder %s20, 3
    %p179 = por %p177, %p178
    %p180 = scmp.ne.s32.totalorder %s172, %s175
    %p181 = scmp.eq.s32.totalorder %s20, 0
    %p182 = por %p180, %p181
    %p183 = scmp.ne.s32.totalorder %s172, %s175
    %p184 = scmp.eq.s32.totalorder %s25, 3
    %p185 = por %p183, %p184
    %p186 = scmp.ne.s32.totalorder %s175, %s176
    %p187 = scmp.eq.s32.totalorder %s25, 0
    %p188 = por %p186, %p187
    %p189 = scmp.ne.s32.totalorder %s175, %s176
    %p190 = scmp.eq.s32.totalorder %s26, 3
    %p191 = por %p189, %p190
    %p193 = scmp.ne.s32.totalorder %s176, %s192
    %p194 = scmp.eq.s32.totalorder %s26, 0
    %p195 = por %p193, %p194
    %s196 = ssub.s32 %s28, %s35
    %p197 = scmp.eq.s32.totalorder %s196, 0
    %s199 = sadd.s32 %s198, 1
    %s200 = scalar_select %p197, %s198, %s199
    %p203 = pneg %p197
    %p204 = scmp.eq.s32.totalorder %s20, 3
    %p205 = por %p203, %p204
    %p206 = scmp.ne.s32.totalorder %s198, %s201
    %p207 = scmp.eq.s32.totalorder %s20, 0
    %p208 = por %p206, %p207
    %p209 = scmp.ne.s32.totalorder %s198, %s201
    %p210 = scmp.eq.s32.totalorder %s25, 3
    %p211 = por %p209, %p210
    %p212 = scmp.ne.s32.totalorder %s201, %s202
    %p213 = scmp.eq.s32.totalorder %s25, 0
    %p214 = por %p212, %p213
    %p215 = scmp.ne.s32.totalorder %s201, %s202
    %p216 = scmp.eq.s32.totalorder %s26, 3
    %p217 = por %p215, %p216
    %p219 = scmp.ne.s32.totalorder %s202, %s218
    %p220 = scmp.eq.s32.totalorder %s26, 0
    %p221 = por %p219, %p220
    %s222 = ssub.s32 %s28, %s35
    %p223 = scmp.eq.s32.totalorder %s222, 0
    %s225 = sadd.s32 %s224, 1
    %s226 = scalar_select %p223, %s224, %s225
    %p229 = pneg %p223
    %p230 = scmp.eq.s32.totalorder %s20, 3
    %p231 = por %p229, %p230
    %p232 = scmp.ne.s32.totalorder %s224, %s227
    %p233 = scmp.eq.s32.totalorder %s20, 0
    %p234 = por %p232, %p233
    %p235 = scmp.ne.s32.totalorder %s224, %s227
    %p236 = scmp.eq.s32.totalorder %s25, 3
    %p237 = por %p235, %p236
    %p238 = scmp.ne.s32.totalorder %s227, %s228
    %p239 = scmp.eq.s32.totalorder %s25, 0
    %p240 = por %p238, %p239
    %p241 = scmp.ne.s32.totalorder %s227, %s228
    %p242 = scmp.eq.s32.totalorder %s26, 3
    %p243 = por %p241, %p242
    %p245 = scmp.ne.s32.totalorder %s228, %s244
    %p246 = scmp.eq.s32.totalorder %s26, 0
    %p247 = por %p245, %p246
    %s248 = ssub.s32 %s28, %s35
    %p249 = scmp.eq.s32.totalorder %s248, 0
    %s251 = sadd.s32 %s250, 1
    %s252 = scalar_select %p249, %s250, %s251
    %p255 = pneg %p249
    %p256 = scmp.eq.s32.totalorder %s20, 3
    %p257 = por %p255, %p256
    %p258 = scmp.ne.s32.totalorder %s250, %s253
    %p259 = scmp.eq.s32.totalorder %s20, 0
    %p260 = por %p258, %p259
    %p261 = scmp.ne.s32.totalorder %s250, %s253
    %p262 = scmp.eq.s32.totalorder %s25, 3
    %p263 = por %p261, %p262
    %p264 = scmp.ne.s32.totalorder %s253, %s254
    %p265 = scmp.eq.s32.totalorder %s25, 0
    %p266 = por %p264, %p265
    %p267 = scmp.ne.s32.totalorder %s253, %s254
    %p268 = scmp.eq.s32.totalorder %s26, 3
    %p269 = por %p267, %p268
    %p271 = scmp.ne.s32.totalorder %s254, %s270
    %p272 = scmp.eq.s32.totalorder %s26, 0
    %p273 = por %p271, %p272
    %s274 = ssub.s32 %s28, %s35
    %p275 = scmp.eq.s32.totalorder %s274, 0
    %s277 = sadd.s32 %s276, 1
    %s278 = scalar_select %p275, %s276, %s277
    %p281 = pneg %p275
    %p282 = scmp.eq.s32.totalorder %s20, 3
    %p283 = por %p281, %p282
    %p284 = scmp.ne.s32.totalorder %s276, %s279
    %p285 = scmp.eq.s32.totalorder %s20, 0
    %p286 = por %p284, %p285
    %p287 = scmp.ne.s32.totalorder %s276, %s279
    %p288 = scmp.eq.s32.totalorder %s25, 3
    %p289 = por %p287, %p288
    %p290 = scmp.ne.s32.totalorder %s279, %s280
    %p291 = scmp.eq.s32.totalorder %s25, 0
    %p292 = por %p290, %p291
    %p293 = scmp.ne.s32.totalorder %s279, %s280
    %p294 = scmp.eq.s32.totalorder %s26, 3
    %p295 = por %p293, %p294
    %p297 = scmp.ne.s32.totalorder %s280, %s296
    %p298 = scmp.eq.s32.totalorder %s26, 0
    %p299 = por %p297, %p298
    %s300 = ssub.s32 %s28, %s35
    %p301 = scmp.eq.s32.totalorder %s300, 0
    %s303 = sadd.s32 %s302, 1
    %s304 = scalar_select %p301, %s302, %s303
    %p307 = pneg %p301
    %p308 = scmp.eq.s32.totalorder %s20, 3
    %p309 = por %p307, %p308
    %p310 = scmp.ne.s32.totalorder %s302, %s305
    %p311 = scmp.eq.s32.totalorder %s20, 0
    %p312 = por %p310, %p311
    %p313 = scmp.ne.s32.totalorder %s302, %s305
    %p314 = scmp.eq.s32.totalorder %s25, 3
    %p315 = por %p313, %p314
    %p316 = scmp.ne.s32.totalorder %s305, %s306
    %p317 = scmp.eq.s32.totalorder %s25, 0
    %p318 = por %p316, %p317
    %p319 = scmp.ne.s32.totalorder %s305, %s306
    %p320 = scmp.eq.s32.totalorder %s26, 3
    %p321 = por %p319, %p320
    %p323 = scmp.ne.s32.totalorder %s306, %s322
    %p324 = scmp.eq.s32.totalorder %s26, 0
    %p325 = por %p323, %p324
    %s326 = ssub.s32 %s28, %s35
    %p327 = scmp.eq.s32.totalorder %s326, 0
    %s329 = sadd.s32 %s328, 1
    %s330 = scalar_select %p327, %s328, %s329
    %p333 = pneg %p327
    %p334 = scmp.eq.s32.totalorder %s20, 3
    %p335 = por %p333, %p334
    %p336 = scmp.ne.s32.totalorder %s328, %s331
    %p337 = scmp.eq.s32.totalorder %s20, 0
    %p338 = por %p336, %p337
    %p339 = scmp.ne.s32.totalorder %s328, %s331
    %p340 = scmp.eq.s32.totalorder %s25, 3
    %p341 = por %p339, %p340
    %p342 = scmp.ne.s32.totalorder %s331, %s332
    %p343 = scmp.eq.s32.totalorder %s25, 0
    %p344 = por %p342, %p343
    %p345 = scmp.ne.s32.totalorder %s331, %s332
    %p346 = scmp.eq.s32.totalorder %s26, 3
    %p347 = por %p345, %p346
    %p349 = scmp.ne.s32.totalorder %s332, %s348
    %p350 = scmp.eq.s32.totalorder %s26, 0
    %p351 = por %p349, %p350
    %s352 = ssub.s32 %s28, %s35
    %p353 = scmp.eq.s32.totalorder %s352, 0
    %s355 = sadd.s32 %s354, 1
    %s356 = scalar_select %p353, %s354, %s355
    %p359 = pneg %p353
    %p360 = scmp.eq.s32.totalorder %s20, 3
    %p361 = por %p359, %p360
    %p362 = scmp.ne.s32.totalorder %s354, %s357
    %p363 = scmp.eq.s32.totalorder %s20, 0
    %p364 = por %p362, %p363
    %p365 = scmp.ne.s32.totalorder %s354, %s357
    %p366 = scmp.eq.s32.totalorder %s25, 3
    %p367 = por %p365, %p366
    %p368 = scmp.ne.s32.totalorder %s357, %s358
    %p369 = scmp.eq.s32.totalorder %s25, 0
    %p370 = por %p368, %p369
    %p371 = scmp.ne.s32.totalorder %s357, %s358
    %p372 = scmp.eq.s32.totalorder %s26, 3
    %p373 = por %p371, %p372
    %p375 = scmp.ne.s32.totalorder %s358, %s374
    %p376 = scmp.eq.s32.totalorder %s26, 0
    %p377 = por %p375, %p376
    %s378 = ssub.s32 %s28, %s35
    %p379 = scmp.eq.s32.totalorder %s378, 0
    %s381 = sadd.s32 %s380, 1
    %s382 = scalar_select %p379, %s380, %s381
    %p385 = pneg %p379
    %p386 = scmp.eq.s32.totalorder %s20, 3
    %p387 = por %p385, %p386
    %p388 = scmp.ne.s32.totalorder %s380, %s383
    %p389 = scmp.eq.s32.totalorder %s20, 0
    %p390 = por %p388, %p389
    %p391 = scmp.ne.s32.totalorder %s380, %s383
    %p392 = scmp.eq.s32.totalorder %s25, 3
    %p393 = por %p391, %p392
    %p394 = scmp.ne.s32.totalorder %s383, %s384
    %p395 = scmp.eq.s32.totalorder %s25, 0
    %p396 = por %p394, %p395
    %p397 = scmp.ne.s32.totalorder %s383, %s384
    %p398 = scmp.eq.s32.totalorder %s26, 3
    %p399 = por %p397, %p398
    %p401 = scmp.ne.s32.totalorder %s384, %s400
    %p402 = scmp.eq.s32.totalorder %s26, 0
    %p403 = por %p401, %p402
    %s404 = ssub.s32 %s27, %s39
    %s405 = ssub.s32 %s28, %s35
    %s406 = sor.u32 %s404, %s405
    %p407 = scmp.eq.s32.totalorder %s406, 0
    %s409 = sadd.s32 %s408, 1
    %s410 = scalar_select %p407, %s408, %s409
    %p413 = pneg %p407
    %p414 = scmp.eq.s32.totalorder %s20, 3
    %p415 = por %p413, %p414
    %p416 = scmp.ne.s32.totalorder %s408, %s411
    %p417 = scmp.eq.s32.totalorder %s20, 0
    %p418 = por %p416, %p417
    %p419 = scmp.ne.s32.totalorder %s408, %s411
    %p420 = scmp.eq.s32.totalorder %s25, 3
    %p421 = por %p419, %p420
    %p422 = scmp.ne.s32.totalorder %s411, %s412
    %p423 = scmp.eq.s32.totalorder %s25, 0
    %p424 = por %p422, %p423
    %p425 = scmp.ne.s32.totalorder %s411, %s412
    %p426 = scmp.eq.s32.totalorder %s26, 3
    %p427 = por %p425, %p426
    %p429 = scmp.ne.s32.totalorder %s412, %s428
    %p430 = scmp.eq.s32.totalorder %s26, 0
    %p431 = por %p429, %p430
    %p432 = scmp.le.s32.totalorder 1, %s20
    %p433 = scmp.lt.s32.totalorder %s20, 5
    %p434 = pnand %p432, %p433
    %p435 = pneg %p434
    // Predicated region
    $region9: #{tpu_custom_call.1} parent=5 // pred_check
      _
    $region10: #{tpu_custom_call.1} parent=5 // pred_check_branch
      %437 = sbr.rel (%p434) target = $region12
    $region11: #{tpu_custom_call.1} parent=5 // pred_region
      %s438 = ssub.s32 %s20, 1
    $region12: #{tpu_custom_call.1} parent=5 // pred_fallthru
      _
    %p439 = scmp.lt.s32.totalorder %s20, 4
    // Predicated region
    $region13: #{tpu_custom_call.1} parent=5 // pred_check
      %p440 = pneg %p439
    $region14: #{tpu_custom_call.1} parent=5 // pred_check_branch
      %442 = sbr.rel (%p440) target = $region16
    $region15: #{tpu_custom_call.1} parent=5 // pred_region
      // Predicated region
      $region17: #{tpu_custom_call.1} parent=15 // pred_check
        %p443 = pneg %p52
      $region18: #{tpu_custom_call.1} parent=15 // pred_check_branch
        %445 = sbr.rel (%p443) target = $region20
      $region19: #{tpu_custom_call.1} parent=15 // pred_region
        %p446 = scmp.lt.s32.totalorder %s27, 1
        %s447 = scalar_select %p446, %s27, 1
        %s448 = smul.addr %s447, 2
        %s449 = smul.addr %s448, 8
        %s450 = scalar_lea.vmem %s0, %s449
      $region20: #{tpu_custom_call.1} parent=15 // pred_fallthru
        _
      // Predicated region
      $region21: #{tpu_custom_call.1} parent=15 // pred_check
        %p451 = pneg %p78
      $region22: #{tpu_custom_call.1} parent=15 // pred_check_branch
        %453 = sbr.rel (%p451) target = $region24
      $region23: #{tpu_custom_call.1} parent=15 // pred_region
        %p454 = scmp.lt.s32.totalorder %s27, 1
        %s455 = scalar_select %p454, %s27, 1
        %s456 = smul.addr %s455, 2
        %s457 = smul.addr %s456, 8
        %s458 = scalar_lea.vmem %s1, %s457
      $region24: #{tpu_custom_call.1} parent=15 // pred_fallthru
        _
      // Predicated region
      $region25: #{tpu_custom_call.1} parent=15 // pred_check
        %p459 = pneg %p104
      $region26: #{tpu_custom_call.1} parent=15 // pred_check_branch
        %461 = sbr.rel (%p459) target = $region28
      $region27: #{tpu_custom_call.1} parent=15 // pred_region
        %p462 = scmp.lt.s32.totalorder %s27, 1
        %s463 = scalar_select %p462, %s27, 1
        %s464 = smul.addr %s463, 4
        %s465 = scalar_lea.vmem %s2, %s464
      $region28: #{tpu_custom_call.1} parent=15 // pred_fallthru
        _
      // Predicated region
      $region29: #{tpu_custom_call.1} parent=15 // pred_check
        %p466 = pneg %p130
      $region30: #{tpu_custom_call.1} parent=15 // pred_check_branch
        %468 = sbr.rel (%p466) target = $region32
      $region31: #{tpu_custom_call.1} parent=15 // pred_region
        %p469 = scmp.lt.s32.totalorder %s28, 1
        %s470 = scalar_select %p469, %s28, 1
        %s471 = smul.addr %s470, 8
        %s472 = scalar_lea.vmem %s3, %s471
      $region32: #{tpu_custom_call.1} parent=15 // pred_fallthru
        _
      // Predicated region
      $region33: #{tpu_custom_call.1} parent=15 // pred_check
        %p473 = pneg %p156
      $region34: #{tpu_custom_call.1} parent=15 // pred_check_branch
        %475 = sbr.rel (%p473) target = $region36
      $region35: #{tpu_custom_call.1} parent=15 // pred_region
        %p476 = scmp.lt.s32.totalorder %s28, 1
        %s477 = scalar_select %p476, %s28, 1
        %s478 = smul.addr %s477, 8
        %s479 = scalar_lea.vmem %s4, %s478
      $region36: #{tpu_custom_call.1} parent=15 // pred_fallthru
        _
      // Predicated region
      $region37: #{tpu_custom_call.1} parent=15 // pred_check
        %p480 = pneg %p182
      $region38: #{tpu_custom_call.1} parent=15 // pred_check_branch
        %482 = sbr.rel (%p480) target = $region40
      $region39: #{tpu_custom_call.1} parent=15 // pred_region
        %p483 = scmp.lt.s32.totalorder %s28, 1
        %s484 = scalar_select %p483, %s28, 1
        %s485 = smul.addr %s484, 8
        %s486 = scalar_lea.vmem %s5, %s485
      $region40: #{tpu_custom_call.1} parent=15 // pred_fallthru
        _
      // Predicated region
      $region41: #{tpu_custom_call.1} parent=15 // pred_check
        %p487 = pneg %p208
      $region42: #{tpu_custom_call.1} parent=15 // pred_check_branch
        %489 = sbr.rel (%p487) target = $region44
      $region43: #{tpu_custom_call.1} parent=15 // pred_region
        %p490 = scmp.lt.s32.totalorder %s28, 1
        %s491 = scalar_select %p490, %s28, 1
        %s492 = smul.addr %s491, 8
        %s493 = scalar_lea.vmem %s6, %s492
      $region44: #{tpu_custom_call.1} parent=15 // pred_fallthru
        _
      // Predicated region
      $region45: #{tpu_custom_call.1} parent=15 // pred_check
        %p494 = pneg %p234
      $region46: #{tpu_custom_call.1} parent=15 // pred_check_branch
        %496 = sbr.rel (%p494) target = $region48
      $region47: #{tpu_custom_call.1} parent=15 // pred_region
        %p497 = scmp.lt.s32.totalorder %s28, 1
        %s498 = scalar_select %p497, %s28, 1
        %s499 = smul.addr %s498, 8
        %s500 = scalar_lea.vmem %s7, %s499
      $region48: #{tpu_custom_call.1} parent=15 // pred_fallthru
        _
      // Predicated region
      $region49: #{tpu_custom_call.1} parent=15 // pred_check
        %p501 = pneg %p260
      $region50: #{tpu_custom_call.1} parent=15 // pred_check_branch
        %503 = sbr.rel (%p501) target = $region52
      $region51: #{tpu_custom_call.1} parent=15 // pred_region
        %p504 = scmp.lt.s32.totalorder %s28, 1
        %s505 = scalar_select %p504, %s28, 1
        %s506 = smul.addr %s505, 8
        %s507 = scalar_lea.vmem %s8, %s506
      $region52: #{tpu_custom_call.1} parent=15 // pred_fallthru
        _
      // Predicated region
      $region53: #{tpu_custom_call.1} parent=15 // pred_check
        %p508 = pneg %p286
      $region54: #{tpu_custom_call.1} parent=15 // pred_check_branch
        %510 = sbr.rel (%p508) target = $region56
      $region55: #{tpu_custom_call.1} parent=15 // pred_region
        %p511 = scmp.lt.s32.totalorder %s28, 1
        %s512 = scalar_select %p511, %s28, 1
        %s513 = smul.addr %s512, 8
        %s514 = scalar_lea.vmem %s9, %s513
      $region56: #{tpu_custom_call.1} parent=15 // pred_fallthru
        _
      // Predicated region
      $region57: #{tpu_custom_call.1} parent=15 // pred_check
        %p515 = pneg %p312
      $region58: #{tpu_custom_call.1} parent=15 // pred_check_branch
        %517 = sbr.rel (%p515) target = $region60
      $region59: #{tpu_custom_call.1} parent=15 // pred_region
        %p518 = scmp.lt.s32.totalorder %s28, 1
        %s519 = scalar_select %p518, %s28, 1
        %s520 = smul.addr %s519, 8
        %s521 = scalar_lea.vmem %s10, %s520
      $region60: #{tpu_custom_call.1} parent=15 // pred_fallthru
        _
      // Predicated region
      $region61: #{tpu_custom_call.1} parent=15 // pred_check
        %p522 = pneg %p338
      $region62: #{tpu_custom_call.1} parent=15 // pred_check_branch
        %524 = sbr.rel (%p522) target = $region64
      $region63: #{tpu_custom_call.1} parent=15 // pred_region
        %p525 = scmp.lt.s32.totalorder %s28, 1
        %s526 = scalar_select %p525, %s28, 1
        %s527 = smul.addr %s526, 8
        %s528 = scalar_lea.vmem %s11, %s527
      $region64: #{tpu_custom_call.1} parent=15 // pred_fallthru
        _
      // Predicated region
      $region65: #{tpu_custom_call.1} parent=15 // pred_check
        %p529 = pneg %p364
      $region66: #{tpu_custom_call.1} parent=15 // pred_check_branch
        %531 = sbr.rel (%p529) target = $region68
      $region67: #{tpu_custom_call.1} parent=15 // pred_region
        %p532 = scmp.lt.s32.totalorder %s28, 1
        %s533 = scalar_select %p532, %s28, 1
        %s534 = smul.addr %s533, 8
        %s535 = scalar_lea.vmem %s12, %s534
      $region68: #{tpu_custom_call.1} parent=15 // pred_fallthru
        _
      // Predicated region
      $region69: #{tpu_custom_call.1} parent=15 // pred_check
        %p536 = pneg %p390
      $region70: #{tpu_custom_call.1} parent=15 // pred_check_branch
        %538 = sbr.rel (%p536) target = $region72
      $region71: #{tpu_custom_call.1} parent=15 // pred_region
        %p539 = scmp.lt.s32.totalorder %s28, 1
        %s540 = scalar_select %p539, %s28, 1
        %s541 = smul.addr %s540, 8
        %s542 = scalar_lea.vmem %s13, %s541
      $region72: #{tpu_custom_call.1} parent=15 // pred_fallthru
        _
    $region16: #{tpu_custom_call.1} parent=5 // pred_fallthru
      _
    %p543 = scmp.le.s32.totalorder 1, %s20
    %p544 = scmp.lt.s32.totalorder %s20, 5
    %p545 = pnand %p543, %p544
    %p546 = pneg %p545
    // Predicated region
    $region73: #{tpu_custom_call.1} parent=5 // pred_check
      _
    $region74: #{tpu_custom_call.1} parent=5 // pred_check_branch
      %548 = sbr.rel (%p545) target = $region76
    $region75: #{tpu_custom_call.1} parent=5 // pred_region
      %s549 = ssub.s32 %s20, 1
      %p550 = scmp.lt.s32.totalorder %s29, 1
      %s551 = scalar_select %p550, %s29, 1
      %s552 = smul.addr %s551, 2
      %s553 = smul.addr %s552, 8
      %s554 = scalar_lea.vmem %s0, %s553
      %p555 = pneg %p58
      %p556 = pneg %p55
      %p557 = scmp.lt.s32.totalorder %s29, 1
      %s558 = scalar_select %p557, %s29, 1
      %s559 = smul.addr %s558, 2
      %s560 = smul.addr %s559, 8
      %s561 = scalar_lea.vmem %s1, %s560
      %p562 = pneg %p84
      %p563 = pneg %p81
      %p564 = scmp.lt.s32.totalorder %s29, 1
      %s565 = scalar_select %p564, %s29, 1
      %s566 = smul.addr %s565, 4
      %s567 = scalar_lea.vmem %s2, %s566
      %p568 = pneg %p110
      %p569 = pneg %p107
      %p570 = scmp.lt.s32.totalorder %s30, 1
      %s571 = scalar_select %p570, %s30, 1
      %s572 = smul.addr %s571, 8
      %s573 = scalar_lea.vmem %s3, %s572
      %p574 = pneg %p136
      %p575 = pneg %p133
      %p576 = scmp.lt.s32.totalorder %s30, 1
      %s577 = scalar_select %p576, %s30, 1
      %s578 = smul.addr %s577, 8
      %s579 = scalar_lea.vmem %s4, %s578
      %p580 = pneg %p162
      %p581 = pneg %p159
      %p582 = scmp.lt.s32.totalorder %s30, 1
      %s583 = scalar_select %p582, %s30, 1
      %s584 = smul.addr %s583, 8
      %s585 = scalar_lea.vmem %s5, %s584
      %p586 = pneg %p188
      %p587 = pneg %p185
      %p588 = scmp.lt.s32.totalorder %s30, 1
      %s589 = scalar_select %p588, %s30, 1
      %s590 = smul.addr %s589, 8
      %s591 = scalar_lea.vmem %s6, %s590
      %p592 = pneg %p214
      %p593 = pneg %p211
      %p594 = scmp.lt.s32.totalorder %s30, 1
      %s595 = scalar_select %p594, %s30, 1
      %s596 = smul.addr %s595, 8
      %s597 = scalar_lea.vmem %s7, %s596
      %p598 = pneg %p240
      %p599 = pneg %p237
      %p600 = scmp.lt.s32.totalorder %s30, 1
      %s601 = scalar_select %p600, %s30, 1
      %s602 = smul.addr %s601, 8
      %s603 = scalar_lea.vmem %s8, %s602
      %p604 = pneg %p266
      %p605 = pneg %p263
      %p606 = scmp.lt.s32.totalorder %s30, 1
      %s607 = scalar_select %p606, %s30, 1
      %s608 = smul.addr %s607, 8
      %s609 = scalar_lea.vmem %s9, %s608
      %p610 = pneg %p292
      %p611 = pneg %p289
      %p612 = scmp.lt.s32.totalorder %s30, 1
      %s613 = scalar_select %p612, %s30, 1
      %s614 = smul.addr %s613, 8
      %s615 = scalar_lea.vmem %s10, %s614
      %p616 = pneg %p318
      %p617 = pneg %p315
      %p618 = scmp.lt.s32.totalorder %s30, 1
      %s619 = scalar_select %p618, %s30, 1
      %s620 = smul.addr %s619, 8
      %s621 = scalar_lea.vmem %s11, %s620
      %p622 = pneg %p344
      %p623 = pneg %p341
      %p624 = scmp.lt.s32.totalorder %s30, 1
      %s625 = scalar_select %p624, %s30, 1
      %s626 = smul.addr %s625, 8
      %s627 = scalar_lea.vmem %s12, %s626
      %p628 = pneg %p370
      %p629 = pneg %p367
      %p630 = scmp.lt.s32.totalorder %s30, 1
      %s631 = scalar_select %p630, %s30, 1
      %s632 = smul.addr %s631, 8
      %s633 = scalar_lea.vmem %s13, %s632
      %p634 = pneg %p396
      %p635 = pneg %p393
      %p636 = pneg %p424
      %p637 = pneg %p421
      %p638 = scmp.lt.s32.totalorder %s29, 1
      %s639 = scalar_select %p638, %s29, 1
      %p640 = scmp.lt.s32.totalorder %s30, 1
      %s641 = scalar_select %p640, %s30, 1
      %s642 = smul.addr %s639, 2
      %s643 = sadd.s32 %s641, %s642
      %s644 = smul.addr %s643, 8
      %s645 = scalar_lea.vmem %s14, %s644
      %p646 = scmp.lt.s32.totalorder %s29, 1
      %s647 = scalar_select %p646, %s29, 1
      %s648 = smul.addr %s647, 2
      %s649 = smul.addr %s648, 8
      %s650 = scalar_lea.vmem %s0, %s649
      %p651 = scmp.lt.s32.totalorder %s29, 1
      %s652 = scalar_select %p651, %s29, 1
      %s653 = smul.addr %s652, 2
      %s654 = smul.addr %s653, 8
      %s655 = scalar_lea.vmem %s1, %s654
      %p656 = scmp.lt.s32.totalorder %s29, 1
      %s657 = scalar_select %p656, %s29, 1
      %s658 = smul.addr %s657, 4
      %s659 = scalar_lea.vmem %s2, %s658
      %p660 = scmp.lt.s32.totalorder %s30, 1
      %s661 = scalar_select %p660, %s30, 1
      %s662 = smul.addr %s661, 8
      %s663 = scalar_lea.vmem %s3, %s662
      %p664 = scmp.lt.s32.totalorder %s30, 1
      %s665 = scalar_select %p664, %s30, 1
      %s666 = smul.addr %s665, 8
      %s667 = scalar_lea.vmem %s4, %s666
      %p668 = scmp.lt.s32.totalorder %s30, 1
      %s669 = scalar_select %p668, %s30, 1
      %s670 = smul.addr %s669, 8
      %s671 = scalar_lea.vmem %s5, %s670
      %p672 = scmp.lt.s32.totalorder %s30, 1
      %s673 = scalar_select %p672, %s30, 1
      %s674 = smul.addr %s673, 8
      %s675 = scalar_lea.vmem %s6, %s674
      %p676 = scmp.lt.s32.totalorder %s30, 1
      %s677 = scalar_select %p676, %s30, 1
      %s678 = smul.addr %s677, 8
      %s679 = scalar_lea.vmem %s7, %s678
      %p680 = scmp.lt.s32.totalorder %s30, 1
      %s681 = scalar_select %p680, %s30, 1
      %s682 = smul.addr %s681, 8
      %s683 = scalar_lea.vmem %s8, %s682
      %p684 = scmp.lt.s32.totalorder %s30, 1
      %s685 = scalar_select %p684, %s30, 1
      %s686 = smul.addr %s685, 8
      %s687 = scalar_lea.vmem %s9, %s686
      %p688 = scmp.lt.s32.totalorder %s30, 1
      %s689 = scalar_select %p688, %s30, 1
      %s690 = smul.addr %s689, 8
      %s691 = scalar_lea.vmem %s10, %s690
      %p692 = scmp.lt.s32.totalorder %s30, 1
      %s693 = scalar_select %p692, %s30, 1
      %s694 = smul.addr %s693, 8
      %s695 = scalar_lea.vmem %s11, %s694
      %p696 = scmp.lt.s32.totalorder %s30, 1
      %s697 = scalar_select %p696, %s30, 1
      %s698 = smul.addr %s697, 8
      %s699 = scalar_lea.vmem %s12, %s698
      %p700 = scmp.lt.s32.totalorder %s30, 1
      %s701 = scalar_select %p700, %s30, 1
      %s702 = smul.addr %s701, 8
      %s703 = scalar_lea.vmem %s13, %s702
      %p704 = scmp.lt.s32.totalorder %s29, 1
      %s705 = scalar_select %p704, %s29, 1
      %p706 = scmp.lt.s32.totalorder %s30, 1
      %s707 = scalar_select %p706, %s30, 1
      %s708 = smul.addr %s705, 2
      %s709 = sadd.s32 %s707, %s708
      %s710 = smul.addr %s709, 8
      %s711 = scalar_lea.vmem %s14, %s710
      %v712 = vld [vmem:[%s650] sm:$0xff]
      %v713 = vld [vmem:[%s650 + $0x8] sm:$0xff]
      %v714 = vld [vmem:[%s655] sm:$0xff]
      %v715 = vld [vmem:[%s655 + $0x8] sm:$0xff]
      %v716 = vld [vmem:[%s659] sm:$0x7]
      %v717 = vld [vmem:[%s663] sm:$0xff]
      %vm718 = vcmask 130048
      %v720 = vsel %vm718, %v717, 0
      %722 = vmatprep.subr.mxu0 0.0
      %723 = vmatpush1.msra.mxu0 0.0
      %724 = vmatprep.subr.mxu0 0.0
      %725 = vmatpush1.msra.mxu0 0.0
      %726 = vmatprep.subr.mxu0 0.0
      %727 = vmatpush1.msra.mxu0 0.0
      %728 = vmatprep.subr.mxu0 0.0
      %729 = vmatpush1.msra.mxu0 0.0
      %730 = vmatprep.subr.mxu0 0.0
      %731 = vmatpush1.msra.mxu0 0.0
      %732 = vmatprep.subr.mxu0 0.0
      %733 = vmatpush1.msra.mxu0 0.0
      %734 = vmatprep.subr.mxu0 0.0
      %735 = vmatpush1.msra.mxu0 0.0
      %736 = vmatprep.subr.mxu0 0.0
      %737 = vmatpush1.msra.mxu0 0.0
      %738 = vmatprep.subr.mxu0 0.0
      %739 = vmatpush1.msra.mxu0 0.0
      %740 = vmatprep.subr.mxu0 0.0
      %741 = vmatpush1.msra.mxu0 0.0
      %742 = vmatprep.subr.mxu0 0.0
      %743 = vmatpush1.msra.mxu0 0.0
      %744 = vmatprep.subr.mxu0 0.0
      %745 = vmatpush1.msra.mxu0 0.0
      %746 = vmatprep.subr.mxu0 0.0
      %747 = vmatpush1.msra.mxu0 0.0
      %748 = vmatprep.subr.mxu0 0.0
      %749 = vmatpush1.msra.mxu0 0.0
      %750 = vmatprep.subr.mxu0 0.0
      %v751 = vand.u32 %v713, 4294901760
      %752 = vmatpush1.msra.mxu0 %v751
      %753 = vmatprep.subr.mxu0 0.0
      %v754 = vand.u32 %v712, 4294901760
      %755 = vmatpush1.msra.mxu0 %v754
      %756 = vmatprep.subr.mxu0 0.0
      %757 = vmatpush2.msra.mxu0 0.0
      %758 = vmatprep.subr.mxu0 0.0
      %759 = vmatpush2.msra.mxu0 0.0
      %760 = vmatprep.subr.mxu0 0.0
      %761 = vmatpush2.msra.mxu0 0.0
      %762 = vmatprep.subr.mxu0 0.0
      %763 = vmatpush2.msra.mxu0 0.0
      %764 = vmatprep.subr.mxu0 0.0
      %765 = vmatpush2.msra.mxu0 0.0
      %766 = vmatprep.subr.mxu0 0.0
      %767 = vmatpush2.msra.mxu0 0.0
      %768 = vmatprep.subr.mxu0 0.0
      %769 = vmatpush2.msra.mxu0 0.0
      %770 = vmatprep.subr.mxu0 0.0
      %771 = vmatpush2.msra.mxu0 0.0
      %772 = vmatprep.subr.mxu0 0.0
      %773 = vmatpush2.msra.mxu0 0.0
      %774 = vmatprep.subr.mxu0 0.0
      %775 = vmatpush2.msra.mxu0 0.0
      %776 = vmatprep.subr.mxu0 0.0
      %777 = vmatpush2.msra.mxu0 0.0
      %778 = vmatprep.subr.mxu0 0.0
      %779 = vmatpush2.msra.mxu0 0.0
      %780 = vmatprep.subr.mxu0 0.0
      %781 = vmatpush2.msra.mxu0 0.0
      %782 = vmatprep.subr.mxu0 0.0
      %783 = vmatpush2.msra.mxu0 0.0
      %784 = vmatprep.subr.mxu0 0.0
      %785 = vmatpush2.msra.mxu0 0.0
      %786 = vmatprep.subr.mxu0 0.0
      %787 = vmatpush2.msra.mxu0 0.0
      %788 = vmatprep.mubr.f32.mxu0 0.0
      %v789 = vand.u32 %v720, 4294901760
      %v790 = vsub.f32 %v720, %v789
      %v791 = vand.u32 %v790, 4294901760
      %v792 = vsub.f32 %v790, %v791
      %v793 = vand.u32 %v792, 4294901760
      %794 = vmatmul.mubr.f32.gmra.mxu0 %v793
      %v795 = vpop.f32.mrf.mxu0
      %v796 = vadd.f32 0.0, %v795
      %v797 = vpop.f32.mrf.mxu0
      %798 = vdwg.mxu0
      %799 = vmatprep.subr.mxu0 0.0
      %800 = vmatpush1.msra.mxu0 0.0
      %801 = vmatprep.subr.mxu0 0.0
      %802 = vmatpush1.msra.mxu0 0.0
      %803 = vmatprep.subr.mxu0 0.0
      %804 = vmatpush1.msra.mxu0 0.0
      %805 = vmatprep.subr.mxu0 0.0
      %806 = vmatpush1.msra.mxu0 0.0
      %807 = vmatprep.subr.mxu0 0.0
      %808 = vmatpush1.msra.mxu0 0.0
      %809 = vmatprep.subr.mxu0 0.0
      %810 = vmatpush1.msra.mxu0 0.0
      %811 = vmatprep.subr.mxu0 0.0
      %812 = vmatpush1.msra.mxu0 0.0
      %813 = vmatprep.subr.mxu0 0.0
      %814 = vmatpush1.msra.mxu0 0.0
      %815 = vmatprep.subr.mxu0 0.0
      %816 = vmatpush1.msra.mxu0 0.0
      %817 = vmatprep.subr.mxu0 0.0
      %818 = vmatpush1.msra.mxu0 0.0
      %819 = vmatprep.subr.mxu0 0.0
      %820 = vmatpush1.msra.mxu0 0.0
      %821 = vmatprep.subr.mxu0 0.0
      %822 = vmatpush1.msra.mxu0 0.0
      %823 = vmatprep.subr.mxu0 0.0
      %824 = vmatpush1.msra.mxu0 0.0
      %825 = vmatprep.subr.mxu0 0.0
      %826 = vmatpush1.msra.mxu0 0.0
      %827 = vmatprep.subr.mxu0 0.0
      %v828 = vand.u32 %v713, 4294901760
      %v829 = vsub.f32 %v713, %v828
      %v830 = vand.u32 %v829, 4294901760
      %v831 = vsub.f32 %v829, %v830
      %v832 = vand.u32 %v831, 4294901760
      %833 = vmatpush1.msra.mxu0 %v832
      %834 = vmatprep.subr.mxu0 0.0
      %v835 = vand.u32 %v712, 4294901760
      %v836 = vsub.f32 %v712, %v835
      %v837 = vand.u32 %v836, 4294901760
      %v838 = vsub.f32 %v836, %v837
      %v839 = vand.u32 %v838, 4294901760
      %840 = vmatpush1.msra.mxu0 %v839
      %841 = vmatprep.subr.mxu0 0.0
      %842 = vmatpush2.msra.mxu0 0.0
      %843 = vmatprep.subr.mxu0 0.0
      %844 = vmatpush2.msra.mxu0 0.0
      %845 = vmatprep.subr.mxu0 0.0
      %846 = vmatpush2.msra.mxu0 0.0
      %847 = vmatprep.subr.mxu0 0.0
      %848 = vmatpush2.msra.mxu0 0.0
      %849 = vmatprep.subr.mxu0 0.0
      %850 = vmatpush2.msra.mxu0 0.0
      %851 = vmatprep.subr.mxu0 0.0
      %852 = vmatpush2.msra.mxu0 0.0
      %853 = vmatprep.subr.mxu0 0.0
      %854 = vmatpush2.msra.mxu0 0.0
      %855 = vmatprep.subr.mxu0 0.0
      %856 = vmatpush2.msra.mxu0 0.0
      %857 = vmatprep.subr.mxu0 0.0
      %858 = vmatpush2.msra.mxu0 0.0
      %859 = vmatprep.subr.mxu0 0.0
      %860 = vmatpush2.msra.mxu0 0.0
      %861 = vmatprep.subr.mxu0 0.0
      %862 = vmatpush2.msra.mxu0 0.0
      %863 = vmatprep.subr.mxu0 0.0
      %864 = vmatpush2.msra.mxu0 0.0
      %865 = vmatprep.subr.mxu0 0.0
      %866 = vmatpush2.msra.mxu0 0.0
      %867 = vmatprep.subr.mxu0 0.0
      %868 = vmatpush2.msra.mxu0 0.0
      %869 = vmatprep.subr.mxu0 0.0
      %870 = vmatpush2.msra.mxu0 0.0
      %871 = vmatprep.subr.mxu0 0.0
      %872 = vmatpush2.msra.mxu0 0.0
      %873 = vmatprep.mubr.f32.mxu0 0.0
      %v874 = vand.u32 %v720, 4294901760
      %875 = vmatmul.mubr.f32.gmra.mxu0 %v874
      %v876 = vpop.f32.mrf.mxu0
      %v877 = vadd.f32 %v796, %v876
      %v878 = vpop.f32.mrf.mxu0
      %879 = vdwg.mxu0
      %880 = vmatprep.subr.mxu0 0.0
      %881 = vmatpush1.msra.mxu0 0.0
      %882 = vmatprep.subr.mxu0 0.0
      %883 = vmatpush1.msra.mxu0 0.0
      %884 = vmatprep.subr.mxu0 0.0
      %885 = vmatpush1.msra.mxu0 0.0
      %886 = vmatprep.subr.mxu0 0.0
      %887 = vmatpush1.msra.mxu0 0.0
      %888 = vmatprep.subr.mxu0 0.0
      %889 = vmatpush1.msra.mxu0 0.0
      %890 = vmatprep.subr.mxu0 0.0
      %891 = vmatpush1.msra.mxu0 0.0
      %892 = vmatprep.subr.mxu0 0.0
      %893 = vmatpush1.msra.mxu0 0.0
      %894 = vmatprep.subr.mxu0 0.0
      %895 = vmatpush1.msra.mxu0 0.0
      %896 = vmatprep.subr.mxu0 0.0
      %897 = vmatpush1.msra.mxu0 0.0
      %898 = vmatprep.subr.mxu0 0.0
      %899 = vmatpush1.msra.mxu0 0.0
      %900 = vmatprep.subr.mxu0 0.0
      %901 = vmatpush1.msra.mxu0 0.0
      %902 = vmatprep.subr.mxu0 0.0
      %903 = vmatpush1.msra.mxu0 0.0
      %904 = vmatprep.subr.mxu0 0.0
      %905 = vmatpush1.msra.mxu0 0.0
      %906 = vmatprep.subr.mxu0 0.0
      %907 = vmatpush1.msra.mxu0 0.0
      %908 = vmatprep.subr.mxu0 0.0
      %v909 = vand.u32 %v713, 4294901760
      %v910 = vsub.f32 %v713, %v909
      %911 = vmatpush1.msra.mxu0 %v910
      %912 = vmatprep.subr.mxu0 0.0
      %v913 = vand.u32 %v712, 4294901760
      %v914 = vsub.f32 %v712, %v913
      %915 = vmatpush1.msra.mxu0 %v914
      %916 = vmatprep.subr.mxu0 0.0
      %917 = vmatpush2.msra.mxu0 0.0
      %918 = vmatprep.subr.mxu0 0.0
      %919 = vmatpush2.msra.mxu0 0.0
      %920 = vmatprep.subr.mxu0 0.0
      %921 = vmatpush2.msra.mxu0 0.0
      %922 = vmatprep.subr.mxu0 0.0
      %923 = vmatpush2.msra.mxu0 0.0
      %924 = vmatprep.subr.mxu0 0.0
      %925 = vmatpush2.msra.mxu0 0.0
      %926 = vmatprep.subr.mxu0 0.0
      %927 = vmatpush2.msra.mxu0 0.0
      %928 = vmatprep.subr.mxu0 0.0
      %929 = vmatpush2.msra.mxu0 0.0
      %930 = vmatprep.subr.mxu0 0.0
      %931 = vmatpush2.msra.mxu0 0.0
      %932 = vmatprep.subr.mxu0 0.0
      %933 = vmatpush2.msra.mxu0 0.0
      %934 = vmatprep.subr.mxu0 0.0
      %935 = vmatpush2.msra.mxu0 0.0
      %936 = vmatprep.subr.mxu0 0.0
      %937 = vmatpush2.msra.mxu0 0.0
      %938 = vmatprep.subr.mxu0 0.0
      %939 = vmatpush2.msra.mxu0 0.0
      %940 = vmatprep.subr.mxu0 0.0
      %941 = vmatpush2.msra.mxu0 0.0
      %942 = vmatprep.subr.mxu0 0.0
      %943 = vmatpush2.msra.mxu0 0.0
      %944 = vmatprep.subr.mxu0 0.0
      %945 = vmatpush2.msra.mxu0 0.0
      %946 = vmatprep.subr.mxu0 0.0
      %947 = vmatpush2.msra.mxu0 0.0
      %948 = vmatprep.mubr.f32.mxu0 0.0
      %v949 = vand.u32 %v720, 4294901760
      %v950 = vsub.f32 %v720, %v949
      %951 = vmatmul.mubr.f32.gmra.mxu0 %v950
      %v952 = vpop.f32.mrf.mxu0
      %v953 = vadd.f32 %v877, %v952
      %v954 = vpop.f32.mrf.mxu0
      %955 = vdwg.mxu0
      %956 = vmatprep.subr.mxu0 0.0
      %957 = vmatpush1.msra.mxu0 0.0
      %958 = vmatprep.subr.mxu0 0.0
      %959 = vmatpush1.msra.mxu0 0.0
      %960 = vmatprep.subr.mxu0 0.0
      %961 = vmatpush1.msra.mxu0 0.0
      %962 = vmatprep.subr.mxu0 0.0
      %963 = vmatpush1.msra.mxu0 0.0
      %964 = vmatprep.subr.mxu0 0.0
      %965 = vmatpush1.msra.mxu0 0.0
      %966 = vmatprep.subr.mxu0 0.0
      %967 = vmatpush1.msra.mxu0 0.0
      %968 = vmatprep.subr.mxu0 0.0
      %969 = vmatpush1.msra.mxu0 0.0
      %970 = vmatprep.subr.mxu0 0.0
      %971 = vmatpush1.msra.mxu0 0.0
      %972 = vmatprep.subr.mxu0 0.0
      %973 = vmatpush1.msra.mxu0 0.0
      %974 = vmatprep.subr.mxu0 0.0
      %975 = vmatpush1.msra.mxu0 0.0
      %976 = vmatprep.subr.mxu0 0.0
      %977 = vmatpush1.msra.mxu0 0.0
      %978 = vmatprep.subr.mxu0 0.0
      %979 = vmatpush1.msra.mxu0 0.0
      %980 = vmatprep.subr.mxu0 0.0
      %981 = vmatpush1.msra.mxu0 0.0
      %982 = vmatprep.subr.mxu0 0.0
      %983 = vmatpush1.msra.mxu0 0.0
      %984 = vmatprep.subr.mxu0 0.0
      %v985 = vand.u32 %v713, 4294901760
      %986 = vmatpush1.msra.mxu0 %v985
      %987 = vmatprep.subr.mxu0 0.0
      %v988 = vand.u32 %v712, 4294901760
      %989 = vmatpush1.msra.mxu0 %v988
      %990 = vmatprep.subr.mxu0 0.0
      %991 = vmatpush2.msra.mxu0 0.0
      %992 = vmatprep.subr.mxu0 0.0
      %993 = vmatpush2.msra.mxu0 0.0
      %994 = vmatprep.subr.mxu0 0.0
      %995 = vmatpush2.msra.mxu0 0.0
      %996 = vmatprep.subr.mxu0 0.0
      %997 = vmatpush2.msra.mxu0 0.0
      %998 = vmatprep.subr.mxu0 0.0
      %999 = vmatpush2.msra.mxu0 0.0
      %1000 = vmatprep.subr.mxu0 0.0
      %1001 = vmatpush2.msra.mxu0 0.0
      %1002 = vmatprep.subr.mxu0 0.0
      %1003 = vmatpush2.msra.mxu0 0.0
      %1004 = vmatprep.subr.mxu0 0.0
      %1005 = vmatpush2.msra.mxu0 0.0
      %1006 = vmatprep.subr.mxu0 0.0
      %1007 = vmatpush2.msra.mxu0 0.0
      %1008 = vmatprep.subr.mxu0 0.0
      %1009 = vmatpush2.msra.mxu0 0.0
      %1010 = vmatprep.subr.mxu0 0.0
      %1011 = vmatpush2.msra.mxu0 0.0
      %1012 = vmatprep.subr.mxu0 0.0
      %1013 = vmatpush2.msra.mxu0 0.0
      %1014 = vmatprep.subr.mxu0 0.0
      %1015 = vmatpush2.msra.mxu0 0.0
      %1016 = vmatprep.subr.mxu0 0.0
      %1017 = vmatpush2.msra.mxu0 0.0
      %1018 = vmatprep.subr.mxu0 0.0
      %1019 = vmatpush2.msra.mxu0 0.0
      %1020 = vmatprep.subr.mxu0 0.0
      %1021 = vmatpush2.msra.mxu0 0.0
      %1022 = vmatprep.mubr.f32.mxu0 0.0
      %v1023 = vand.u32 %v720, 4294901760
      %v1024 = vsub.f32 %v720, %v1023
      %v1025 = vand.u32 %v1024, 4294901760
      %1026 = vmatmul.mubr.f32.gmra.mxu0 %v1025
      %v1027 = vpop.f32.mrf.mxu0
      %v1028 = vadd.f32 %v953, %v1027
      %v1029 = vpop.f32.mrf.mxu0
      %1030 = vdwg.mxu0
      %1031 = vmatprep.subr.mxu0 0.0
      %1032 = vmatpush1.msra.mxu0 0.0
      %1033 = vmatprep.subr.mxu0 0.0
      %1034 = vmatpush1.msra.mxu0 0.0
      %1035 = vmatprep.subr.mxu0 0.0
      %1036 = vmatpush1.msra.mxu0 0.0
      %1037 = vmatprep.subr.mxu0 0.0
      %1038 = vmatpush1.msra.mxu0 0.0
      %1039 = vmatprep.subr.mxu0 0.0
      %1040 = vmatpush1.msra.mxu0 0.0
      %1041 = vmatprep.subr.mxu0 0.0
      %1042 = vmatpush1.msra.mxu0 0.0
      %1043 = vmatprep.subr.mxu0 0.0
      %1044 = vmatpush1.msra.mxu0 0.0
      %1045 = vmatprep.subr.mxu0 0.0
      %1046 = vmatpush1.msra.mxu0 0.0
      %1047 = vmatprep.subr.mxu0 0.0
      %1048 = vmatpush1.msra.mxu0 0.0
      %1049 = vmatprep.subr.mxu0 0.0
      %1050 = vmatpush1.msra.mxu0 0.0
      %1051 = vmatprep.subr.mxu0 0.0
      %1052 = vmatpush1.msra.mxu0 0.0
      %1053 = vmatprep.subr.mxu0 0.0
      %1054 = vmatpush1.msra.mxu0 0.0
      %1055 = vmatprep.subr.mxu0 0.0
      %1056 = vmatpush1.msra.mxu0 0.0
      %1057 = vmatprep.subr.mxu0 0.0
      %1058 = vmatpush1.msra.mxu0 0.0
      %1059 = vmatprep.subr.mxu0 0.0
      %v1060 = vand.u32 %v713, 4294901760
      %v1061 = vsub.f32 %v713, %v1060
      %v1062 = vand.u32 %v1061, 4294901760
      %1063 = vmatpush1.msra.mxu0 %v1062
      %1064 = vmatprep.subr.mxu0 0.0
      %v1065 = vand.u32 %v712, 4294901760
      %v1066 = vsub.f32 %v712, %v1065
      %v1067 = vand.u32 %v1066, 4294901760
      %1068 = vmatpush1.msra.mxu0 %v1067
      %1069 = vmatprep.subr.mxu0 0.0
      %1070 = vmatpush2.msra.mxu0 0.0
      %1071 = vmatprep.subr.mxu0 0.0
      %1072 = vmatpush2.msra.mxu0 0.0
      %1073 = vmatprep.subr.mxu0 0.0
      %1074 = vmatpush2.msra.mxu0 0.0
      %1075 = vmatprep.subr.mxu0 0.0
      %1076 = vmatpush2.msra.mxu0 0.0
      %1077 = vmatprep.subr.mxu0 0.0
      %1078 = vmatpush2.msra.mxu0 0.0
      %1079 = vmatprep.subr.mxu0 0.0
      %1080 = vmatpush2.msra.mxu0 0.0
      %1081 = vmatprep.subr.mxu0 0.0
      %1082 = vmatpush2.msra.mxu0 0.0
      %1083 = vmatprep.subr.mxu0 0.0
      %1084 = vmatpush2.msra.mxu0 0.0
      %1085 = vmatprep.subr.mxu0 0.0
      %1086 = vmatpush2.msra.mxu0 0.0
      %1087 = vmatprep.subr.mxu0 0.0
      %1088 = vmatpush2.msra.mxu0 0.0
      %1089 = vmatprep.subr.mxu0 0.0
      %1090 = vmatpush2.msra.mxu0 0.0
      %1091 = vmatprep.subr.mxu0 0.0
      %1092 = vmatpush2.msra.mxu0 0.0
      %1093 = vmatprep.subr.mxu0 0.0
      %1094 = vmatpush2.msra.mxu0 0.0
      %1095 = vmatprep.subr.mxu0 0.0
      %1096 = vmatpush2.msra.mxu0 0.0
      %1097 = vmatprep.subr.mxu0 0.0
      %1098 = vmatpush2.msra.mxu0 0.0
      %1099 = vmatprep.subr.mxu0 0.0
      %1100 = vmatpush2.msra.mxu0 0.0
      %1101 = vmatprep.mubr.f32.mxu0 0.0
      %v1102 = vand.u32 %v720, 4294901760
      %1103 = vmatmul.mubr.f32.gmra.mxu0 %v1102
      %v1104 = vpop.f32.mrf.mxu0
      %v1105 = vadd.f32 %v1028, %v1104
      %v1106 = vpop.f32.mrf.mxu0
      %1107 = vdwg.mxu0
      %1108 = vmatprep.subr.mxu0 0.0
      %1109 = vmatpush1.msra.mxu0 0.0
      %1110 = vmatprep.subr.mxu0 0.0
      %1111 = vmatpush1.msra.mxu0 0.0
      %1112 = vmatprep.subr.mxu0 0.0
      %1113 = vmatpush1.msra.mxu0 0.0
      %1114 = vmatprep.subr.mxu0 0.0
      %1115 = vmatpush1.msra.mxu0 0.0
      %1116 = vmatprep.subr.mxu0 0.0
      %1117 = vmatpush1.msra.mxu0 0.0
      %1118 = vmatprep.subr.mxu0 0.0
      %1119 = vmatpush1.msra.mxu0 0.0
      %1120 = vmatprep.subr.mxu0 0.0
      %1121 = vmatpush1.msra.mxu0 0.0
      %1122 = vmatprep.subr.mxu0 0.0
      %1123 = vmatpush1.msra.mxu0 0.0
      %1124 = vmatprep.subr.mxu0 0.0
      %1125 = vmatpush1.msra.mxu0 0.0
      %1126 = vmatprep.subr.mxu0 0.0
      %1127 = vmatpush1.msra.mxu0 0.0
      %1128 = vmatprep.subr.mxu0 0.0
      %1129 = vmatpush1.msra.mxu0 0.0
      %1130 = vmatprep.subr.mxu0 0.0
      %1131 = vmatpush1.msra.mxu0 0.0
      %1132 = vmatprep.subr.mxu0 0.0
      %1133 = vmatpush1.msra.mxu0 0.0
      %1134 = vmatprep.subr.mxu0 0.0
      %1135 = vmatpush1.msra.mxu0 0.0
      %1136 = vmatprep.subr.mxu0 0.0
      %v1137 = vand.u32 %v713, 4294901760
      %1138 = vmatpush1.msra.mxu0 %v1137
      %1139 = vmatprep.subr.mxu0 0.0
      %v1140 = vand.u32 %v712, 4294901760
      %1141 = vmatpush1.msra.mxu0 %v1140
      %1142 = vmatprep.subr.mxu0 0.0
      %1143 = vmatpush2.msra.mxu0 0.0
      %1144 = vmatprep.subr.mxu0 0.0
      %1145 = vmatpush2.msra.mxu0 0.0
      %1146 = vmatprep.subr.mxu0 0.0
      %1147 = vmatpush2.msra.mxu0 0.0
      %1148 = vmatprep.subr.mxu0 0.0
      %1149 = vmatpush2.msra.mxu0 0.0
      %1150 = vmatprep.subr.mxu0 0.0
      %1151 = vmatpush2.msra.mxu0 0.0
      %1152 = vmatprep.subr.mxu0 0.0
      %1153 = vmatpush2.msra.mxu0 0.0
      %1154 = vmatprep.subr.mxu0 0.0
      %1155 = vmatpush2.msra.mxu0 0.0
      %1156 = vmatprep.subr.mxu0 0.0
      %1157 = vmatpush2.msra.mxu0 0.0
      %1158 = vmatprep.subr.mxu0 0.0
      %1159 = vmatpush2.msra.mxu0 0.0
      %1160 = vmatprep.subr.mxu0 0.0
      %1161 = vmatpush2.msra.mxu0 0.0
      %1162 = vmatprep.subr.mxu0 0.0
      %1163 = vmatpush2.msra.mxu0 0.0
      %1164 = vmatprep.subr.mxu0 0.0
      %1165 = vmatpush2.msra.mxu0 0.0
      %1166 = vmatprep.subr.mxu0 0.0
      %1167 = vmatpush2.msra.mxu0 0.0
      %1168 = vmatprep.subr.mxu0 0.0
      %1169 = vmatpush2.msra.mxu0 0.0
      %1170 = vmatprep.subr.mxu0 0.0
      %1171 = vmatpush2.msra.mxu0 0.0
      %1172 = vmatprep.subr.mxu0 0.0
      %1173 = vmatpush2.msra.mxu0 0.0
      %1174 = vmatprep.mubr.f32.mxu0 0.0
      %v1175 = vand.u32 %v720, 4294901760
      %1176 = vmatmul.mubr.f32.gmra.mxu0 %v1175
      %v1177 = vpop.f32.mrf.mxu0
      %v1178 = vadd.f32 %v1105, %v1177
      %v1179 = vpop.f32.mrf.mxu0
      %1180 = vdwg.mxu0
      %v1181 = vld [vmem:[%s667] sm:$0xff]
      %v1183 = vsel %vm718, %v1181, 0
      %1185 = vmatprep.subr.mxu0 0.0
      %1186 = vmatpush1.msra.mxu0 0.0
      %1187 = vmatprep.subr.mxu0 0.0
      %1188 = vmatpush1.msra.mxu0 0.0
      %1189 = vmatprep.subr.mxu0 0.0
      %1190 = vmatpush1.msra.mxu0 0.0
      %1191 = vmatprep.subr.mxu0 0.0
      %1192 = vmatpush1.msra.mxu0 0.0
      %1193 = vmatprep.subr.mxu0 0.0
      %1194 = vmatpush1.msra.mxu0 0.0
      %1195 = vmatprep.subr.mxu0 0.0
      %1196 = vmatpush1.msra.mxu0 0.0
      %1197 = vmatprep.subr.mxu0 0.0
      %1198 = vmatpush1.msra.mxu0 0.0
      %1199 = vmatprep.subr.mxu0 0.0
      %1200 = vmatpush1.msra.mxu0 0.0
      %1201 = vmatprep.subr.mxu0 0.0
      %1202 = vmatpush1.msra.mxu0 0.0
      %1203 = vmatprep.subr.mxu0 0.0
      %1204 = vmatpush1.msra.mxu0 0.0
      %1205 = vmatprep.subr.mxu0 0.0
      %1206 = vmatpush1.msra.mxu0 0.0
      %1207 = vmatprep.subr.mxu0 0.0
      %1208 = vmatpush1.msra.mxu0 0.0
      %1209 = vmatprep.subr.mxu0 0.0
      %1210 = vmatpush1.msra.mxu0 0.0
      %1211 = vmatprep.subr.mxu0 0.0
      %1212 = vmatpush1.msra.mxu0 0.0
      %1213 = vmatprep.subr.mxu0 0.0
      %v1214 = vand.u32 %v715, 4294901760
      %1215 = vmatpush1.msra.mxu0 %v1214
      %1216 = vmatprep.subr.mxu0 0.0
      %v1217 = vand.u32 %v714, 4294901760
      %1218 = vmatpush1.msra.mxu0 %v1217
      %1219 = vmatprep.subr.mxu0 0.0
      %1220 = vmatpush2.msra.mxu0 0.0
      %1221 = vmatprep.subr.mxu0 0.0
      %1222 = vmatpush2.msra.mxu0 0.0
      %1223 = vmatprep.subr.mxu0 0.0
      %1224 = vmatpush2.msra.mxu0 0.0
      %1225 = vmatprep.subr.mxu0 0.0
      %1226 = vmatpush2.msra.mxu0 0.0
      %1227 = vmatprep.subr.mxu0 0.0
      %1228 = vmatpush2.msra.mxu0 0.0
      %1229 = vmatprep.subr.mxu0 0.0
      %1230 = vmatpush2.msra.mxu0 0.0
      %1231 = vmatprep.subr.mxu0 0.0
      %1232 = vmatpush2.msra.mxu0 0.0
      %1233 = vmatprep.subr.mxu0 0.0
      %1234 = vmatpush2.msra.mxu0 0.0
      %1235 = vmatprep.subr.mxu0 0.0
      %1236 = vmatpush2.msra.mxu0 0.0
      %1237 = vmatprep.subr.mxu0 0.0
      %1238 = vmatpush2.msra.mxu0 0.0
      %1239 = vmatprep.subr.mxu0 0.0
      %1240 = vmatpush2.msra.mxu0 0.0
      %1241 = vmatprep.subr.mxu0 0.0
      %1242 = vmatpush2.msra.mxu0 0.0
      %1243 = vmatprep.subr.mxu0 0.0
      %1244 = vmatpush2.msra.mxu0 0.0
      %1245 = vmatprep.subr.mxu0 0.0
      %1246 = vmatpush2.msra.mxu0 0.0
      %1247 = vmatprep.subr.mxu0 0.0
      %1248 = vmatpush2.msra.mxu0 0.0
      %1249 = vmatprep.subr.mxu0 0.0
      %1250 = vmatpush2.msra.mxu0 0.0
      %1251 = vmatprep.mubr.f32.mxu0 0.0
      %v1252 = vand.u32 %v1183, 4294901760
      %v1253 = vsub.f32 %v1183, %v1252
      %v1254 = vand.u32 %v1253, 4294901760
      %v1255 = vsub.f32 %v1253, %v1254
      %v1256 = vand.u32 %v1255, 4294901760
      %1257 = vmatmul.mubr.f32.gmra.mxu0 %v1256
      %v1258 = vpop.f32.mrf.mxu0
      %v1259 = vadd.f32 0.0, %v1258
      %v1260 = vpop.f32.mrf.mxu0
      %1261 = vdwg.mxu0
      %1262 = vmatprep.subr.mxu0 0.0
      %1263 = vmatpush1.msra.mxu0 0.0
      %1264 = vmatprep.subr.mxu0 0.0
      %1265 = vmatpush1.msra.mxu0 0.0
      %1266 = vmatprep.subr.mxu0 0.0
      %1267 = vmatpush1.msra.mxu0 0.0
      %1268 = vmatprep.subr.mxu0 0.0
      %1269 = vmatpush1.msra.mxu0 0.0
      %1270 = vmatprep.subr.mxu0 0.0
      %1271 = vmatpush1.msra.mxu0 0.0
      %1272 = vmatprep.subr.mxu0 0.0
      %1273 = vmatpush1.msra.mxu0 0.0
      %1274 = vmatprep.subr.mxu0 0.0
      %1275 = vmatpush1.msra.mxu0 0.0
      %1276 = vmatprep.subr.mxu0 0.0
      %1277 = vmatpush1.msra.mxu0 0.0
      %1278 = vmatprep.subr.mxu0 0.0
      %1279 = vmatpush1.msra.mxu0 0.0
      %1280 = vmatprep.subr.mxu0 0.0
      %1281 = vmatpush1.msra.mxu0 0.0
      %1282 = vmatprep.subr.mxu0 0.0
      %1283 = vmatpush1.msra.mxu0 0.0
      %1284 = vmatprep.subr.mxu0 0.0
      %1285 = vmatpush1.msra.mxu0 0.0
      %1286 = vmatprep.subr.mxu0 0.0
      %1287 = vmatpush1.msra.mxu0 0.0
      %1288 = vmatprep.subr.mxu0 0.0
      %1289 = vmatpush1.msra.mxu0 0.0
      %1290 = vmatprep.subr.mxu0 0.0
      %v1291 = vand.u32 %v715, 4294901760
      %v1292 = vsub.f32 %v715, %v1291
      %v1293 = vand.u32 %v1292, 4294901760
      %v1294 = vsub.f32 %v1292, %v1293
      %v1295 = vand.u32 %v1294, 4294901760
      %1296 = vmatpush1.msra.mxu0 %v1295
      %1297 = vmatprep.subr.mxu0 0.0
      %v1298 = vand.u32 %v714, 4294901760
      %v1299 = vsub.f32 %v714, %v1298
      %v1300 = vand.u32 %v1299, 4294901760
      %v1301 = vsub.f32 %v1299, %v1300
      %v1302 = vand.u32 %v1301, 4294901760
      %1303 = vmatpush1.msra.mxu0 %v1302
      %1304 = vmatprep.subr.mxu0 0.0
      %1305 = vmatpush2.msra.mxu0 0.0
      %1306 = vmatprep.subr.mxu0 0.0
      %1307 = vmatpush2.msra.mxu0 0.0
      %1308 = vmatprep.subr.mxu0 0.0
      %1309 = vmatpush2.msra.mxu0 0.0
      %1310 = vmatprep.subr.mxu0 0.0
      %1311 = vmatpush2.msra.mxu0 0.0
      %1312 = vmatprep.subr.mxu0 0.0
      %1313 = vmatpush2.msra.mxu0 0.0
      %1314 = vmatprep.subr.mxu0 0.0
      %1315 = vmatpush2.msra.mxu0 0.0
      %1316 = vmatprep.subr.mxu0 0.0
      %1317 = vmatpush2.msra.mxu0 0.0
      %1318 = vmatprep.subr.mxu0 0.0
      %1319 = vmatpush2.msra.mxu0 0.0
      %1320 = vmatprep.subr.mxu0 0.0
      %1321 = vmatpush2.msra.mxu0 0.0
      %1322 = vmatprep.subr.mxu0 0.0
      %1323 = vmatpush2.msra.mxu0 0.0
      %1324 = vmatprep.subr.mxu0 0.0
      %1325 = vmatpush2.msra.mxu0 0.0
      %1326 = vmatprep.subr.mxu0 0.0
      %1327 = vmatpush2.msra.mxu0 0.0
      %1328 = vmatprep.subr.mxu0 0.0
      %1329 = vmatpush2.msra.mxu0 0.0
      %1330 = vmatprep.subr.mxu0 0.0
      %1331 = vmatpush2.msra.mxu0 0.0
      %1332 = vmatprep.subr.mxu0 0.0
      %1333 = vmatpush2.msra.mxu0 0.0
      %1334 = vmatprep.subr.mxu0 0.0
      %1335 = vmatpush2.msra.mxu0 0.0
      %1336 = vmatprep.mubr.f32.mxu0 0.0
      %v1337 = vand.u32 %v1183, 4294901760
      %1338 = vmatmul.mubr.f32.gmra.mxu0 %v1337
      %v1339 = vpop.f32.mrf.mxu0
      %v1340 = vadd.f32 %v1259, %v1339
      %v1341 = vpop.f32.mrf.mxu0
      %1342 = vdwg.mxu0
      %1343 = vmatprep.subr.mxu0 0.0
      %1344 = vmatpush1.msra.mxu0 0.0
      %1345 = vmatprep.subr.mxu0 0.0
      %1346 = vmatpush1.msra.mxu0 0.0
      %1347 = vmatprep.subr.mxu0 0.0
      %1348 = vmatpush1.msra.mxu0 0.0
      %1349 = vmatprep.subr.mxu0 0.0
      %1350 = vmatpush1.msra.mxu0 0.0
      %1351 = vmatprep.subr.mxu0 0.0
      %1352 = vmatpush1.msra.mxu0 0.0
      %1353 = vmatprep.subr.mxu0 0.0
      %1354 = vmatpush1.msra.mxu0 0.0
      %1355 = vmatprep.subr.mxu0 0.0
      %1356 = vmatpush1.msra.mxu0 0.0
      %1357 = vmatprep.subr.mxu0 0.0
      %1358 = vmatpush1.msra.mxu0 0.0
      %1359 = vmatprep.subr.mxu0 0.0
      %1360 = vmatpush1.msra.mxu0 0.0
      %1361 = vmatprep.subr.mxu0 0.0
      %1362 = vmatpush1.msra.mxu0 0.0
      %1363 = vmatprep.subr.mxu0 0.0
      %1364 = vmatpush1.msra.mxu0 0.0
      %1365 = vmatprep.subr.mxu0 0.0
      %1366 = vmatpush1.msra.mxu0 0.0
      %1367 = vmatprep.subr.mxu0 0.0
      %1368 = vmatpush1.msra.mxu0 0.0
      %1369 = vmatprep.subr.mxu0 0.0
      %1370 = vmatpush1.msra.mxu0 0.0
      %1371 = vmatprep.subr.mxu0 0.0
      %v1372 = vand.u32 %v715, 4294901760
      %v1373 = vsub.f32 %v715, %v1372
      %1374 = vmatpush1.msra.mxu0 %v1373
      %1375 = vmatprep.subr.mxu0 0.0
      %v1376 = vand.u32 %v714, 4294901760
      %v1377 = vsub.f32 %v714, %v1376
      %1378 = vmatpush1.msra.mxu0 %v1377
      %1379 = vmatprep.subr.mxu0 0.0
      %1380 = vmatpush2.msra.mxu0 0.0
      %1381 = vmatprep.subr.mxu0 0.0
      %1382 = vmatpush2.msra.mxu0 0.0
      %1383 = vmatprep.subr.mxu0 0.0
      %1384 = vmatpush2.msra.mxu0 0.0
      %1385 = vmatprep.subr.mxu0 0.0
      %1386 = vmatpush2.msra.mxu0 0.0
      %1387 = vmatprep.subr.mxu0 0.0
      %1388 = vmatpush2.msra.mxu0 0.0
      %1389 = vmatprep.subr.mxu0 0.0
      %1390 = vmatpush2.msra.mxu0 0.0
      %1391 = vmatprep.subr.mxu0 0.0
      %1392 = vmatpush2.msra.mxu0 0.0
      %1393 = vmatprep.subr.mxu0 0.0
      %1394 = vmatpush2.msra.mxu0 0.0
      %1395 = vmatprep.subr.mxu0 0.0
      %1396 = vmatpush2.msra.mxu0 0.0
      %1397 = vmatprep.subr.mxu0 0.0
      %1398 = vmatpush2.msra.mxu0 0.0
      %1399 = vmatprep.subr.mxu0 0.0
      %1400 = vmatpush2.msra.mxu0 0.0
      %1401 = vmatprep.subr.mxu0 0.0
      %1402 = vmatpush2.msra.mxu0 0.0
      %1403 = vmatprep.subr.mxu0 0.0
      %1404 = vmatpush2.msra.mxu0 0.0
      %1405 = vmatprep.subr.mxu0 0.0
      %1406 = vmatpush2.msra.mxu0 0.0
      %1407 = vmatprep.subr.mxu0 0.0
      %1408 = vmatpush2.msra.mxu0 0.0
      %1409 = vmatprep.subr.mxu0 0.0
      %1410 = vmatpush2.msra.mxu0 0.0
      %1411 = vmatprep.mubr.f32.mxu0 0.0
      %v1412 = vand.u32 %v1183, 4294901760
      %v1413 = vsub.f32 %v1183, %v1412
      %1414 = vmatmul.mubr.f32.gmra.mxu0 %v1413
      %v1415 = vpop.f32.mrf.mxu0
      %v1416 = vadd.f32 %v1340, %v1415
      %v1417 = vpop.f32.mrf.mxu0
      %1418 = vdwg.mxu0
      %1419 = vmatprep.subr.mxu0 0.0
      %1420 = vmatpush1.msra.mxu0 0.0
      %1421 = vmatprep.subr.mxu0 0.0
      %1422 = vmatpush1.msra.mxu0 0.0
      %1423 = vmatprep.subr.mxu0 0.0
      %1424 = vmatpush1.msra.mxu0 0.0
      %1425 = vmatprep.subr.mxu0 0.0
      %1426 = vmatpush1.msra.mxu0 0.0
      %1427 = vmatprep.subr.mxu0 0.0
      %1428 = vmatpush1.msra.mxu0 0.0
      %1429 = vmatprep.subr.mxu0 0.0
      %1430 = vmatpush1.msra.mxu0 0.0
      %1431 = vmatprep.subr.mxu0 0.0
      %1432 = vmatpush1.msra.mxu0 0.0
      %1433 = vmatprep.subr.mxu0 0.0
      %1434 = vmatpush1.msra.mxu0 0.0
      %1435 = vmatprep.subr.mxu0 0.0
      %1436 = vmatpush1.msra.mxu0 0.0
      %1437 = vmatprep.subr.mxu0 0.0
      %1438 = vmatpush1.msra.mxu0 0.0
      %1439 = vmatprep.subr.mxu0 0.0
      %1440 = vmatpush1.msra.mxu0 0.0
      %1441 = vmatprep.subr.mxu0 0.0
      %1442 = vmatpush1.msra.mxu0 0.0
      %1443 = vmatprep.subr.mxu0 0.0
      %1444 = vmatpush1.msra.mxu0 0.0
      %1445 = vmatprep.subr.mxu0 0.0
      %1446 = vmatpush1.msra.mxu0 0.0
      %1447 = vmatprep.subr.mxu0 0.0
      %v1448 = vand.u32 %v715, 4294901760
      %1449 = vmatpush1.msra.mxu0 %v1448
      %1450 = vmatprep.subr.mxu0 0.0
      %v1451 = vand.u32 %v714, 4294901760
      %1452 = vmatpush1.msra.mxu0 %v1451
      %1453 = vmatprep.subr.mxu0 0.0
      %1454 = vmatpush2.msra.mxu0 0.0
      %1455 = vmatprep.subr.mxu0 0.0
      %1456 = vmatpush2.msra.mxu0 0.0
      %1457 = vmatprep.subr.mxu0 0.0
      %1458 = vmatpush2.msra.mxu0 0.0
      %1459 = vmatprep.subr.mxu0 0.0
      %1460 = vmatpush2.msra.mxu0 0.0
      %1461 = vmatprep.subr.mxu0 0.0
      %1462 = vmatpush2.msra.mxu0 0.0
      %1463 = vmatprep.subr.mxu0 0.0
      %1464 = vmatpush2.msra.mxu0 0.0
      %1465 = vmatprep.subr.mxu0 0.0
      %1466 = vmatpush2.msra.mxu0 0.0
      %1467 = vmatprep.subr.mxu0 0.0
      %1468 = vmatpush2.msra.mxu0 0.0
      %1469 = vmatprep.subr.mxu0 0.0
      %1470 = vmatpush2.msra.mxu0 0.0
      %1471 = vmatprep.subr.mxu0 0.0
      %1472 = vmatpush2.msra.mxu0 0.0
      %1473 = vmatprep.subr.mxu0 0.0
      %1474 = vmatpush2.msra.mxu0 0.0
      %1475 = vmatprep.subr.mxu0 0.0
      %1476 = vmatpush2.msra.mxu0 0.0
      %1477 = vmatprep.subr.mxu0 0.0
      %1478 = vmatpush2.msra.mxu0 0.0
      %1479 = vmatprep.subr.mxu0 0.0
      %1480 = vmatpush2.msra.mxu0 0.0
      %1481 = vmatprep.subr.mxu0 0.0
      %1482 = vmatpush2.msra.mxu0 0.0
      %1483 = vmatprep.subr.mxu0 0.0
      %1484 = vmatpush2.msra.mxu0 0.0
      %1485 = vmatprep.mubr.f32.mxu0 0.0
      %v1486 = vand.u32 %v1183, 4294901760
      %v1487 = vsub.f32 %v1183, %v1486
      %v1488 = vand.u32 %v1487, 4294901760
      %1489 = vmatmul.mubr.f32.gmra.mxu0 %v1488
      %v1490 = vpop.f32.mrf.mxu0
      %v1491 = vadd.f32 %v1416, %v1490
      %v1492 = vpop.f32.mrf.mxu0
      %1493 = vdwg.mxu0
      %1494 = vmatprep.subr.mxu0 0.0
      %1495 = vmatpush1.msra.mxu0 0.0
      %1496 = vmatprep.subr.mxu0 0.0
      %1497 = vmatpush1.msra.mxu0 0.0
      %1498 = vmatprep.subr.mxu0 0.0
      %1499 = vmatpush1.msra.mxu0 0.0
      %1500 = vmatprep.subr.mxu0 0.0
      %1501 = vmatpush1.msra.mxu0 0.0
      %1502 = vmatprep.subr.mxu0 0.0
      %1503 = vmatpush1.msra.mxu0 0.0
      %1504 = vmatprep.subr.mxu0 0.0
      %1505 = vmatpush1.msra.mxu0 0.0
      %1506 = vmatprep.subr.mxu0 0.0
      %1507 = vmatpush1.msra.mxu0 0.0
      %1508 = vmatprep.subr.mxu0 0.0
      %1509 = vmatpush1.msra.mxu0 0.0
      %1510 = vmatprep.subr.mxu0 0.0
      %1511 = vmatpush1.msra.mxu0 0.0
      %1512 = vmatprep.subr.mxu0 0.0
      %1513 = vmatpush1.msra.mxu0 0.0
      %1514 = vmatprep.subr.mxu0 0.0
      %1515 = vmatpush1.msra.mxu0 0.0
      %1516 = vmatprep.subr.mxu0 0.0
      %1517 = vmatpush1.msra.mxu0 0.0
      %1518 = vmatprep.subr.mxu0 0.0
      %1519 = vmatpush1.msra.mxu0 0.0
      %1520 = vmatprep.subr.mxu0 0.0
      %1521 = vmatpush1.msra.mxu0 0.0
      %1522 = vmatprep.subr.mxu0 0.0
      %v1523 = vand.u32 %v715, 4294901760
      %v1524 = vsub.f32 %v715, %v1523
      %v1525 = vand.u32 %v1524, 4294901760
      %1526 = vmatpush1.msra.mxu0 %v1525
      %1527 = vmatprep.subr.mxu0 0.0
      %v1528 = vand.u32 %v714, 4294901760
      %v1529 = vsub.f32 %v714, %v1528
      %v1530 = vand.u32 %v1529, 4294901760
      %1531 = vmatpush1.msra.mxu0 %v1530
      %1532 = vmatprep.subr.mxu0 0.0
      %1533 = vmatpush2.msra.mxu0 0.0
      %1534 = vmatprep.subr.mxu0 0.0
      %1535 = vmatpush2.msra.mxu0 0.0
      %1536 = vmatprep.subr.mxu0 0.0
      %1537 = vmatpush2.msra.mxu0 0.0
      %1538 = vmatprep.subr.mxu0 0.0
      %1539 = vmatpush2.msra.mxu0 0.0
      %1540 = vmatprep.subr.mxu0 0.0
      %1541 = vmatpush2.msra.mxu0 0.0
      %1542 = vmatprep.subr.mxu0 0.0
      %1543 = vmatpush2.msra.mxu0 0.0
      %1544 = vmatprep.subr.mxu0 0.0
      %1545 = vmatpush2.msra.mxu0 0.0
      %1546 = vmatprep.subr.mxu0 0.0
      %1547 = vmatpush2.msra.mxu0 0.0
      %1548 = vmatprep.subr.mxu0 0.0
      %1549 = vmatpush2.msra.mxu0 0.0
      %1550 = vmatprep.subr.mxu0 0.0
      %1551 = vmatpush2.msra.mxu0 0.0
      %1552 = vmatprep.subr.mxu0 0.0
      %1553 = vmatpush2.msra.mxu0 0.0
      %1554 = vmatprep.subr.mxu0 0.0
      %1555 = vmatpush2.msra.mxu0 0.0
      %1556 = vmatprep.subr.mxu0 0.0
      %1557 = vmatpush2.msra.mxu0 0.0
      %1558 = vmatprep.subr.mxu0 0.0
      %1559 = vmatpush2.msra.mxu0 0.0
      %1560 = vmatprep.subr.mxu0 0.0
      %1561 = vmatpush2.msra.mxu0 0.0
      %1562 = vmatprep.subr.mxu0 0.0
      %1563 = vmatpush2.msra.mxu0 0.0
      %1564 = vmatprep.mubr.f32.mxu0 0.0
      %v1565 = vand.u32 %v1183, 4294901760
      %1566 = vmatmul.mubr.f32.gmra.mxu0 %v1565
      %v1567 = vpop.f32.mrf.mxu0
      %v1568 = vadd.f32 %v1491, %v1567
      %v1569 = vpop.f32.mrf.mxu0
      %1570 = vdwg.mxu0
      %1571 = vmatprep.subr.mxu0 0.0
      %1572 = vmatpush1.msra.mxu0 0.0
      %1573 = vmatprep.subr.mxu0 0.0
      %1574 = vmatpush1.msra.mxu0 0.0
      %1575 = vmatprep.subr.mxu0 0.0
      %1576 = vmatpush1.msra.mxu0 0.0
      %1577 = vmatprep.subr.mxu0 0.0
      %1578 = vmatpush1.msra.mxu0 0.0
      %1579 = vmatprep.subr.mxu0 0.0
      %1580 = vmatpush1.msra.mxu0 0.0
      %1581 = vmatprep.subr.mxu0 0.0
      %1582 = vmatpush1.msra.mxu0 0.0
      %1583 = vmatprep.subr.mxu0 0.0
      %1584 = vmatpush1.msra.mxu0 0.0
      %1585 = vmatprep.subr.mxu0 0.0
      %1586 = vmatpush1.msra.mxu0 0.0
      %1587 = vmatprep.subr.mxu0 0.0
      %1588 = vmatpush1.msra.mxu0 0.0
      %1589 = vmatprep.subr.mxu0 0.0
      %1590 = vmatpush1.msra.mxu0 0.0
      %1591 = vmatprep.subr.mxu0 0.0
      %1592 = vmatpush1.msra.mxu0 0.0
      %1593 = vmatprep.subr.mxu0 0.0
      %1594 = vmatpush1.msra.mxu0 0.0
      %1595 = vmatprep.subr.mxu0 0.0
      %1596 = vmatpush1.msra.mxu0 0.0
      %1597 = vmatprep.subr.mxu0 0.0
      %1598 = vmatpush1.msra.mxu0 0.0
      %1599 = vmatprep.subr.mxu0 0.0
      %v1600 = vand.u32 %v715, 4294901760
      %1601 = vmatpush1.msra.mxu0 %v1600
      %1602 = vmatprep.subr.mxu0 0.0
      %v1603 = vand.u32 %v714, 4294901760
      %1604 = vmatpush1.msra.mxu0 %v1603
      %1605 = vmatprep.subr.mxu0 0.0
      %1606 = vmatpush2.msra.mxu0 0.0
      %1607 = vmatprep.subr.mxu0 0.0
      %1608 = vmatpush2.msra.mxu0 0.0
      %1609 = vmatprep.subr.mxu0 0.0
      %1610 = vmatpush2.msra.mxu0 0.0
      %1611 = vmatprep.subr.mxu0 0.0
      %1612 = vmatpush2.msra.mxu0 0.0
      %1613 = vmatprep.subr.mxu0 0.0
      %1614 = vmatpush2.msra.mxu0 0.0
      %1615 = vmatprep.subr.mxu0 0.0
      %1616 = vmatpush2.msra.mxu0 0.0
      %1617 = vmatprep.subr.mxu0 0.0
      %1618 = vmatpush2.msra.mxu0 0.0
      %1619 = vmatprep.subr.mxu0 0.0
      %1620 = vmatpush2.msra.mxu0 0.0
      %1621 = vmatprep.subr.mxu0 0.0
      %1622 = vmatpush2.msra.mxu0 0.0
      %1623 = vmatprep.subr.mxu0 0.0
      %1624 = vmatpush2.msra.mxu0 0.0
      %1625 = vmatprep.subr.mxu0 0.0
      %1626 = vmatpush2.msra.mxu0 0.0
      %1627 = vmatprep.subr.mxu0 0.0
      %1628 = vmatpush2.msra.mxu0 0.0
      %1629 = vmatprep.subr.mxu0 0.0
      %1630 = vmatpush2.msra.mxu0 0.0
      %1631 = vmatprep.subr.mxu0 0.0
      %1632 = vmatpush2.msra.mxu0 0.0
      %1633 = vmatprep.subr.mxu0 0.0
      %1634 = vmatpush2.msra.mxu0 0.0
      %1635 = vmatprep.subr.mxu0 0.0
      %1636 = vmatpush2.msra.mxu0 0.0
      %1637 = vmatprep.mubr.f32.mxu0 0.0
      %v1638 = vand.u32 %v1183, 4294901760
      %1639 = vmatmul.mubr.f32.gmra.mxu0 %v1638
      %v1640 = vpop.f32.mrf.mxu0
      %v1641 = vadd.f32 %v1568, %v1640
      %v1642 = vpop.f32.mrf.mxu0
      %1643 = vdwg.mxu0
      %v1644 = vld [vmem:[%s671] sm:$0xff]
      %v1645 = vld [vmem:[%s699] sm:$0xff]
      %vm1646 = vcmask 23552
      %v1648 = vsel %vm1646, %v1645, 0
      %vm1650 = vcmask 1042432
      %v1652 = vsel %vm1650, %v716, 0
      %1654 = vmatprep.subr.mxu0 0.0
      %1655 = vmatpush1.msra.mxu0 0.0
      %1656 = vmatprep.subr.mxu0 0.0
      %1657 = vmatpush1.msra.mxu0 0.0
      %1658 = vmatprep.subr.mxu0 0.0
      %1659 = vmatpush1.msra.mxu0 0.0
      %1660 = vmatprep.subr.mxu0 0.0
      %1661 = vmatpush1.msra.mxu0 0.0
      %1662 = vmatprep.subr.mxu0 0.0
      %1663 = vmatpush1.msra.mxu0 0.0
      %1664 = vmatprep.subr.mxu0 0.0
      %1665 = vmatpush1.msra.mxu0 0.0
      %1666 = vmatprep.subr.mxu0 0.0
      %1667 = vmatpush1.msra.mxu0 0.0
      %1668 = vmatprep.subr.mxu0 0.0
      %1669 = vmatpush1.msra.mxu0 0.0
      %1670 = vmatprep.subr.mxu0 0.0
      %1671 = vmatpush1.msra.mxu0 0.0
      %1672 = vmatprep.subr.mxu0 0.0
      %1673 = vmatpush1.msra.mxu0 0.0
      %1674 = vmatprep.subr.mxu0 0.0
      %1675 = vmatpush1.msra.mxu0 0.0
      %1676 = vmatprep.subr.mxu0 0.0
      %1677 = vmatpush1.msra.mxu0 0.0
      %1678 = vmatprep.subr.mxu0 0.0
      %1679 = vmatpush1.msra.mxu0 0.0
      %1680 = vmatprep.subr.mxu0 0.0
      %1681 = vmatpush1.msra.mxu0 0.0
      %1682 = vmatprep.subr.mxu0 0.0
      %1683 = vmatpush1.msra.mxu0 0.0
      %1684 = vmatprep.subr.mxu0 0.0
      %v1685 = vand.u32 %v1652, 4294901760
      %1686 = vmatpush1.msra.mxu0 %v1685
      %1687 = vmatprep.subr.mxu0 0.0
      %1688 = vmatpush2.msra.mxu0 0.0
      %1689 = vmatprep.subr.mxu0 0.0
      %1690 = vmatpush2.msra.mxu0 0.0
      %1691 = vmatprep.subr.mxu0 0.0
      %1692 = vmatpush2.msra.mxu0 0.0
      %1693 = vmatprep.subr.mxu0 0.0
      %1694 = vmatpush2.msra.mxu0 0.0
      %1695 = vmatprep.subr.mxu0 0.0
      %1696 = vmatpush2.msra.mxu0 0.0
      %1697 = vmatprep.subr.mxu0 0.0
      %1698 = vmatpush2.msra.mxu0 0.0
      %1699 = vmatprep.subr.mxu0 0.0
      %1700 = vmatpush2.msra.mxu0 0.0
      %1701 = vmatprep.subr.mxu0 0.0
      %1702 = vmatpush2.msra.mxu0 0.0
      %1703 = vmatprep.subr.mxu0 0.0
      %1704 = vmatpush2.msra.mxu0 0.0
      %1705 = vmatprep.subr.mxu0 0.0
      %1706 = vmatpush2.msra.mxu0 0.0
      %1707 = vmatprep.subr.mxu0 0.0
      %1708 = vmatpush2.msra.mxu0 0.0
      %1709 = vmatprep.subr.mxu0 0.0
      %1710 = vmatpush2.msra.mxu0 0.0
      %1711 = vmatprep.subr.mxu0 0.0
      %1712 = vmatpush2.msra.mxu0 0.0
      %1713 = vmatprep.subr.mxu0 0.0
      %1714 = vmatpush2.msra.mxu0 0.0
      %1715 = vmatprep.subr.mxu0 0.0
      %1716 = vmatpush2.msra.mxu0 0.0
      %1717 = vmatprep.subr.mxu0 0.0
      %1718 = vmatpush2.msra.mxu0 0.0
      %1719 = vmatprep.mubr.f32.mxu0 0.0
      %v1720 = vand.u32 %v1648, 4294901760
      %v1721 = vsub.f32 %v1648, %v1720
      %v1722 = vand.u32 %v1721, 4294901760
      %v1723 = vsub.f32 %v1721, %v1722
      %v1724 = vand.u32 %v1723, 4294901760
      %1725 = vmatmul.mubr.f32.gmra.mxu0 %v1724
      %v1726 = vpop.f32.mrf.mxu0
      %v1727 = vadd.f32 0.0, %v1726
      %v1728 = vpop.f32.mrf.mxu0
      %1729 = vdwg.mxu0
      %1730 = vmatprep.subr.mxu0 0.0
      %1731 = vmatpush1.msra.mxu0 0.0
      %1732 = vmatprep.subr.mxu0 0.0
      %1733 = vmatpush1.msra.mxu0 0.0
      %1734 = vmatprep.subr.mxu0 0.0
      %1735 = vmatpush1.msra.mxu0 0.0
      %1736 = vmatprep.subr.mxu0 0.0
      %1737 = vmatpush1.msra.mxu0 0.0
      %1738 = vmatprep.subr.mxu0 0.0
      %1739 = vmatpush1.msra.mxu0 0.0
      %1740 = vmatprep.subr.mxu0 0.0
      %1741 = vmatpush1.msra.mxu0 0.0
      %1742 = vmatprep.subr.mxu0 0.0
      %1743 = vmatpush1.msra.mxu0 0.0
      %1744 = vmatprep.subr.mxu0 0.0
      %1745 = vmatpush1.msra.mxu0 0.0
      %1746 = vmatprep.subr.mxu0 0.0
      %1747 = vmatpush1.msra.mxu0 0.0
      %1748 = vmatprep.subr.mxu0 0.0
      %1749 = vmatpush1.msra.mxu0 0.0
      %1750 = vmatprep.subr.mxu0 0.0
      %1751 = vmatpush1.msra.mxu0 0.0
      %1752 = vmatprep.subr.mxu0 0.0
      %1753 = vmatpush1.msra.mxu0 0.0
      %1754 = vmatprep.subr.mxu0 0.0
      %1755 = vmatpush1.msra.mxu0 0.0
      %1756 = vmatprep.subr.mxu0 0.0
      %1757 = vmatpush1.msra.mxu0 0.0
      %1758 = vmatprep.subr.mxu0 0.0
      %1759 = vmatpush1.msra.mxu0 0.0
      %1760 = vmatprep.subr.mxu0 0.0
      %v1761 = vand.u32 %v1652, 4294901760
      %v1762 = vsub.f32 %v1652, %v1761
      %v1763 = vand.u32 %v1762, 4294901760
      %v1764 = vsub.f32 %v1762, %v1763
      %v1765 = vand.u32 %v1764, 4294901760
      %1766 = vmatpush1.msra.mxu0 %v1765
      %1767 = vmatprep.subr.mxu0 0.0
      %1768 = vmatpush2.msra.mxu0 0.0
      %1769 = vmatprep.subr.mxu0 0.0
      %1770 = vmatpush2.msra.mxu0 0.0
      %1771 = vmatprep.subr.mxu0 0.0
      %1772 = vmatpush2.msra.mxu0 0.0
      %1773 = vmatprep.subr.mxu0 0.0
      %1774 = vmatpush2.msra.mxu0 0.0
      %1775 = vmatprep.subr.mxu0 0.0
      %1776 = vmatpush2.msra.mxu0 0.0
      %1777 = vmatprep.subr.mxu0 0.0
      %1778 = vmatpush2.msra.mxu0 0.0
      %1779 = vmatprep.subr.mxu0 0.0
      %1780 = vmatpush2.msra.mxu0 0.0
      %1781 = vmatprep.subr.mxu0 0.0
      %1782 = vmatpush2.msra.mxu0 0.0
      %1783 = vmatprep.subr.mxu0 0.0
      %1784 = vmatpush2.msra.mxu0 0.0
      %1785 = vmatprep.subr.mxu0 0.0
      %1786 = vmatpush2.msra.mxu0 0.0
      %1787 = vmatprep.subr.mxu0 0.0
      %1788 = vmatpush2.msra.mxu0 0.0
      %1789 = vmatprep.subr.mxu0 0.0
      %1790 = vmatpush2.msra.mxu0 0.0
      %1791 = vmatprep.subr.mxu0 0.0
      %1792 = vmatpush2.msra.mxu0 0.0
      %1793 = vmatprep.subr.mxu0 0.0
      %1794 = vmatpush2.msra.mxu0 0.0
      %1795 = vmatprep.subr.mxu0 0.0
      %1796 = vmatpush2.msra.mxu0 0.0
      %1797 = vmatprep.subr.mxu0 0.0
      %1798 = vmatpush2.msra.mxu0 0.0
      %1799 = vmatprep.mubr.f32.mxu0 0.0
      %v1800 = vand.u32 %v1648, 4294901760
      %1801 = vmatmul.mubr.f32.gmra.mxu0 %v1800
      %v1802 = vpop.f32.mrf.mxu0
      %v1803 = vadd.f32 %v1727, %v1802
      %v1804 = vpop.f32.mrf.mxu0
      %1805 = vdwg.mxu0
      %1806 = vmatprep.subr.mxu0 0.0
      %1807 = vmatpush1.msra.mxu0 0.0
      %1808 = vmatprep.subr.mxu0 0.0
      %1809 = vmatpush1.msra.mxu0 0.0
      %1810 = vmatprep.subr.mxu0 0.0
      %1811 = vmatpush1.msra.mxu0 0.0
      %1812 = vmatprep.subr.mxu0 0.0
      %1813 = vmatpush1.msra.mxu0 0.0
      %1814 = vmatprep.subr.mxu0 0.0
      %1815 = vmatpush1.msra.mxu0 0.0
      %1816 = vmatprep.subr.mxu0 0.0
      %1817 = vmatpush1.msra.mxu0 0.0
      %1818 = vmatprep.subr.mxu0 0.0
      %1819 = vmatpush1.msra.mxu0 0.0
      %1820 = vmatprep.subr.mxu0 0.0
      %1821 = vmatpush1.msra.mxu0 0.0
      %1822 = vmatprep.subr.mxu0 0.0
      %1823 = vmatpush1.msra.mxu0 0.0
      %1824 = vmatprep.subr.mxu0 0.0
      %1825 = vmatpush1.msra.mxu0 0.0
      %1826 = vmatprep.subr.mxu0 0.0
      %1827 = vmatpush1.msra.mxu0 0.0
      %1828 = vmatprep.subr.mxu0 0.0
      %1829 = vmatpush1.msra.mxu0 0.0
      %1830 = vmatprep.subr.mxu0 0.0
      %1831 = vmatpush1.msra.mxu0 0.0
      %1832 = vmatprep.subr.mxu0 0.0
      %1833 = vmatpush1.msra.mxu0 0.0
      %1834 = vmatprep.subr.mxu0 0.0
      %1835 = vmatpush1.msra.mxu0 0.0
      %1836 = vmatprep.subr.mxu0 0.0
      %v1837 = vand.u32 %v1652, 4294901760
      %v1838 = vsub.f32 %v1652, %v1837
      %1839 = vmatpush1.msra.mxu0 %v1838
      %1840 = vmatprep.subr.mxu0 0.0
      %1841 = vmatpush2.msra.mxu0 0.0
      %1842 = vmatprep.subr.mxu0 0.0
      %1843 = vmatpush2.msra.mxu0 0.0
      %1844 = vmatprep.subr.mxu0 0.0
      %1845 = vmatpush2.msra.mxu0 0.0
      %1846 = vmatprep.subr.mxu0 0.0
      %1847 = vmatpush2.msra.mxu0 0.0
      %1848 = vmatprep.subr.mxu0 0.0
      %1849 = vmatpush2.msra.mxu0 0.0
      %1850 = vmatprep.subr.mxu0 0.0
      %1851 = vmatpush2.msra.mxu0 0.0
      %1852 = vmatprep.subr.mxu0 0.0
      %1853 = vmatpush2.msra.mxu0 0.0
      %1854 = vmatprep.subr.mxu0 0.0
      %1855 = vmatpush2.msra.mxu0 0.0
      %1856 = vmatprep.subr.mxu0 0.0
      %1857 = vmatpush2.msra.mxu0 0.0
      %1858 = vmatprep.subr.mxu0 0.0
      %1859 = vmatpush2.msra.mxu0 0.0
      %1860 = vmatprep.subr.mxu0 0.0
      %1861 = vmatpush2.msra.mxu0 0.0
      %1862 = vmatprep.subr.mxu0 0.0
      %1863 = vmatpush2.msra.mxu0 0.0
      %1864 = vmatprep.subr.mxu0 0.0
      %1865 = vmatpush2.msra.mxu0 0.0
      %1866 = vmatprep.subr.mxu0 0.0
      %1867 = vmatpush2.msra.mxu0 0.0
      %1868 = vmatprep.subr.mxu0 0.0
      %1869 = vmatpush2.msra.mxu0 0.0
      %1870 = vmatprep.subr.mxu0 0.0
      %1871 = vmatpush2.msra.mxu0 0.0
      %1872 = vmatprep.mubr.f32.mxu0 0.0
      %v1873 = vand.u32 %v1648, 4294901760
      %v1874 = vsub.f32 %v1648, %v1873
      %1875 = vmatmul.mubr.f32.gmra.mxu0 %v1874
      %v1876 = vpop.f32.mrf.mxu0
      %v1877 = vadd.f32 %v1803, %v1876
      %v1878 = vpop.f32.mrf.mxu0
      %1879 = vdwg.mxu0
      %1880 = vmatprep.subr.mxu0 0.0
      %1881 = vmatpush1.msra.mxu0 0.0
      %1882 = vmatprep.subr.mxu0 0.0
      %1883 = vmatpush1.msra.mxu0 0.0
      %1884 = vmatprep.subr.mxu0 0.0
      %1885 = vmatpush1.msra.mxu0 0.0
      %1886 = vmatprep.subr.mxu0 0.0
      %1887 = vmatpush1.msra.mxu0 0.0
      %1888 = vmatprep.subr.mxu0 0.0
      %1889 = vmatpush1.msra.mxu0 0.0
      %1890 = vmatprep.subr.mxu0 0.0
      %1891 = vmatpush1.msra.mxu0 0.0
      %1892 = vmatprep.subr.mxu0 0.0
      %1893 = vmatpush1.msra.mxu0 0.0
      %1894 = vmatprep.subr.mxu0 0.0
      %1895 = vmatpush1.msra.mxu0 0.0
      %1896 = vmatprep.subr.mxu0 0.0
      %1897 = vmatpush1.msra.mxu0 0.0
      %1898 = vmatprep.subr.mxu0 0.0
      %1899 = vmatpush1.msra.mxu0 0.0
      %1900 = vmatprep.subr.mxu0 0.0
      %1901 = vmatpush1.msra.mxu0 0.0
      %1902 = vmatprep.subr.mxu0 0.0
      %1903 = vmatpush1.msra.mxu0 0.0
      %1904 = vmatprep.subr.mxu0 0.0
      %1905 = vmatpush1.msra.mxu0 0.0
      %1906 = vmatprep.subr.mxu0 0.0
      %1907 = vmatpush1.msra.mxu0 0.0
      %1908 = vmatprep.subr.mxu0 0.0
      %1909 = vmatpush1.msra.mxu0 0.0
      %1910 = vmatprep.subr.mxu0 0.0
      %v1911 = vand.u32 %v1652, 4294901760
      %1912 = vmatpush1.msra.mxu0 %v1911
      %1913 = vmatprep.subr.mxu0 0.0
      %1914 = vmatpush2.msra.mxu0 0.0
      %1915 = vmatprep.subr.mxu0 0.0
      %1916 = vmatpush2.msra.mxu0 0.0
      %1917 = vmatprep.subr.mxu0 0.0
      %1918 = vmatpush2.msra.mxu0 0.0
      %1919 = vmatprep.subr.mxu0 0.0
      %1920 = vmatpush2.msra.mxu0 0.0
      %1921 = vmatprep.subr.mxu0 0.0
      %1922 = vmatpush2.msra.mxu0 0.0
      %1923 = vmatprep.subr.mxu0 0.0
      %1924 = vmatpush2.msra.mxu0 0.0
      %1925 = vmatprep.subr.mxu0 0.0
      %1926 = vmatpush2.msra.mxu0 0.0
      %1927 = vmatprep.subr.mxu0 0.0
      %1928 = vmatpush2.msra.mxu0 0.0
      %1929 = vmatprep.subr.mxu0 0.0
      %1930 = vmatpush2.msra.mxu0 0.0
      %1931 = vmatprep.subr.mxu0 0.0
      %1932 = vmatpush2.msra.mxu0 0.0
      %1933 = vmatprep.subr.mxu0 0.0
      %1934 = vmatpush2.msra.mxu0 0.0
      %1935 = vmatprep.subr.mxu0 0.0
      %1936 = vmatpush2.msra.mxu0 0.0
      %1937 = vmatprep.subr.mxu0 0.0
      %1938 = vmatpush2.msra.mxu0 0.0
      %1939 = vmatprep.subr.mxu0 0.0
      %1940 = vmatpush2.msra.mxu0 0.0
      %1941 = vmatprep.subr.mxu0 0.0
      %1942 = vmatpush2.msra.mxu0 0.0
      %1943 = vmatprep.subr.mxu0 0.0
      %1944 = vmatpush2.msra.mxu0 0.0
      %1945 = vmatprep.mubr.f32.mxu0 0.0
      %v1946 = vand.u32 %v1648, 4294901760
      %v1947 = vsub.f32 %v1648, %v1946
      %v1948 = vand.u32 %v1947, 4294901760
      %1949 = vmatmul.mubr.f32.gmra.mxu0 %v1948
      %v1950 = vpop.f32.mrf.mxu0
      %v1951 = vadd.f32 %v1877, %v1950
      %v1952 = vpop.f32.mrf.mxu0
      %1953 = vdwg.mxu0
      %1954 = vmatprep.subr.mxu0 0.0
      %1955 = vmatpush1.msra.mxu0 0.0
      %1956 = vmatprep.subr.mxu0 0.0
      %1957 = vmatpush1.msra.mxu0 0.0
      %1958 = vmatprep.subr.mxu0 0.0
      %1959 = vmatpush1.msra.mxu0 0.0
      %1960 = vmatprep.subr.mxu0 0.0
      %1961 = vmatpush1.msra.mxu0 0.0
      %1962 = vmatprep.subr.mxu0 0.0
      %1963 = vmatpush1.msra.mxu0 0.0
      %1964 = vmatprep.subr.mxu0 0.0
      %1965 = vmatpush1.msra.mxu0 0.0
      %1966 = vmatprep.subr.mxu0 0.0
      %1967 = vmatpush1.msra.mxu0 0.0
      %1968 = vmatprep.subr.mxu0 0.0
      %1969 = vmatpush1.msra.mxu0 0.0
      %1970 = vmatprep.subr.mxu0 0.0
      %1971 = vmatpush1.msra.mxu0 0.0
      %1972 = vmatprep.subr.mxu0 0.0
      %1973 = vmatpush1.msra.mxu0 0.0
      %1974 = vmatprep.subr.mxu0 0.0
      %1975 = vmatpush1.msra.mxu0 0.0
      %1976 = vmatprep.subr.mxu0 0.0
      %1977 = vmatpush1.msra.mxu0 0.0
      %1978 = vmatprep.subr.mxu0 0.0
      %1979 = vmatpush1.msra.mxu0 0.0
      %1980 = vmatprep.subr.mxu0 0.0
      %1981 = vmatpush1.msra.mxu0 0.0
      %1982 = vmatprep.subr.mxu0 0.0
      %1983 = vmatpush1.msra.mxu0 0.0
      %1984 = vmatprep.subr.mxu0 0.0
      %v1985 = vand.u32 %v1652, 4294901760
      %v1986 = vsub.f32 %v1652, %v1985
      %v1987 = vand.u32 %v1986, 4294901760
      %1988 = vmatpush1.msra.mxu0 %v1987
      %1989 = vmatprep.subr.mxu0 0.0
      %1990 = vmatpush2.msra.mxu0 0.0
      %1991 = vmatprep.subr.mxu0 0.0
      %1992 = vmatpush2.msra.mxu0 0.0
      %1993 = vmatprep.subr.mxu0 0.0
      %1994 = vmatpush2.msra.mxu0 0.0
      %1995 = vmatprep.subr.mxu0 0.0
      %1996 = vmatpush2.msra.mxu0 0.0
      %1997 = vmatprep.subr.mxu0 0.0
      %1998 = vmatpush2.msra.mxu0 0.0
      %1999 = vmatprep.subr.mxu0 0.0
      %2000 = vmatpush2.msra.mxu0 0.0
      %2001 = vmatprep.subr.mxu0 0.0
      %2002 = vmatpush2.msra.mxu0 0.0
      %2003 = vmatprep.subr.mxu0 0.0
      %2004 = vmatpush2.msra.mxu0 0.0
      %2005 = vmatprep.subr.mxu0 0.0
      %2006 = vmatpush2.msra.mxu0 0.0
      %2007 = vmatprep.subr.mxu0 0.0
      %2008 = vmatpush2.msra.mxu0 0.0
      %2009 = vmatprep.subr.mxu0 0.0
      %2010 = vmatpush2.msra.mxu0 0.0
      %2011 = vmatprep.subr.mxu0 0.0
      %2012 = vmatpush2.msra.mxu0 0.0
      %2013 = vmatprep.subr.mxu0 0.0
      %2014 = vmatpush2.msra.mxu0 0.0
      %2015 = vmatprep.subr.mxu0 0.0
      %2016 = vmatpush2.msra.mxu0 0.0
      %2017 = vmatprep.subr.mxu0 0.0
      %2018 = vmatpush2.msra.mxu0 0.0
      %2019 = vmatprep.subr.mxu0 0.0
      %2020 = vmatpush2.msra.mxu0 0.0
      %2021 = vmatprep.mubr.f32.mxu0 0.0
      %v2022 = vand.u32 %v1648, 4294901760
      %2023 = vmatmul.mubr.f32.gmra.mxu0 %v2022
      %v2024 = vpop.f32.mrf.mxu0
      %v2025 = vadd.f32 %v1951, %v2024
      %v2026 = vpop.f32.mrf.mxu0
      %2027 = vdwg.mxu0
      %2028 = vmatprep.subr.mxu0 0.0
      %2029 = vmatpush1.msra.mxu0 0.0
      %2030 = vmatprep.subr.mxu0 0.0
      %2031 = vmatpush1.msra.mxu0 0.0
      %2032 = vmatprep.subr.mxu0 0.0
      %2033 = vmatpush1.msra.mxu0 0.0
      %2034 = vmatprep.subr.mxu0 0.0
      %2035 = vmatpush1.msra.mxu0 0.0
      %2036 = vmatprep.subr.mxu0 0.0
      %2037 = vmatpush1.msra.mxu0 0.0
      %2038 = vmatprep.subr.mxu0 0.0
      %2039 = vmatpush1.msra.mxu0 0.0
      %2040 = vmatprep.subr.mxu0 0.0
      %2041 = vmatpush1.msra.mxu0 0.0
      %2042 = vmatprep.subr.mxu0 0.0
      %2043 = vmatpush1.msra.mxu0 0.0
      %2044 = vmatprep.subr.mxu0 0.0
      %2045 = vmatpush1.msra.mxu0 0.0
      %2046 = vmatprep.subr.mxu0 0.0
      %2047 = vmatpush1.msra.mxu0 0.0
      %2048 = vmatprep.subr.mxu0 0.0
      %2049 = vmatpush1.msra.mxu0 0.0
      %2050 = vmatprep.subr.mxu0 0.0
      %2051 = vmatpush1.msra.mxu0 0.0
      %2052 = vmatprep.subr.mxu0 0.0
      %2053 = vmatpush1.msra.mxu0 0.0
      %2054 = vmatprep.subr.mxu0 0.0
      %2055 = vmatpush1.msra.mxu0 0.0
      %2056 = vmatprep.subr.mxu0 0.0
      %2057 = vmatpush1.msra.mxu0 0.0
      %2058 = vmatprep.subr.mxu0 0.0
      %v2059 = vand.u32 %v1652, 4294901760
      %2060 = vmatpush1.msra.mxu0 %v2059
      %2061 = vmatprep.subr.mxu0 0.0
      %2062 = vmatpush2.msra.mxu0 0.0
      %2063 = vmatprep.subr.mxu0 0.0
      %2064 = vmatpush2.msra.mxu0 0.0
      %2065 = vmatprep.subr.mxu0 0.0
      %2066 = vmatpush2.msra.mxu0 0.0
      %2067 = vmatprep.subr.mxu0 0.0
      %2068 = vmatpush2.msra.mxu0 0.0
      %2069 = vmatprep.subr.mxu0 0.0
      %2070 = vmatpush2.msra.mxu0 0.0
      %2071 = vmatprep.subr.mxu0 0.0
      %2072 = vmatpush2.msra.mxu0 0.0
      %2073 = vmatprep.subr.mxu0 0.0
      %2074 = vmatpush2.msra.mxu0 0.0
      %2075 = vmatprep.subr.mxu0 0.0
      %2076 = vmatpush2.msra.mxu0 0.0
      %2077 = vmatprep.subr.mxu0 0.0
      %2078 = vmatpush2.msra.mxu0 0.0
      %2079 = vmatprep.subr.mxu0 0.0
      %2080 = vmatpush2.msra.mxu0 0.0
      %2081 = vmatprep.subr.mxu0 0.0
      %2082 = vmatpush2.msra.mxu0 0.0
      %2083 = vmatprep.subr.mxu0 0.0
      %2084 = vmatpush2.msra.mxu0 0.0
      %2085 = vmatprep.subr.mxu0 0.0
      %2086 = vmatpush2.msra.mxu0 0.0
      %2087 = vmatprep.subr.mxu0 0.0
      %2088 = vmatpush2.msra.mxu0 0.0
      %2089 = vmatprep.subr.mxu0 0.0
      %2090 = vmatpush2.msra.mxu0 0.0
      %2091 = vmatprep.subr.mxu0 0.0
      %2092 = vmatpush2.msra.mxu0 0.0
      %2093 = vmatprep.mubr.f32.mxu0 0.0
      %v2094 = vand.u32 %v1648, 4294901760
      %2095 = vmatmul.mubr.f32.gmra.mxu0 %v2094
      %v2096 = vpop.f32.mrf.mxu0
      %v2097 = vadd.f32 %v2025, %v2096
      %v2098 = vpop.f32.mrf.mxu0
      %2099 = vdwg.mxu0
      %2100 = vxpose.xlu0.b32.start [1/16] %v1641, 128
      %2101 = vxpose.xlu0.b32.cont [2/16] 0.0, 128
      %2102 = vxpose.xlu0.b32.cont [3/16] 0.0, 128
      %2103 = vxpose.xlu0.b32.cont [4/16] 0.0, 128
      %2104 = vxpose.xlu0.b32.cont [5/16] 0.0, 128
      %2105 = vxpose.xlu0.b32.cont [6/16] 0.0, 128
      %2106 = vxpose.xlu0.b32.cont [7/16] 0.0, 128
      %2107 = vxpose.xlu0.b32.cont [8/16] 0.0, 128
      %2108 = vxpose.xlu0.b32.cont [9/16] 0.0, 128
      %2109 = vxpose.xlu0.b32.cont [10/16] 0.0, 128
      %2110 = vxpose.xlu0.b32.cont [11/16] 0.0, 128
      %2111 = vxpose.xlu0.b32.cont [12/16] 0.0, 128
      %2112 = vxpose.xlu0.b32.cont [13/16] 0.0, 128
      %2113 = vxpose.xlu0.b32.cont [14/16] 0.0, 128
      %2114 = vxpose.xlu0.b32.cont [15/16] 0.0, 128
      %2115 = vxpose.xlu0.b32.end [16/16] 0.0, 128
      %v2116 = vpop.trf.xlu0
      %v2117 = vpop.trf.xlu0
      %v2118 = vpop.trf.xlu0
      %v2119 = vpop.trf.xlu0
      %v2120 = vpop.trf.xlu0
      %v2121 = vpop.trf.xlu0
      %v2122 = vpop.trf.xlu0
      %v2123 = vpop.trf.xlu0
      %v2124 = vpop.trf.xlu0
      %v2125 = vpop.trf.xlu0
      %v2126 = vpop.trf.xlu0
      %v2127 = vpop.trf.xlu0
      %v2128 = vpop.trf.xlu0
      %v2129 = vpop.trf.xlu0
      %v2130 = vpop.trf.xlu0
      %v2131 = vpop.trf.xlu0
      %vm2132 = vcmask 64512
      %v2134 = vsel %vm2132, %v2116, 0
      %2136 = vmatprep.subr.mxu0 0.0
      %2137 = vmatpush1.msra.mxu0 0.0
      %2138 = vmatprep.subr.mxu0 0.0
      %2139 = vmatpush1.msra.mxu0 0.0
      %2140 = vmatprep.subr.mxu0 0.0
      %2141 = vmatpush1.msra.mxu0 0.0
      %2142 = vmatprep.subr.mxu0 0.0
      %2143 = vmatpush1.msra.mxu0 0.0
      %2144 = vmatprep.subr.mxu0 0.0
      %2145 = vmatpush1.msra.mxu0 0.0
      %2146 = vmatprep.subr.mxu0 0.0
      %2147 = vmatpush1.msra.mxu0 0.0
      %2148 = vmatprep.subr.mxu0 0.0
      %2149 = vmatpush1.msra.mxu0 0.0
      %2150 = vmatprep.subr.mxu0 0.0
      %2151 = vmatpush1.msra.mxu0 0.0
      %2152 = vmatprep.subr.mxu0 0.0
      %2153 = vmatpush1.msra.mxu0 0.0
      %2154 = vmatprep.subr.mxu0 0.0
      %2155 = vmatpush1.msra.mxu0 0.0
      %2156 = vmatprep.subr.mxu0 0.0
      %2157 = vmatpush1.msra.mxu0 0.0
      %2158 = vmatprep.subr.mxu0 0.0
      %2159 = vmatpush1.msra.mxu0 0.0
      %2160 = vmatprep.subr.mxu0 0.0
      %2161 = vmatpush1.msra.mxu0 0.0
      %2162 = vmatprep.subr.mxu0 0.0
      %2163 = vmatpush1.msra.mxu0 0.0
      %2164 = vmatprep.subr.mxu0 0.0
      %2165 = vmatpush1.msra.mxu0 0.0
      %2166 = vmatprep.subr.mxu0 0.0
      %v2167 = vand.u32 %v1178, 4294901760
      %2168 = vmatpush1.msra.mxu0 %v2167
      %2169 = vmatprep.subr.mxu0 0.0
      %2170 = vmatpush2.msra.mxu0 0.0
      %2171 = vmatprep.subr.mxu0 0.0
      %2172 = vmatpush2.msra.mxu0 0.0
      %2173 = vmatprep.subr.mxu0 0.0
      %2174 = vmatpush2.msra.mxu0 0.0
      %2175 = vmatprep.subr.mxu0 0.0
      %2176 = vmatpush2.msra.mxu0 0.0
      %2177 = vmatprep.subr.mxu0 0.0
      %2178 = vmatpush2.msra.mxu0 0.0
      %2179 = vmatprep.subr.mxu0 0.0
      %2180 = vmatpush2.msra.mxu0 0.0
      %2181 = vmatprep.subr.mxu0 0.0
      %2182 = vmatpush2.msra.mxu0 0.0
      %2183 = vmatprep.subr.mxu0 0.0
      %2184 = vmatpush2.msra.mxu0 0.0
      %2185 = vmatprep.subr.mxu0 0.0
      %2186 = vmatpush2.msra.mxu0 0.0
      %2187 = vmatprep.subr.mxu0 0.0
      %2188 = vmatpush2.msra.mxu0 0.0
      %2189 = vmatprep.subr.mxu0 0.0
      %2190 = vmatpush2.msra.mxu0 0.0
      %2191 = vmatprep.subr.mxu0 0.0
      %2192 = vmatpush2.msra.mxu0 0.0
      %2193 = vmatprep.subr.mxu0 0.0
      %2194 = vmatpush2.msra.mxu0 0.0
      %2195 = vmatprep.subr.mxu0 0.0
      %2196 = vmatpush2.msra.mxu0 0.0
      %2197 = vmatprep.subr.mxu0 0.0
      %2198 = vmatpush2.msra.mxu0 0.0
      %2199 = vmatprep.subr.mxu0 0.0
      %2200 = vmatpush2.msra.mxu0 0.0
      %2201 = vmatprep.mubr.f32.mxu0 0.0
      %v2202 = vand.u32 %v2134, 4294901760
      %v2203 = vsub.f32 %v2134, %v2202
      %v2204 = vand.u32 %v2203, 4294901760
      %v2205 = vsub.f32 %v2203, %v2204
      %v2206 = vand.u32 %v2205, 4294901760
      %2207 = vmatmul.mubr.f32.gmra.mxu0 %v2206
      %v2208 = vpop.f32.mrf.mxu0
      %v2209 = vadd.f32 %v2097, %v2208
      %v2210 = vpop.f32.mrf.mxu0
      %2211 = vdwg.mxu0
      %2212 = vmatprep.subr.mxu0 0.0
      %2213 = vmatpush1.msra.mxu0 0.0
      %2214 = vmatprep.subr.mxu0 0.0
      %2215 = vmatpush1.msra.mxu0 0.0
      %2216 = vmatprep.subr.mxu0 0.0
      %2217 = vmatpush1.msra.mxu0 0.0
      %2218 = vmatprep.subr.mxu0 0.0
      %2219 = vmatpush1.msra.mxu0 0.0
      %2220 = vmatprep.subr.mxu0 0.0
      %2221 = vmatpush1.msra.mxu0 0.0
      %2222 = vmatprep.subr.mxu0 0.0
      %2223 = vmatpush1.msra.mxu0 0.0
      %2224 = vmatprep.subr.mxu0 0.0
      %2225 = vmatpush1.msra.mxu0 0.0
      %2226 = vmatprep.subr.mxu0 0.0
      %2227 = vmatpush1.msra.mxu0 0.0
      %2228 = vmatprep.subr.mxu0 0.0
      %2229 = vmatpush1.msra.mxu0 0.0
      %2230 = vmatprep.subr.mxu0 0.0
      %2231 = vmatpush1.msra.mxu0 0.0
      %2232 = vmatprep.subr.mxu0 0.0
      %2233 = vmatpush1.msra.mxu0 0.0
      %2234 = vmatprep.subr.mxu0 0.0
      %2235 = vmatpush1.msra.mxu0 0.0
      %2236 = vmatprep.subr.mxu0 0.0
      %2237 = vmatpush1.msra.mxu0 0.0
      %2238 = vmatprep.subr.mxu0 0.0
      %2239 = vmatpush1.msra.mxu0 0.0
      %2240 = vmatprep.subr.mxu0 0.0
      %2241 = vmatpush1.msra.mxu0 0.0
      %2242 = vmatprep.subr.mxu0 0.0
      %v2243 = vand.u32 %v1178, 4294901760
      %v2244 = vsub.f32 %v1178, %v2243
      %v2245 = vand.u32 %v2244, 4294901760
      %v2246 = vsub.f32 %v2244, %v2245
      %v2247 = vand.u32 %v2246, 4294901760
      %2248 = vmatpush1.msra.mxu0 %v2247
      %2249 = vmatprep.subr.mxu0 0.0
      %2250 = vmatpush2.msra.mxu0 0.0
      %2251 = vmatprep.subr.mxu0 0.0
      %2252 = vmatpush2.msra.mxu0 0.0
      %2253 = vmatprep.subr.mxu0 0.0
      %2254 = vmatpush2.msra.mxu0 0.0
      %2255 = vmatprep.subr.mxu0 0.0
      %2256 = vmatpush2.msra.mxu0 0.0
      %2257 = vmatprep.subr.mxu0 0.0
      %2258 = vmatpush2.msra.mxu0 0.0
      %2259 = vmatprep.subr.mxu0 0.0
      %2260 = vmatpush2.msra.mxu0 0.0
      %2261 = vmatprep.subr.mxu0 0.0
      %2262 = vmatpush2.msra.mxu0 0.0
      %2263 = vmatprep.subr.mxu0 0.0
      %2264 = vmatpush2.msra.mxu0 0.0
      %2265 = vmatprep.subr.mxu0 0.0
      %2266 = vmatpush2.msra.mxu0 0.0
      %2267 = vmatprep.subr.mxu0 0.0
      %2268 = vmatpush2.msra.mxu0 0.0
      %2269 = vmatprep.subr.mxu0 0.0
      %2270 = vmatpush2.msra.mxu0 0.0
      %2271 = vmatprep.subr.mxu0 0.0
      %2272 = vmatpush2.msra.mxu0 0.0
      %2273 = vmatprep.subr.mxu0 0.0
      %2274 = vmatpush2.msra.mxu0 0.0
      %2275 = vmatprep.subr.mxu0 0.0
      %2276 = vmatpush2.msra.mxu0 0.0
      %2277 = vmatprep.subr.mxu0 0.0
      %2278 = vmatpush2.msra.mxu0 0.0
      %2279 = vmatprep.subr.mxu0 0.0
      %2280 = vmatpush2.msra.mxu0 0.0
      %2281 = vmatprep.mubr.f32.mxu0 0.0
      %v2282 = vand.u32 %v2134, 4294901760
      %2283 = vmatmul.mubr.f32.gmra.mxu0 %v2282
      %v2284 = vpop.f32.mrf.mxu0
      %v2285 = vadd.f32 %v2209, %v2284
      %v2286 = vpop.f32.mrf.mxu0
      %2287 = vdwg.mxu0
      %2288 = vmatprep.subr.mxu0 0.0
      %2289 = vmatpush1.msra.mxu0 0.0
      %2290 = vmatprep.subr.mxu0 0.0
      %2291 = vmatpush1.msra.mxu0 0.0
      %2292 = vmatprep.subr.mxu0 0.0
      %2293 = vmatpush1.msra.mxu0 0.0
      %2294 = vmatprep.subr.mxu0 0.0
      %2295 = vmatpush1.msra.mxu0 0.0
      %2296 = vmatprep.subr.mxu0 0.0
      %2297 = vmatpush1.msra.mxu0 0.0
      %2298 = vmatprep.subr.mxu0 0.0
      %2299 = vmatpush1.msra.mxu0 0.0
      %2300 = vmatprep.subr.mxu0 0.0
      %2301 = vmatpush1.msra.mxu0 0.0
      %2302 = vmatprep.subr.mxu0 0.0
      %2303 = vmatpush1.msra.mxu0 0.0
      %2304 = vmatprep.subr.mxu0 0.0
      %2305 = vmatpush1.msra.mxu0 0.0
      %2306 = vmatprep.subr.mxu0 0.0
      %2307 = vmatpush1.msra.mxu0 0.0
      %2308 = vmatprep.subr.mxu0 0.0
      %2309 = vmatpush1.msra.mxu0 0.0
      %2310 = vmatprep.subr.mxu0 0.0
      %2311 = vmatpush1.msra.mxu0 0.0
      %2312 = vmatprep.subr.mxu0 0.0
      %2313 = vmatpush1.msra.mxu0 0.0
      %2314 = vmatprep.subr.mxu0 0.0
      %2315 = vmatpush1.msra.mxu0 0.0
      %2316 = vmatprep.subr.mxu0 0.0
      %2317 = vmatpush1.msra.mxu0 0.0
      %2318 = vmatprep.subr.mxu0 0.0
      %v2319 = vand.u32 %v1178, 4294901760
      %v2320 = vsub.f32 %v1178, %v2319
      %2321 = vmatpush1.msra.mxu0 %v2320
      %2322 = vmatprep.subr.mxu0 0.0
      %2323 = vmatpush2.msra.mxu0 0.0
      %2324 = vmatprep.subr.mxu0 0.0
      %2325 = vmatpush2.msra.mxu0 0.0
      %2326 = vmatprep.subr.mxu0 0.0
      %2327 = vmatpush2.msra.mxu0 0.0
      %2328 = vmatprep.subr.mxu0 0.0
      %2329 = vmatpush2.msra.mxu0 0.0
      %2330 = vmatprep.subr.mxu0 0.0
      %2331 = vmatpush2.msra.mxu0 0.0
      %2332 = vmatprep.subr.mxu0 0.0
      %2333 = vmatpush2.msra.mxu0 0.0
      %2334 = vmatprep.subr.mxu0 0.0
      %2335 = vmatpush2.msra.mxu0 0.0
      %2336 = vmatprep.subr.mxu0 0.0
      %2337 = vmatpush2.msra.mxu0 0.0
      %2338 = vmatprep.subr.mxu0 0.0
      %2339 = vmatpush2.msra.mxu0 0.0
      %2340 = vmatprep.subr.mxu0 0.0
      %2341 = vmatpush2.msra.mxu0 0.0
      %2342 = vmatprep.subr.mxu0 0.0
      %2343 = vmatpush2.msra.mxu0 0.0
      %2344 = vmatprep.subr.mxu0 0.0
      %2345 = vmatpush2.msra.mxu0 0.0
      %2346 = vmatprep.subr.mxu0 0.0
      %2347 = vmatpush2.msra.mxu0 0.0
      %2348 = vmatprep.subr.mxu0 0.0
      %2349 = vmatpush2.msra.mxu0 0.0
      %2350 = vmatprep.subr.mxu0 0.0
      %2351 = vmatpush2.msra.mxu0 0.0
      %2352 = vmatprep.subr.mxu0 0.0
      %2353 = vmatpush2.msra.mxu0 0.0
      %2354 = vmatprep.mubr.f32.mxu0 0.0
      %v2355 = vand.u32 %v2134, 4294901760
      %v2356 = vsub.f32 %v2134, %v2355
      %2357 = vmatmul.mubr.f32.gmra.mxu0 %v2356
      %v2358 = vpop.f32.mrf.mxu0
      %v2359 = vadd.f32 %v2285, %v2358
      %v2360 = vpop.f32.mrf.mxu0
      %2361 = vdwg.mxu0
      %2362 = vmatprep.subr.mxu0 0.0
      %2363 = vmatpush1.msra.mxu0 0.0
      %2364 = vmatprep.subr.mxu0 0.0
      %2365 = vmatpush1.msra.mxu0 0.0
      %2366 = vmatprep.subr.mxu0 0.0
      %2367 = vmatpush1.msra.mxu0 0.0
      %2368 = vmatprep.subr.mxu0 0.0
      %2369 = vmatpush1.msra.mxu0 0.0
      %2370 = vmatprep.subr.mxu0 0.0
      %2371 = vmatpush1.msra.mxu0 0.0
      %2372 = vmatprep.subr.mxu0 0.0
      %2373 = vmatpush1.msra.mxu0 0.0
      %2374 = vmatprep.subr.mxu0 0.0
      %2375 = vmatpush1.msra.mxu0 0.0
      %2376 = vmatprep.subr.mxu0 0.0
      %2377 = vmatpush1.msra.mxu0 0.0
      %2378 = vmatprep.subr.mxu0 0.0
      %2379 = vmatpush1.msra.mxu0 0.0
      %2380 = vmatprep.subr.mxu0 0.0
      %2381 = vmatpush1.msra.mxu0 0.0
      %2382 = vmatprep.subr.mxu0 0.0
      %2383 = vmatpush1.msra.mxu0 0.0
      %2384 = vmatprep.subr.mxu0 0.0
      %2385 = vmatpush1.msra.mxu0 0.0
      %2386 = vmatprep.subr.mxu0 0.0
      %2387 = vmatpush1.msra.mxu0 0.0
      %2388 = vmatprep.subr.mxu0 0.0
      %2389 = vmatpush1.msra.mxu0 0.0
      %2390 = vmatprep.subr.mxu0 0.0
      %2391 = vmatpush1.msra.mxu0 0.0
      %2392 = vmatprep.subr.mxu0 0.0
      %v2393 = vand.u32 %v1178, 4294901760
      %2394 = vmatpush1.msra.mxu0 %v2393
      %2395 = vmatprep.subr.mxu0 0.0
      %2396 = vmatpush2.msra.mxu0 0.0
      %2397 = vmatprep.subr.mxu0 0.0
      %2398 = vmatpush2.msra.mxu0 0.0
      %2399 = vmatprep.subr.mxu0 0.0
      %2400 = vmatpush2.msra.mxu0 0.0
      %2401 = vmatprep.subr.mxu0 0.0
      %2402 = vmatpush2.msra.mxu0 0.0
      %2403 = vmatprep.subr.mxu0 0.0
      %2404 = vmatpush2.msra.mxu0 0.0
      %2405 = vmatprep.subr.mxu0 0.0
      %2406 = vmatpush2.msra.mxu0 0.0
      %2407 = vmatprep.subr.mxu0 0.0
      %2408 = vmatpush2.msra.mxu0 0.0
      %2409 = vmatprep.subr.mxu0 0.0
      %2410 = vmatpush2.msra.mxu0 0.0
      %2411 = vmatprep.subr.mxu0 0.0
      %2412 = vmatpush2.msra.mxu0 0.0
      %2413 = vmatprep.subr.mxu0 0.0
      %2414 = vmatpush2.msra.mxu0 0.0
      %2415 = vmatprep.subr.mxu0 0.0
      %2416 = vmatpush2.msra.mxu0 0.0
      %2417 = vmatprep.subr.mxu0 0.0
      %2418 = vmatpush2.msra.mxu0 0.0
      %2419 = vmatprep.subr.mxu0 0.0
      %2420 = vmatpush2.msra.mxu0 0.0
      %2421 = vmatprep.subr.mxu0 0.0
      %2422 = vmatpush2.msra.mxu0 0.0
      %2423 = vmatprep.subr.mxu0 0.0
      %2424 = vmatpush2.msra.mxu0 0.0
      %2425 = vmatprep.subr.mxu0 0.0
      %2426 = vmatpush2.msra.mxu0 0.0
      %2427 = vmatprep.mubr.f32.mxu0 0.0
      %v2428 = vand.u32 %v2134, 4294901760
      %v2429 = vsub.f32 %v2134, %v2428
      %v2430 = vand.u32 %v2429, 4294901760
      %2431 = vmatmul.mubr.f32.gmra.mxu0 %v2430
      %v2432 = vpop.f32.mrf.mxu0
      %v2433 = vadd.f32 %v2359, %v2432
      %v2434 = vpop.f32.mrf.mxu0
      %2435 = vdwg.mxu0
      %2436 = vmatprep.subr.mxu0 0.0
      %2437 = vmatpush1.msra.mxu0 0.0
      %2438 = vmatprep.subr.mxu0 0.0
      %2439 = vmatpush1.msra.mxu0 0.0
      %2440 = vmatprep.subr.mxu0 0.0
      %2441 = vmatpush1.msra.mxu0 0.0
      %2442 = vmatprep.subr.mxu0 0.0
      %2443 = vmatpush1.msra.mxu0 0.0
      %2444 = vmatprep.subr.mxu0 0.0
      %2445 = vmatpush1.msra.mxu0 0.0
      %2446 = vmatprep.subr.mxu0 0.0
      %2447 = vmatpush1.msra.mxu0 0.0
      %2448 = vmatprep.subr.mxu0 0.0
      %2449 = vmatpush1.msra.mxu0 0.0
      %2450 = vmatprep.subr.mxu0 0.0
      %2451 = vmatpush1.msra.mxu0 0.0
      %2452 = vmatprep.subr.mxu0 0.0
      %2453 = vmatpush1.msra.mxu0 0.0
      %2454 = vmatprep.subr.mxu0 0.0
      %2455 = vmatpush1.msra.mxu0 0.0
      %2456 = vmatprep.subr.mxu0 0.0
      %2457 = vmatpush1.msra.mxu0 0.0
      %2458 = vmatprep.subr.mxu0 0.0
      %2459 = vmatpush1.msra.mxu0 0.0
      %2460 = vmatprep.subr.mxu0 0.0
      %2461 = vmatpush1.msra.mxu0 0.0
      %2462 = vmatprep.subr.mxu0 0.0
      %2463 = vmatpush1.msra.mxu0 0.0
      %2464 = vmatprep.subr.mxu0 0.0
      %2465 = vmatpush1.msra.mxu0 0.0
      %2466 = vmatprep.subr.mxu0 0.0
      %v2467 = vand.u32 %v1178, 4294901760
      %v2468 = vsub.f32 %v1178, %v2467
      %v2469 = vand.u32 %v2468, 4294901760
      %2470 = vmatpush1.msra.mxu0 %v2469
      %2471 = vmatprep.subr.mxu0 0.0
      %2472 = vmatpush2.msra.mxu0 0.0
      %2473 = vmatprep.subr.mxu0 0.0
      %2474 = vmatpush2.msra.mxu0 0.0
      %2475 = vmatprep.subr.mxu0 0.0
      %2476 = vmatpush2.msra.mxu0 0.0
      %2477 = vmatprep.subr.mxu0 0.0
      %2478 = vmatpush2.msra.mxu0 0.0
      %2479 = vmatprep.subr.mxu0 0.0
      %2480 = vmatpush2.msra.mxu0 0.0
      %2481 = vmatprep.subr.mxu0 0.0
      %2482 = vmatpush2.msra.mxu0 0.0
      %2483 = vmatprep.subr.mxu0 0.0
      %2484 = vmatpush2.msra.mxu0 0.0
      %2485 = vmatprep.subr.mxu0 0.0
      %2486 = vmatpush2.msra.mxu0 0.0
      %2487 = vmatprep.subr.mxu0 0.0
      %2488 = vmatpush2.msra.mxu0 0.0
      %2489 = vmatprep.subr.mxu0 0.0
      %2490 = vmatpush2.msra.mxu0 0.0
      %2491 = vmatprep.subr.mxu0 0.0
      %2492 = vmatpush2.msra.mxu0 0.0
      %2493 = vmatprep.subr.mxu0 0.0
      %2494 = vmatpush2.msra.mxu0 0.0
      %2495 = vmatprep.subr.mxu0 0.0
      %2496 = vmatpush2.msra.mxu0 0.0
      %2497 = vmatprep.subr.mxu0 0.0
      %2498 = vmatpush2.msra.mxu0 0.0
      %2499 = vmatprep.subr.mxu0 0.0
      %2500 = vmatpush2.msra.mxu0 0.0
      %2501 = vmatprep.subr.mxu0 0.0
      %2502 = vmatpush2.msra.mxu0 0.0
      %2503 = vmatprep.mubr.f32.mxu0 0.0
      %v2504 = vand.u32 %v2134, 4294901760
      %2505 = vmatmul.mubr.f32.gmra.mxu0 %v2504
      %v2506 = vpop.f32.mrf.mxu0
      %v2507 = vadd.f32 %v2433, %v2506
      %v2508 = vpop.f32.mrf.mxu0
      %2509 = vdwg.mxu0
      %2510 = vmatprep.subr.mxu0 0.0
      %2511 = vmatpush1.msra.mxu0 0.0
      %2512 = vmatprep.subr.mxu0 0.0
      %2513 = vmatpush1.msra.mxu0 0.0
      %2514 = vmatprep.subr.mxu0 0.0
      %2515 = vmatpush1.msra.mxu0 0.0
      %2516 = vmatprep.subr.mxu0 0.0
      %2517 = vmatpush1.msra.mxu0 0.0
      %2518 = vmatprep.subr.mxu0 0.0
      %2519 = vmatpush1.msra.mxu0 0.0
      %2520 = vmatprep.subr.mxu0 0.0
      %2521 = vmatpush1.msra.mxu0 0.0
      %2522 = vmatprep.subr.mxu0 0.0
      %2523 = vmatpush1.msra.mxu0 0.0
      %2524 = vmatprep.subr.mxu0 0.0
      %2525 = vmatpush1.msra.mxu0 0.0
      %2526 = vmatprep.subr.mxu0 0.0
      %2527 = vmatpush1.msra.mxu0 0.0
      %2528 = vmatprep.subr.mxu0 0.0
      %2529 = vmatpush1.msra.mxu0 0.0
      %2530 = vmatprep.subr.mxu0 0.0
      %2531 = vmatpush1.msra.mxu0 0.0
      %2532 = vmatprep.subr.mxu0 0.0
      %2533 = vmatpush1.msra.mxu0 0.0
      %2534 = vmatprep.subr.mxu0 0.0
      %2535 = vmatpush1.msra.mxu0 0.0
      %2536 = vmatprep.subr.mxu0 0.0
      %2537 = vmatpush1.msra.mxu0 0.0
      %2538 = vmatprep.subr.mxu0 0.0
      %2539 = vmatpush1.msra.mxu0 0.0
      %2540 = vmatprep.subr.mxu0 0.0
      %v2541 = vand.u32 %v1178, 4294901760
      %2542 = vmatpush1.msra.mxu0 %v2541
      %2543 = vmatprep.subr.mxu0 0.0
      %2544 = vmatpush2.msra.mxu0 0.0
      %2545 = vmatprep.subr.mxu0 0.0
      %2546 = vmatpush2.msra.mxu0 0.0
      %2547 = vmatprep.subr.mxu0 0.0
      %2548 = vmatpush2.msra.mxu0 0.0
      %2549 = vmatprep.subr.mxu0 0.0
      %2550 = vmatpush2.msra.mxu0 0.0
      %2551 = vmatprep.subr.mxu0 0.0
      %2552 = vmatpush2.msra.mxu0 0.0
      %2553 = vmatprep.subr.mxu0 0.0
      %2554 = vmatpush2.msra.mxu0 0.0
      %2555 = vmatprep.subr.mxu0 0.0
      %2556 = vmatpush2.msra.mxu0 0.0
      %2557 = vmatprep.subr.mxu0 0.0
      %2558 = vmatpush2.msra.mxu0 0.0
      %2559 = vmatprep.subr.mxu0 0.0
      %2560 = vmatpush2.msra.mxu0 0.0
      %2561 = vmatprep.subr.mxu0 0.0
      %2562 = vmatpush2.msra.mxu0 0.0
      %2563 = vmatprep.subr.mxu0 0.0
      %2564 = vmatpush2.msra.mxu0 0.0
      %2565 = vmatprep.subr.mxu0 0.0
      %2566 = vmatpush2.msra.mxu0 0.0
      %2567 = vmatprep.subr.mxu0 0.0
      %2568 = vmatpush2.msra.mxu0 0.0
      %2569 = vmatprep.subr.mxu0 0.0
      %2570 = vmatpush2.msra.mxu0 0.0
      %2571 = vmatprep.subr.mxu0 0.0
      %2572 = vmatpush2.msra.mxu0 0.0
      %2573 = vmatprep.subr.mxu0 0.0
      %2574 = vmatpush2.msra.mxu0 0.0
      %2575 = vmatprep.mubr.f32.mxu0 0.0
      %v2576 = vand.u32 %v2134, 4294901760
      %2577 = vmatmul.mubr.f32.gmra.mxu0 %v2576
      %v2578 = vpop.f32.mrf.mxu0
      %v2579 = vadd.f32 %v2507, %v2578
      %v2580 = vpop.f32.mrf.mxu0
      %2581 = vdwg.mxu0
      %v2582 = vld [vmem:[%s703] sm:$0xff]
      %2584 = vset.pattern.permute.xlu0 0
      %2585 = vperm.xlu0 %2584, %v2582
      %v2586 = vpop.permute.xlu0 %2585
      %v2588 = vadd.f32 %v2579, %v2586
      %v2589 = vld [vmem:[%s691] sm:$0xff]
      %v2590 = vld [vmem:[%s695] sm:$0xff]
      %2592 = vset.pattern.permute.xlu0 0
      %2593 = vperm.xlu0 %2592, %v2590
      %v2594 = vpop.permute.xlu0 %2593
      %v2597 = vsel %vm1646, %v2589, 0
      %2599 = vmatprep.subr.mxu0 0.0
      %2600 = vmatpush1.msra.mxu0 0.0
      %2601 = vmatprep.subr.mxu0 0.0
      %2602 = vmatpush1.msra.mxu0 0.0
      %2603 = vmatprep.subr.mxu0 0.0
      %2604 = vmatpush1.msra.mxu0 0.0
      %2605 = vmatprep.subr.mxu0 0.0
      %2606 = vmatpush1.msra.mxu0 0.0
      %2607 = vmatprep.subr.mxu0 0.0
      %2608 = vmatpush1.msra.mxu0 0.0
      %2609 = vmatprep.subr.mxu0 0.0
      %2610 = vmatpush1.msra.mxu0 0.0
      %2611 = vmatprep.subr.mxu0 0.0
      %2612 = vmatpush1.msra.mxu0 0.0
      %2613 = vmatprep.subr.mxu0 0.0
      %2614 = vmatpush1.msra.mxu0 0.0
      %2615 = vmatprep.subr.mxu0 0.0
      %2616 = vmatpush1.msra.mxu0 0.0
      %2617 = vmatprep.subr.mxu0 0.0
      %2618 = vmatpush1.msra.mxu0 0.0
      %2619 = vmatprep.subr.mxu0 0.0
      %2620 = vmatpush1.msra.mxu0 0.0
      %2621 = vmatprep.subr.mxu0 0.0
      %2622 = vmatpush1.msra.mxu0 0.0
      %2623 = vmatprep.subr.mxu0 0.0
      %2624 = vmatpush1.msra.mxu0 0.0
      %2625 = vmatprep.subr.mxu0 0.0
      %2626 = vmatpush1.msra.mxu0 0.0
      %2627 = vmatprep.subr.mxu0 0.0
      %2628 = vmatpush1.msra.mxu0 0.0
      %2629 = vmatprep.subr.mxu0 0.0
      %v2630 = vand.u32 %v1652, 4294901760
      %2631 = vmatpush1.msra.mxu0 %v2630
      %2632 = vmatprep.subr.mxu0 0.0
      %2633 = vmatpush2.msra.mxu0 0.0
      %2634 = vmatprep.subr.mxu0 0.0
      %2635 = vmatpush2.msra.mxu0 0.0
      %2636 = vmatprep.subr.mxu0 0.0
      %2637 = vmatpush2.msra.mxu0 0.0
      %2638 = vmatprep.subr.mxu0 0.0
      %2639 = vmatpush2.msra.mxu0 0.0
      %2640 = vmatprep.subr.mxu0 0.0
      %2641 = vmatpush2.msra.mxu0 0.0
      %2642 = vmatprep.subr.mxu0 0.0
      %2643 = vmatpush2.msra.mxu0 0.0
      %2644 = vmatprep.subr.mxu0 0.0
      %2645 = vmatpush2.msra.mxu0 0.0
      %2646 = vmatprep.subr.mxu0 0.0
      %2647 = vmatpush2.msra.mxu0 0.0
      %2648 = vmatprep.subr.mxu0 0.0
      %2649 = vmatpush2.msra.mxu0 0.0
      %2650 = vmatprep.subr.mxu0 0.0
      %2651 = vmatpush2.msra.mxu0 0.0
      %2652 = vmatprep.subr.mxu0 0.0
      %2653 = vmatpush2.msra.mxu0 0.0
      %2654 = vmatprep.subr.mxu0 0.0
      %2655 = vmatpush2.msra.mxu0 0.0
      %2656 = vmatprep.subr.mxu0 0.0
      %2657 = vmatpush2.msra.mxu0 0.0
      %2658 = vmatprep.subr.mxu0 0.0
      %2659 = vmatpush2.msra.mxu0 0.0
      %2660 = vmatprep.subr.mxu0 0.0
      %2661 = vmatpush2.msra.mxu0 0.0
      %2662 = vmatprep.subr.mxu0 0.0
      %2663 = vmatpush2.msra.mxu0 0.0
      %2664 = vmatprep.mubr.f32.mxu0 0.0
      %v2665 = vand.u32 %v2597, 4294901760
      %v2666 = vsub.f32 %v2597, %v2665
      %v2667 = vand.u32 %v2666, 4294901760
      %v2668 = vsub.f32 %v2666, %v2667
      %v2669 = vand.u32 %v2668, 4294901760
      %2670 = vmatmul.mubr.f32.gmra.mxu0 %v2669
      %v2671 = vpop.f32.mrf.mxu0
      %v2672 = vadd.f32 %v2594, %v2671
      %v2673 = vpop.f32.mrf.mxu0
      %2674 = vdwg.mxu0
      %2675 = vmatprep.subr.mxu0 0.0
      %2676 = vmatpush1.msra.mxu0 0.0
      %2677 = vmatprep.subr.mxu0 0.0
      %2678 = vmatpush1.msra.mxu0 0.0
      %2679 = vmatprep.subr.mxu0 0.0
      %2680 = vmatpush1.msra.mxu0 0.0
      %2681 = vmatprep.subr.mxu0 0.0
      %2682 = vmatpush1.msra.mxu0 0.0
      %2683 = vmatprep.subr.mxu0 0.0
      %2684 = vmatpush1.msra.mxu0 0.0
      %2685 = vmatprep.subr.mxu0 0.0
      %2686 = vmatpush1.msra.mxu0 0.0
      %2687 = vmatprep.subr.mxu0 0.0
      %2688 = vmatpush1.msra.mxu0 0.0
      %2689 = vmatprep.subr.mxu0 0.0
      %2690 = vmatpush1.msra.mxu0 0.0
      %2691 = vmatprep.subr.mxu0 0.0
      %2692 = vmatpush1.msra.mxu0 0.0
      %2693 = vmatprep.subr.mxu0 0.0
      %2694 = vmatpush1.msra.mxu0 0.0
      %2695 = vmatprep.subr.mxu0 0.0
      %2696 = vmatpush1.msra.mxu0 0.0
      %2697 = vmatprep.subr.mxu0 0.0
      %2698 = vmatpush1.msra.mxu0 0.0
      %2699 = vmatprep.subr.mxu0 0.0
      %2700 = vmatpush1.msra.mxu0 0.0
      %2701 = vmatprep.subr.mxu0 0.0
      %2702 = vmatpush1.msra.mxu0 0.0
      %2703 = vmatprep.subr.mxu0 0.0
      %2704 = vmatpush1.msra.mxu0 0.0
      %2705 = vmatprep.subr.mxu0 0.0
      %v2706 = vand.u32 %v1652, 4294901760
      %v2707 = vsub.f32 %v1652, %v2706
      %v2708 = vand.u32 %v2707, 4294901760
      %v2709 = vsub.f32 %v2707, %v2708
      %v2710 = vand.u32 %v2709, 4294901760
      %2711 = vmatpush1.msra.mxu0 %v2710
      %2712 = vmatprep.subr.mxu0 0.0
      %2713 = vmatpush2.msra.mxu0 0.0
      %2714 = vmatprep.subr.mxu0 0.0
      %2715 = vmatpush2.msra.mxu0 0.0
      %2716 = vmatprep.subr.mxu0 0.0
      %2717 = vmatpush2.msra.mxu0 0.0
      %2718 = vmatprep.subr.mxu0 0.0
      %2719 = vmatpush2.msra.mxu0 0.0
      %2720 = vmatprep.subr.mxu0 0.0
      %2721 = vmatpush2.msra.mxu0 0.0
      %2722 = vmatprep.subr.mxu0 0.0
      %2723 = vmatpush2.msra.mxu0 0.0
      %2724 = vmatprep.subr.mxu0 0.0
      %2725 = vmatpush2.msra.mxu0 0.0
      %2726 = vmatprep.subr.mxu0 0.0
      %2727 = vmatpush2.msra.mxu0 0.0
      %2728 = vmatprep.subr.mxu0 0.0
      %2729 = vmatpush2.msra.mxu0 0.0
      %2730 = vmatprep.subr.mxu0 0.0
      %2731 = vmatpush2.msra.mxu0 0.0
      %2732 = vmatprep.subr.mxu0 0.0
      %2733 = vmatpush2.msra.mxu0 0.0
      %2734 = vmatprep.subr.mxu0 0.0
      %2735 = vmatpush2.msra.mxu0 0.0
      %2736 = vmatprep.subr.mxu0 0.0
      %2737 = vmatpush2.msra.mxu0 0.0
      %2738 = vmatprep.subr.mxu0 0.0
      %2739 = vmatpush2.msra.mxu0 0.0
      %2740 = vmatprep.subr.mxu0 0.0
      %2741 = vmatpush2.msra.mxu0 0.0
      %2742 = vmatprep.subr.mxu0 0.0
      %2743 = vmatpush2.msra.mxu0 0.0
      %2744 = vmatprep.mubr.f32.mxu0 0.0
      %v2745 = vand.u32 %v2597, 4294901760
      %2746 = vmatmul.mubr.f32.gmra.mxu0 %v2745
      %v2747 = vpop.f32.mrf.mxu0
      %v2748 = vadd.f32 %v2672, %v2747
      %v2749 = vpop.f32.mrf.mxu0
      %2750 = vdwg.mxu0
      %2751 = vmatprep.subr.mxu0 0.0
      %2752 = vmatpush1.msra.mxu0 0.0
      %2753 = vmatprep.subr.mxu0 0.0
      %2754 = vmatpush1.msra.mxu0 0.0
      %2755 = vmatprep.subr.mxu0 0.0
      %2756 = vmatpush1.msra.mxu0 0.0
      %2757 = vmatprep.subr.mxu0 0.0
      %2758 = vmatpush1.msra.mxu0 0.0
      %2759 = vmatprep.subr.mxu0 0.0
      %2760 = vmatpush1.msra.mxu0 0.0
      %2761 = vmatprep.subr.mxu0 0.0
      %2762 = vmatpush1.msra.mxu0 0.0
      %2763 = vmatprep.subr.mxu0 0.0
      %2764 = vmatpush1.msra.mxu0 0.0
      %2765 = vmatprep.subr.mxu0 0.0
      %2766 = vmatpush1.msra.mxu0 0.0
      %2767 = vmatprep.subr.mxu0 0.0
      %2768 = vmatpush1.msra.mxu0 0.0
      %2769 = vmatprep.subr.mxu0 0.0
      %2770 = vmatpush1.msra.mxu0 0.0
      %2771 = vmatprep.subr.mxu0 0.0
      %2772 = vmatpush1.msra.mxu0 0.0
      %2773 = vmatprep.subr.mxu0 0.0
      %2774 = vmatpush1.msra.mxu0 0.0
      %2775 = vmatprep.subr.mxu0 0.0
      %2776 = vmatpush1.msra.mxu0 0.0
      %2777 = vmatprep.subr.mxu0 0.0
      %2778 = vmatpush1.msra.mxu0 0.0
      %2779 = vmatprep.subr.mxu0 0.0
      %2780 = vmatpush1.msra.mxu0 0.0
      %2781 = vmatprep.subr.mxu0 0.0
      %v2782 = vand.u32 %v1652, 4294901760
      %v2783 = vsub.f32 %v1652, %v2782
      %2784 = vmatpush1.msra.mxu0 %v2783
      %2785 = vmatprep.subr.mxu0 0.0
      %2786 = vmatpush2.msra.mxu0 0.0
      %2787 = vmatprep.subr.mxu0 0.0
      %2788 = vmatpush2.msra.mxu0 0.0
      %2789 = vmatprep.subr.mxu0 0.0
      %2790 = vmatpush2.msra.mxu0 0.0
      %2791 = vmatprep.subr.mxu0 0.0
      %2792 = vmatpush2.msra.mxu0 0.0
      %2793 = vmatprep.subr.mxu0 0.0
      %2794 = vmatpush2.msra.mxu0 0.0
      %2795 = vmatprep.subr.mxu0 0.0
      %2796 = vmatpush2.msra.mxu0 0.0
      %2797 = vmatprep.subr.mxu0 0.0
      %2798 = vmatpush2.msra.mxu0 0.0
      %2799 = vmatprep.subr.mxu0 0.0
      %2800 = vmatpush2.msra.mxu0 0.0
      %2801 = vmatprep.subr.mxu0 0.0
      %2802 = vmatpush2.msra.mxu0 0.0
      %2803 = vmatprep.subr.mxu0 0.0
      %2804 = vmatpush2.msra.mxu0 0.0
      %2805 = vmatprep.subr.mxu0 0.0
      %2806 = vmatpush2.msra.mxu0 0.0
      %2807 = vmatprep.subr.mxu0 0.0
      %2808 = vmatpush2.msra.mxu0 0.0
      %2809 = vmatprep.subr.mxu0 0.0
      %2810 = vmatpush2.msra.mxu0 0.0
      %2811 = vmatprep.subr.mxu0 0.0
      %2812 = vmatpush2.msra.mxu0 0.0
      %2813 = vmatprep.subr.mxu0 0.0
      %2814 = vmatpush2.msra.mxu0 0.0
      %2815 = vmatprep.subr.mxu0 0.0
      %2816 = vmatpush2.msra.mxu0 0.0
      %2817 = vmatprep.mubr.f32.mxu0 0.0
      %v2818 = vand.u32 %v2597, 4294901760
      %v2819 = vsub.f32 %v2597, %v2818
      %2820 = vmatmul.mubr.f32.gmra.mxu0 %v2819
      %v2821 = vpop.f32.mrf.mxu0
      %v2822 = vadd.f32 %v2748, %v2821
      %v2823 = vpop.f32.mrf.mxu0
      %2824 = vdwg.mxu0
      %2825 = vmatprep.subr.mxu0 0.0
      %2826 = vmatpush1.msra.mxu0 0.0
      %2827 = vmatprep.subr.mxu0 0.0
      %2828 = vmatpush1.msra.mxu0 0.0
      %2829 = vmatprep.subr.mxu0 0.0
      %2830 = vmatpush1.msra.mxu0 0.0
      %2831 = vmatprep.subr.mxu0 0.0
      %2832 = vmatpush1.msra.mxu0 0.0
      %2833 = vmatprep.subr.mxu0 0.0
      %2834 = vmatpush1.msra.mxu0 0.0
      %2835 = vmatprep.subr.mxu0 0.0
      %2836 = vmatpush1.msra.mxu0 0.0
      %2837 = vmatprep.subr.mxu0 0.0
      %2838 = vmatpush1.msra.mxu0 0.0
      %2839 = vmatprep.subr.mxu0 0.0
      %2840 = vmatpush1.msra.mxu0 0.0
      %2841 = vmatprep.subr.mxu0 0.0
      %2842 = vmatpush1.msra.mxu0 0.0
      %2843 = vmatprep.subr.mxu0 0.0
      %2844 = vmatpush1.msra.mxu0 0.0
      %2845 = vmatprep.subr.mxu0 0.0
      %2846 = vmatpush1.msra.mxu0 0.0
      %2847 = vmatprep.subr.mxu0 0.0
      %2848 = vmatpush1.msra.mxu0 0.0
      %2849 = vmatprep.subr.mxu0 0.0
      %2850 = vmatpush1.msra.mxu0 0.0
      %2851 = vmatprep.subr.mxu0 0.0
      %2852 = vmatpush1.msra.mxu0 0.0
      %2853 = vmatprep.subr.mxu0 0.0
      %2854 = vmatpush1.msra.mxu0 0.0
      %2855 = vmatprep.subr.mxu0 0.0
      %v2856 = vand.u32 %v1652, 4294901760
      %2857 = vmatpush1.msra.mxu0 %v2856
      %2858 = vmatprep.subr.mxu0 0.0
      %2859 = vmatpush2.msra.mxu0 0.0
      %2860 = vmatprep.subr.mxu0 0.0
      %2861 = vmatpush2.msra.mxu0 0.0
      %2862 = vmatprep.subr.mxu0 0.0
      %2863 = vmatpush2.msra.mxu0 0.0
      %2864 = vmatprep.subr.mxu0 0.0
      %2865 = vmatpush2.msra.mxu0 0.0
      %2866 = vmatprep.subr.mxu0 0.0
      %2867 = vmatpush2.msra.mxu0 0.0
      %2868 = vmatprep.subr.mxu0 0.0
      %2869 = vmatpush2.msra.mxu0 0.0
      %2870 = vmatprep.subr.mxu0 0.0
      %2871 = vmatpush2.msra.mxu0 0.0
      %2872 = vmatprep.subr.mxu0 0.0
      %2873 = vmatpush2.msra.mxu0 0.0
      %2874 = vmatprep.subr.mxu0 0.0
      %2875 = vmatpush2.msra.mxu0 0.0
      %2876 = vmatprep.subr.mxu0 0.0
      %2877 = vmatpush2.msra.mxu0 0.0
      %2878 = vmatprep.subr.mxu0 0.0
      %2879 = vmatpush2.msra.mxu0 0.0
      %2880 = vmatprep.subr.mxu0 0.0
      %2881 = vmatpush2.msra.mxu0 0.0
      %2882 = vmatprep.subr.mxu0 0.0
      %2883 = vmatpush2.msra.mxu0 0.0
      %2884 = vmatprep.subr.mxu0 0.0
      %2885 = vmatpush2.msra.mxu0 0.0
      %2886 = vmatprep.subr.mxu0 0.0
      %2887 = vmatpush2.msra.mxu0 0.0
      %2888 = vmatprep.subr.mxu0 0.0
      %2889 = vmatpush2.msra.mxu0 0.0
      %2890 = vmatprep.mubr.f32.mxu0 0.0
      %v2891 = vand.u32 %v2597, 4294901760
      %v2892 = vsub.f32 %v2597, %v2891
      %v2893 = vand.u32 %v2892, 4294901760
      %2894 = vmatmul.mubr.f32.gmra.mxu0 %v2893
      %v2895 = vpop.f32.mrf.mxu0
      %v2896 = vadd.f32 %v2822, %v2895
      %v2897 = vpop.f32.mrf.mxu0
      %2898 = vdwg.mxu0
      %2899 = vmatprep.subr.mxu0 0.0
      %2900 = vmatpush1.msra.mxu0 0.0
      %2901 = vmatprep.subr.mxu0 0.0
      %2902 = vmatpush1.msra.mxu0 0.0
      %2903 = vmatprep.subr.mxu0 0.0
      %2904 = vmatpush1.msra.mxu0 0.0
      %2905 = vmatprep.subr.mxu0 0.0
      %2906 = vmatpush1.msra.mxu0 0.0
      %2907 = vmatprep.subr.mxu0 0.0
      %2908 = vmatpush1.msra.mxu0 0.0
      %2909 = vmatprep.subr.mxu0 0.0
      %2910 = vmatpush1.msra.mxu0 0.0
      %2911 = vmatprep.subr.mxu0 0.0
      %2912 = vmatpush1.msra.mxu0 0.0
      %2913 = vmatprep.subr.mxu0 0.0
      %2914 = vmatpush1.msra.mxu0 0.0
      %2915 = vmatprep.subr.mxu0 0.0
      %2916 = vmatpush1.msra.mxu0 0.0
      %2917 = vmatprep.subr.mxu0 0.0
      %2918 = vmatpush1.msra.mxu0 0.0
      %2919 = vmatprep.subr.mxu0 0.0
      %2920 = vmatpush1.msra.mxu0 0.0
      %2921 = vmatprep.subr.mxu0 0.0
      %2922 = vmatpush1.msra.mxu0 0.0
      %2923 = vmatprep.subr.mxu0 0.0
      %2924 = vmatpush1.msra.mxu0 0.0
      %2925 = vmatprep.subr.mxu0 0.0
      %2926 = vmatpush1.msra.mxu0 0.0
      %2927 = vmatprep.subr.mxu0 0.0
      %2928 = vmatpush1.msra.mxu0 0.0
      %2929 = vmatprep.subr.mxu0 0.0
      %v2930 = vand.u32 %v1652, 4294901760
      %v2931 = vsub.f32 %v1652, %v2930
      %v2932 = vand.u32 %v2931, 4294901760
      %2933 = vmatpush1.msra.mxu0 %v2932
      %2934 = vmatprep.subr.mxu0 0.0
      %2935 = vmatpush2.msra.mxu0 0.0
      %2936 = vmatprep.subr.mxu0 0.0
      %2937 = vmatpush2.msra.mxu0 0.0
      %2938 = vmatprep.subr.mxu0 0.0
      %2939 = vmatpush2.msra.mxu0 0.0
      %2940 = vmatprep.subr.mxu0 0.0
      %2941 = vmatpush2.msra.mxu0 0.0
      %2942 = vmatprep.subr.mxu0 0.0
      %2943 = vmatpush2.msra.mxu0 0.0
      %2944 = vmatprep.subr.mxu0 0.0
      %2945 = vmatpush2.msra.mxu0 0.0
      %2946 = vmatprep.subr.mxu0 0.0
      %2947 = vmatpush2.msra.mxu0 0.0
      %2948 = vmatprep.subr.mxu0 0.0
      %2949 = vmatpush2.msra.mxu0 0.0
      %2950 = vmatprep.subr.mxu0 0.0
      %2951 = vmatpush2.msra.mxu0 0.0
      %2952 = vmatprep.subr.mxu0 0.0
      %2953 = vmatpush2.msra.mxu0 0.0
      %2954 = vmatprep.subr.mxu0 0.0
      %2955 = vmatpush2.msra.mxu0 0.0
      %2956 = vmatprep.subr.mxu0 0.0
      %2957 = vmatpush2.msra.mxu0 0.0
      %2958 = vmatprep.subr.mxu0 0.0
      %2959 = vmatpush2.msra.mxu0 0.0
      %2960 = vmatprep.subr.mxu0 0.0
      %2961 = vmatpush2.msra.mxu0 0.0
      %2962 = vmatprep.subr.mxu0 0.0
      %2963 = vmatpush2.msra.mxu0 0.0
      %2964 = vmatprep.subr.mxu0 0.0
      %2965 = vmatpush2.msra.mxu0 0.0
      %2966 = vmatprep.mubr.f32.mxu0 0.0
      %v2967 = vand.u32 %v2597, 4294901760
      %2968 = vmatmul.mubr.f32.gmra.mxu0 %v2967
      %v2969 = vpop.f32.mrf.mxu0
      %v2970 = vadd.f32 %v2896, %v2969
      %v2971 = vpop.f32.mrf.mxu0
      %2972 = vdwg.mxu0
      %2973 = vmatprep.subr.mxu0 0.0
      %2974 = vmatpush1.msra.mxu0 0.0
      %2975 = vmatprep.subr.mxu0 0.0
      %2976 = vmatpush1.msra.mxu0 0.0
      %2977 = vmatprep.subr.mxu0 0.0
      %2978 = vmatpush1.msra.mxu0 0.0
      %2979 = vmatprep.subr.mxu0 0.0
      %2980 = vmatpush1.msra.mxu0 0.0
      %2981 = vmatprep.subr.mxu0 0.0
      %2982 = vmatpush1.msra.mxu0 0.0
      %2983 = vmatprep.subr.mxu0 0.0
      %2984 = vmatpush1.msra.mxu0 0.0
      %2985 = vmatprep.subr.mxu0 0.0
      %2986 = vmatpush1.msra.mxu0 0.0
      %2987 = vmatprep.subr.mxu0 0.0
      %2988 = vmatpush1.msra.mxu0 0.0
      %2989 = vmatprep.subr.mxu0 0.0
      %2990 = vmatpush1.msra.mxu0 0.0
      %2991 = vmatprep.subr.mxu0 0.0
      %2992 = vmatpush1.msra.mxu0 0.0
      %2993 = vmatprep.subr.mxu0 0.0
      %2994 = vmatpush1.msra.mxu0 0.0
      %2995 = vmatprep.subr.mxu0 0.0
      %2996 = vmatpush1.msra.mxu0 0.0
      %2997 = vmatprep.subr.mxu0 0.0
      %2998 = vmatpush1.msra.mxu0 0.0
      %2999 = vmatprep.subr.mxu0 0.0
      %3000 = vmatpush1.msra.mxu0 0.0
      %3001 = vmatprep.subr.mxu0 0.0
      %3002 = vmatpush1.msra.mxu0 0.0
      %3003 = vmatprep.subr.mxu0 0.0
      %v3004 = vand.u32 %v1652, 4294901760
      %3005 = vmatpush1.msra.mxu0 %v3004
      %3006 = vmatprep.subr.mxu0 0.0
      %3007 = vmatpush2.msra.mxu0 0.0
      %3008 = vmatprep.subr.mxu0 0.0
      %3009 = vmatpush2.msra.mxu0 0.0
      %3010 = vmatprep.subr.mxu0 0.0
      %3011 = vmatpush2.msra.mxu0 0.0
      %3012 = vmatprep.subr.mxu0 0.0
      %3013 = vmatpush2.msra.mxu0 0.0
      %3014 = vmatprep.subr.mxu0 0.0
      %3015 = vmatpush2.msra.mxu0 0.0
      %3016 = vmatprep.subr.mxu0 0.0
      %3017 = vmatpush2.msra.mxu0 0.0
      %3018 = vmatprep.subr.mxu0 0.0
      %3019 = vmatpush2.msra.mxu0 0.0
      %3020 = vmatprep.subr.mxu0 0.0
      %3021 = vmatpush2.msra.mxu0 0.0
      %3022 = vmatprep.subr.mxu0 0.0
      %3023 = vmatpush2.msra.mxu0 0.0
      %3024 = vmatprep.subr.mxu0 0.0
      %3025 = vmatpush2.msra.mxu0 0.0
      %3026 = vmatprep.subr.mxu0 0.0
      %3027 = vmatpush2.msra.mxu0 0.0
      %3028 = vmatprep.subr.mxu0 0.0
      %3029 = vmatpush2.msra.mxu0 0.0
      %3030 = vmatprep.subr.mxu0 0.0
      %3031 = vmatpush2.msra.mxu0 0.0
      %3032 = vmatprep.subr.mxu0 0.0
      %3033 = vmatpush2.msra.mxu0 0.0
      %3034 = vmatprep.subr.mxu0 0.0
      %3035 = vmatpush2.msra.mxu0 0.0
      %3036 = vmatprep.subr.mxu0 0.0
      %3037 = vmatpush2.msra.mxu0 0.0
      %3038 = vmatprep.mubr.f32.mxu0 0.0
      %v3039 = vand.u32 %v2597, 4294901760
      %3040 = vmatmul.mubr.f32.gmra.mxu0 %v3039
      %v3041 = vpop.f32.mrf.mxu0
      %v3042 = vadd.f32 %v2970, %v3041
      %v3043 = vpop.f32.mrf.mxu0
      %3044 = vdwg.mxu0
      %v3046 = vsel %vm718, %v1644, 0
      %3048 = vmatprep.subr.mxu0 0.0
      %3049 = vmatpush1.msra.mxu0 0.0
      %3050 = vmatprep.subr.mxu0 0.0
      %3051 = vmatpush1.msra.mxu0 0.0
      %3052 = vmatprep.subr.mxu0 0.0
      %3053 = vmatpush1.msra.mxu0 0.0
      %3054 = vmatprep.subr.mxu0 0.0
      %3055 = vmatpush1.msra.mxu0 0.0
      %3056 = vmatprep.subr.mxu0 0.0
      %3057 = vmatpush1.msra.mxu0 0.0
      %3058 = vmatprep.subr.mxu0 0.0
      %3059 = vmatpush1.msra.mxu0 0.0
      %3060 = vmatprep.subr.mxu0 0.0
      %3061 = vmatpush1.msra.mxu0 0.0
      %3062 = vmatprep.subr.mxu0 0.0
      %3063 = vmatpush1.msra.mxu0 0.0
      %3064 = vmatprep.subr.mxu0 0.0
      %3065 = vmatpush1.msra.mxu0 0.0
      %3066 = vmatprep.subr.mxu0 0.0
      %3067 = vmatpush1.msra.mxu0 0.0
      %3068 = vmatprep.subr.mxu0 0.0
      %3069 = vmatpush1.msra.mxu0 0.0
      %3070 = vmatprep.subr.mxu0 0.0
      %3071 = vmatpush1.msra.mxu0 0.0
      %3072 = vmatprep.subr.mxu0 0.0
      %3073 = vmatpush1.msra.mxu0 0.0
      %3074 = vmatprep.subr.mxu0 0.0
      %3075 = vmatpush1.msra.mxu0 0.0
      %3076 = vmatprep.subr.mxu0 0.0
      %v3077 = vand.u32 %v715, 4294901760
      %3078 = vmatpush1.msra.mxu0 %v3077
      %3079 = vmatprep.subr.mxu0 0.0
      %v3080 = vand.u32 %v714, 4294901760
      %3081 = vmatpush1.msra.mxu0 %v3080
      %3082 = vmatprep.subr.mxu0 0.0
      %3083 = vmatpush2.msra.mxu0 0.0
      %3084 = vmatprep.subr.mxu0 0.0
      %3085 = vmatpush2.msra.mxu0 0.0
      %3086 = vmatprep.subr.mxu0 0.0
      %3087 = vmatpush2.msra.mxu0 0.0
      %3088 = vmatprep.subr.mxu0 0.0
      %3089 = vmatpush2.msra.mxu0 0.0
      %3090 = vmatprep.subr.mxu0 0.0
      %3091 = vmatpush2.msra.mxu0 0.0
      %3092 = vmatprep.subr.mxu0 0.0
      %3093 = vmatpush2.msra.mxu0 0.0
      %3094 = vmatprep.subr.mxu0 0.0
      %3095 = vmatpush2.msra.mxu0 0.0
      %3096 = vmatprep.subr.mxu0 0.0
      %3097 = vmatpush2.msra.mxu0 0.0
      %3098 = vmatprep.subr.mxu0 0.0
      %3099 = vmatpush2.msra.mxu0 0.0
      %3100 = vmatprep.subr.mxu0 0.0
      %3101 = vmatpush2.msra.mxu0 0.0
      %3102 = vmatprep.subr.mxu0 0.0
      %3103 = vmatpush2.msra.mxu0 0.0
      %3104 = vmatprep.subr.mxu0 0.0
      %3105 = vmatpush2.msra.mxu0 0.0
      %3106 = vmatprep.subr.mxu0 0.0
      %3107 = vmatpush2.msra.mxu0 0.0
      %3108 = vmatprep.subr.mxu0 0.0
      %3109 = vmatpush2.msra.mxu0 0.0
      %3110 = vmatprep.subr.mxu0 0.0
      %3111 = vmatpush2.msra.mxu0 0.0
      %3112 = vmatprep.subr.mxu0 0.0
      %3113 = vmatpush2.msra.mxu0 0.0
      %3114 = vmatprep.mubr.f32.mxu0 0.0
      %v3115 = vand.u32 %v3046, 4294901760
      %v3116 = vsub.f32 %v3046, %v3115
      %v3117 = vand.u32 %v3116, 4294901760
      %v3118 = vsub.f32 %v3116, %v3117
      %v3119 = vand.u32 %v3118, 4294901760
      %3120 = vmatmul.mubr.f32.gmra.mxu0 %v3119
      %v3121 = vpop.f32.mrf.mxu0
      %v3122 = vadd.f32 %v3042, %v3121
      %v3123 = vpop.f32.mrf.mxu0
      %3124 = vdwg.mxu0
      %3125 = vmatprep.subr.mxu0 0.0
      %3126 = vmatpush1.msra.mxu0 0.0
      %3127 = vmatprep.subr.mxu0 0.0
      %3128 = vmatpush1.msra.mxu0 0.0
      %3129 = vmatprep.subr.mxu0 0.0
      %3130 = vmatpush1.msra.mxu0 0.0
      %3131 = vmatprep.subr.mxu0 0.0
      %3132 = vmatpush1.msra.mxu0 0.0
      %3133 = vmatprep.subr.mxu0 0.0
      %3134 = vmatpush1.msra.mxu0 0.0
      %3135 = vmatprep.subr.mxu0 0.0
      %3136 = vmatpush1.msra.mxu0 0.0
      %3137 = vmatprep.subr.mxu0 0.0
      %3138 = vmatpush1.msra.mxu0 0.0
      %3139 = vmatprep.subr.mxu0 0.0
      %3140 = vmatpush1.msra.mxu0 0.0
      %3141 = vmatprep.subr.mxu0 0.0
      %3142 = vmatpush1.msra.mxu0 0.0
      %3143 = vmatprep.subr.mxu0 0.0
      %3144 = vmatpush1.msra.mxu0 0.0
      %3145 = vmatprep.subr.mxu0 0.0
      %3146 = vmatpush1.msra.mxu0 0.0
      %3147 = vmatprep.subr.mxu0 0.0
      %3148 = vmatpush1.msra.mxu0 0.0
      %3149 = vmatprep.subr.mxu0 0.0
      %3150 = vmatpush1.msra.mxu0 0.0
      %3151 = vmatprep.subr.mxu0 0.0
      %3152 = vmatpush1.msra.mxu0 0.0
      %3153 = vmatprep.subr.mxu0 0.0
      %v3154 = vand.u32 %v715, 4294901760
      %v3155 = vsub.f32 %v715, %v3154
      %v3156 = vand.u32 %v3155, 4294901760
      %v3157 = vsub.f32 %v3155, %v3156
      %v3158 = vand.u32 %v3157, 4294901760
      %3159 = vmatpush1.msra.mxu0 %v3158
      %3160 = vmatprep.subr.mxu0 0.0
      %v3161 = vand.u32 %v714, 4294901760
      %v3162 = vsub.f32 %v714, %v3161
      %v3163 = vand.u32 %v3162, 4294901760
      %v3164 = vsub.f32 %v3162, %v3163
      %v3165 = vand.u32 %v3164, 4294901760
      %3166 = vmatpush1.msra.mxu0 %v3165
      %3167 = vmatprep.subr.mxu0 0.0
      %3168 = vmatpush2.msra.mxu0 0.0
      %3169 = vmatprep.subr.mxu0 0.0
      %3170 = vmatpush2.msra.mxu0 0.0
      %3171 = vmatprep.subr.mxu0 0.0
      %3172 = vmatpush2.msra.mxu0 0.0
      %3173 = vmatprep.subr.mxu0 0.0
      %3174 = vmatpush2.msra.mxu0 0.0
      %3175 = vmatprep.subr.mxu0 0.0
      %3176 = vmatpush2.msra.mxu0 0.0
      %3177 = vmatprep.subr.mxu0 0.0
      %3178 = vmatpush2.msra.mxu0 0.0
      %3179 = vmatprep.subr.mxu0 0.0
      %3180 = vmatpush2.msra.mxu0 0.0
      %3181 = vmatprep.subr.mxu0 0.0
      %3182 = vmatpush2.msra.mxu0 0.0
      %3183 = vmatprep.subr.mxu0 0.0
      %3184 = vmatpush2.msra.mxu0 0.0
      %3185 = vmatprep.subr.mxu0 0.0
      %3186 = vmatpush2.msra.mxu0 0.0
      %3187 = vmatprep.subr.mxu0 0.0
      %3188 = vmatpush2.msra.mxu0 0.0
      %3189 = vmatprep.subr.mxu0 0.0
      %3190 = vmatpush2.msra.mxu0 0.0
      %3191 = vmatprep.subr.mxu0 0.0
      %3192 = vmatpush2.msra.mxu0 0.0
      %3193 = vmatprep.subr.mxu0 0.0
      %3194 = vmatpush2.msra.mxu0 0.0
      %3195 = vmatprep.subr.mxu0 0.0
      %3196 = vmatpush2.msra.mxu0 0.0
      %3197 = vmatprep.subr.mxu0 0.0
      %3198 = vmatpush2.msra.mxu0 0.0
      %3199 = vmatprep.mubr.f32.mxu0 0.0
      %v3200 = vand.u32 %v3046, 4294901760
      %3201 = vmatmul.mubr.f32.gmra.mxu0 %v3200
      %v3202 = vpop.f32.mrf.mxu0
      %v3203 = vadd.f32 %v3122, %v3202
      %v3204 = vpop.f32.mrf.mxu0
      %3205 = vdwg.mxu0
      %3206 = vmatprep.subr.mxu0 0.0
      %3207 = vmatpush1.msra.mxu0 0.0
      %3208 = vmatprep.subr.mxu0 0.0
      %3209 = vmatpush1.msra.mxu0 0.0
      %3210 = vmatprep.subr.mxu0 0.0
      %3211 = vmatpush1.msra.mxu0 0.0
      %3212 = vmatprep.subr.mxu0 0.0
      %3213 = vmatpush1.msra.mxu0 0.0
      %3214 = vmatprep.subr.mxu0 0.0
      %3215 = vmatpush1.msra.mxu0 0.0
      %3216 = vmatprep.subr.mxu0 0.0
      %3217 = vmatpush1.msra.mxu0 0.0
      %3218 = vmatprep.subr.mxu0 0.0
      %3219 = vmatpush1.msra.mxu0 0.0
      %3220 = vmatprep.subr.mxu0 0.0
      %3221 = vmatpush1.msra.mxu0 0.0
      %3222 = vmatprep.subr.mxu0 0.0
      %3223 = vmatpush1.msra.mxu0 0.0
      %3224 = vmatprep.subr.mxu0 0.0
      %3225 = vmatpush1.msra.mxu0 0.0
      %3226 = vmatprep.subr.mxu0 0.0
      %3227 = vmatpush1.msra.mxu0 0.0
      %3228 = vmatprep.subr.mxu0 0.0
      %3229 = vmatpush1.msra.mxu0 0.0
      %3230 = vmatprep.subr.mxu0 0.0
      %3231 = vmatpush1.msra.mxu0 0.0
      %3232 = vmatprep.subr.mxu0 0.0
      %3233 = vmatpush1.msra.mxu0 0.0
      %3234 = vmatprep.subr.mxu0 0.0
      %v3235 = vand.u32 %v715, 4294901760
      %v3236 = vsub.f32 %v715, %v3235
      %3237 = vmatpush1.msra.mxu0 %v3236
      %3238 = vmatprep.subr.mxu0 0.0
      %v3239 = vand.u32 %v714, 4294901760
      %v3240 = vsub.f32 %v714, %v3239
      %3241 = vmatpush1.msra.mxu0 %v3240
      %3242 = vmatprep.subr.mxu0 0.0
      %3243 = vmatpush2.msra.mxu0 0.0
      %3244 = vmatprep.subr.mxu0 0.0
      %3245 = vmatpush2.msra.mxu0 0.0
      %3246 = vmatprep.subr.mxu0 0.0
      %3247 = vmatpush2.msra.mxu0 0.0
      %3248 = vmatprep.subr.mxu0 0.0
      %3249 = vmatpush2.msra.mxu0 0.0
      %3250 = vmatprep.subr.mxu0 0.0
      %3251 = vmatpush2.msra.mxu0 0.0
      %3252 = vmatprep.subr.mxu0 0.0
      %3253 = vmatpush2.msra.mxu0 0.0
      %3254 = vmatprep.subr.mxu0 0.0
      %3255 = vmatpush2.msra.mxu0 0.0
      %3256 = vmatprep.subr.mxu0 0.0
      %3257 = vmatpush2.msra.mxu0 0.0
      %3258 = vmatprep.subr.mxu0 0.0
      %3259 = vmatpush2.msra.mxu0 0.0
      %3260 = vmatprep.subr.mxu0 0.0
      %3261 = vmatpush2.msra.mxu0 0.0
      %3262 = vmatprep.subr.mxu0 0.0
      %3263 = vmatpush2.msra.mxu0 0.0
      %3264 = vmatprep.subr.mxu0 0.0
      %3265 = vmatpush2.msra.mxu0 0.0
      %3266 = vmatprep.subr.mxu0 0.0
      %3267 = vmatpush2.msra.mxu0 0.0
      %3268 = vmatprep.subr.mxu0 0.0
      %3269 = vmatpush2.msra.mxu0 0.0
      %3270 = vmatprep.subr.mxu0 0.0
      %3271 = vmatpush2.msra.mxu0 0.0
      %3272 = vmatprep.subr.mxu0 0.0
      %3273 = vmatpush2.msra.mxu0 0.0
      %3274 = vmatprep.mubr.f32.mxu0 0.0
      %v3275 = vand.u32 %v3046, 4294901760
      %v3276 = vsub.f32 %v3046, %v3275
      %3277 = vmatmul.mubr.f32.gmra.mxu0 %v3276
      %v3278 = vpop.f32.mrf.mxu0
      %v3279 = vadd.f32 %v3203, %v3278
      %v3280 = vpop.f32.mrf.mxu0
      %3281 = vdwg.mxu0
      %3282 = vmatprep.subr.mxu0 0.0
      %3283 = vmatpush1.msra.mxu0 0.0
      %3284 = vmatprep.subr.mxu0 0.0
      %3285 = vmatpush1.msra.mxu0 0.0
      %3286 = vmatprep.subr.mxu0 0.0
      %3287 = vmatpush1.msra.mxu0 0.0
      %3288 = vmatprep.subr.mxu0 0.0
      %3289 = vmatpush1.msra.mxu0 0.0
      %3290 = vmatprep.subr.mxu0 0.0
      %3291 = vmatpush1.msra.mxu0 0.0
      %3292 = vmatprep.subr.mxu0 0.0
      %3293 = vmatpush1.msra.mxu0 0.0
      %3294 = vmatprep.subr.mxu0 0.0
      %3295 = vmatpush1.msra.mxu0 0.0
      %3296 = vmatprep.subr.mxu0 0.0
      %3297 = vmatpush1.msra.mxu0 0.0
      %3298 = vmatprep.subr.mxu0 0.0
      %3299 = vmatpush1.msra.mxu0 0.0
      %3300 = vmatprep.subr.mxu0 0.0
      %3301 = vmatpush1.msra.mxu0 0.0
      %3302 = vmatprep.subr.mxu0 0.0
      %3303 = vmatpush1.msra.mxu0 0.0
      %3304 = vmatprep.subr.mxu0 0.0
      %3305 = vmatpush1.msra.mxu0 0.0
      %3306 = vmatprep.subr.mxu0 0.0
      %3307 = vmatpush1.msra.mxu0 0.0
      %3308 = vmatprep.subr.mxu0 0.0
      %3309 = vmatpush1.msra.mxu0 0.0
      %3310 = vmatprep.subr.mxu0 0.0
      %v3311 = vand.u32 %v715, 4294901760
      %3312 = vmatpush1.msra.mxu0 %v3311
      %3313 = vmatprep.subr.mxu0 0.0
      %v3314 = vand.u32 %v714, 4294901760
      %3315 = vmatpush1.msra.mxu0 %v3314
      %3316 = vmatprep.subr.mxu0 0.0
      %3317 = vmatpush2.msra.mxu0 0.0
      %3318 = vmatprep.subr.mxu0 0.0
      %3319 = vmatpush2.msra.mxu0 0.0
      %3320 = vmatprep.subr.mxu0 0.0
      %3321 = vmatpush2.msra.mxu0 0.0
      %3322 = vmatprep.subr.mxu0 0.0
      %3323 = vmatpush2.msra.mxu0 0.0
      %3324 = vmatprep.subr.mxu0 0.0
      %3325 = vmatpush2.msra.mxu0 0.0
      %3326 = vmatprep.subr.mxu0 0.0
      %3327 = vmatpush2.msra.mxu0 0.0
      %3328 = vmatprep.subr.mxu0 0.0
      %3329 = vmatpush2.msra.mxu0 0.0
      %3330 = vmatprep.subr.mxu0 0.0
      %3331 = vmatpush2.msra.mxu0 0.0
      %3332 = vmatprep.subr.mxu0 0.0
      %3333 = vmatpush2.msra.mxu0 0.0
      %3334 = vmatprep.subr.mxu0 0.0
      %3335 = vmatpush2.msra.mxu0 0.0
      %3336 = vmatprep.subr.mxu0 0.0
      %3337 = vmatpush2.msra.mxu0 0.0
      %3338 = vmatprep.subr.mxu0 0.0
      %3339 = vmatpush2.msra.mxu0 0.0
      %3340 = vmatprep.subr.mxu0 0.0
      %3341 = vmatpush2.msra.mxu0 0.0
      %3342 = vmatprep.subr.mxu0 0.0
      %3343 = vmatpush2.msra.mxu0 0.0
      %3344 = vmatprep.subr.mxu0 0.0
      %3345 = vmatpush2.msra.mxu0 0.0
      %3346 = vmatprep.subr.mxu0 0.0
      %3347 = vmatpush2.msra.mxu0 0.0
      %3348 = vmatprep.mubr.f32.mxu0 0.0
      %v3349 = vand.u32 %v3046, 4294901760
      %v3350 = vsub.f32 %v3046, %v3349
      %v3351 = vand.u32 %v3350, 4294901760
      %3352 = vmatmul.mubr.f32.gmra.mxu0 %v3351
      %v3353 = vpop.f32.mrf.mxu0
      %v3354 = vadd.f32 %v3279, %v3353
      %v3355 = vpop.f32.mrf.mxu0
      %3356 = vdwg.mxu0
      %3357 = vmatprep.subr.mxu0 0.0
      %3358 = vmatpush1.msra.mxu0 0.0
      %3359 = vmatprep.subr.mxu0 0.0
      %3360 = vmatpush1.msra.mxu0 0.0
      %3361 = vmatprep.subr.mxu0 0.0
      %3362 = vmatpush1.msra.mxu0 0.0
      %3363 = vmatprep.subr.mxu0 0.0
      %3364 = vmatpush1.msra.mxu0 0.0
      %3365 = vmatprep.subr.mxu0 0.0
      %3366 = vmatpush1.msra.mxu0 0.0
      %3367 = vmatprep.subr.mxu0 0.0
      %3368 = vmatpush1.msra.mxu0 0.0
      %3369 = vmatprep.subr.mxu0 0.0
      %3370 = vmatpush1.msra.mxu0 0.0
      %3371 = vmatprep.subr.mxu0 0.0
      %3372 = vmatpush1.msra.mxu0 0.0
      %3373 = vmatprep.subr.mxu0 0.0
      %3374 = vmatpush1.msra.mxu0 0.0
      %3375 = vmatprep.subr.mxu0 0.0
      %3376 = vmatpush1.msra.mxu0 0.0
      %3377 = vmatprep.subr.mxu0 0.0
      %3378 = vmatpush1.msra.mxu0 0.0
      %3379 = vmatprep.subr.mxu0 0.0
      %3380 = vmatpush1.msra.mxu0 0.0
      %3381 = vmatprep.subr.mxu0 0.0
      %3382 = vmatpush1.msra.mxu0 0.0
      %3383 = vmatprep.subr.mxu0 0.0
      %3384 = vmatpush1.msra.mxu0 0.0
      %3385 = vmatprep.subr.mxu0 0.0
      %v3386 = vand.u32 %v715, 4294901760
      %v3387 = vsub.f32 %v715, %v3386
      %v3388 = vand.u32 %v3387, 4294901760
      %3389 = vmatpush1.msra.mxu0 %v3388
      %3390 = vmatprep.subr.mxu0 0.0
      %v3391 = vand.u32 %v714, 4294901760
      %v3392 = vsub.f32 %v714, %v3391
      %v3393 = vand.u32 %v3392, 4294901760
      %3394 = vmatpush1.msra.mxu0 %v3393
      %3395 = vmatprep.subr.mxu0 0.0
      %3396 = vmatpush2.msra.mxu0 0.0
      %3397 = vmatprep.subr.mxu0 0.0
      %3398 = vmatpush2.msra.mxu0 0.0
      %3399 = vmatprep.subr.mxu0 0.0
      %3400 = vmatpush2.msra.mxu0 0.0
      %3401 = vmatprep.subr.mxu0 0.0
      %3402 = vmatpush2.msra.mxu0 0.0
      %3403 = vmatprep.subr.mxu0 0.0
      %3404 = vmatpush2.msra.mxu0 0.0
      %3405 = vmatprep.subr.mxu0 0.0
      %3406 = vmatpush2.msra.mxu0 0.0
      %3407 = vmatprep.subr.mxu0 0.0
      %3408 = vmatpush2.msra.mxu0 0.0
      %3409 = vmatprep.subr.mxu0 0.0
      %3410 = vmatpush2.msra.mxu0 0.0
      %3411 = vmatprep.subr.mxu0 0.0
      %3412 = vmatpush2.msra.mxu0 0.0
      %3413 = vmatprep.subr.mxu0 0.0
      %3414 = vmatpush2.msra.mxu0 0.0
      %3415 = vmatprep.subr.mxu0 0.0
      %3416 = vmatpush2.msra.mxu0 0.0
      %3417 = vmatprep.subr.mxu0 0.0
      %3418 = vmatpush2.msra.mxu0 0.0
      %3419 = vmatprep.subr.mxu0 0.0
      %3420 = vmatpush2.msra.mxu0 0.0
      %3421 = vmatprep.subr.mxu0 0.0
      %3422 = vmatpush2.msra.mxu0 0.0
      %3423 = vmatprep.subr.mxu0 0.0
      %3424 = vmatpush2.msra.mxu0 0.0
      %3425 = vmatprep.subr.mxu0 0.0
      %3426 = vmatpush2.msra.mxu0 0.0
      %3427 = vmatprep.mubr.f32.mxu0 0.0
      %v3428 = vand.u32 %v3046, 4294901760
      %3429 = vmatmul.mubr.f32.gmra.mxu0 %v3428
      %v3430 = vpop.f32.mrf.mxu0
      %v3431 = vadd.f32 %v3354, %v3430
      %v3432 = vpop.f32.mrf.mxu0
      %3433 = vdwg.mxu0
      %3434 = vmatprep.subr.mxu0 0.0
      %3435 = vmatpush1.msra.mxu0 0.0
      %3436 = vmatprep.subr.mxu0 0.0
      %3437 = vmatpush1.msra.mxu0 0.0
      %3438 = vmatprep.subr.mxu0 0.0
      %3439 = vmatpush1.msra.mxu0 0.0
      %3440 = vmatprep.subr.mxu0 0.0
      %3441 = vmatpush1.msra.mxu0 0.0
      %3442 = vmatprep.subr.mxu0 0.0
      %3443 = vmatpush1.msra.mxu0 0.0
      %3444 = vmatprep.subr.mxu0 0.0
      %3445 = vmatpush1.msra.mxu0 0.0
      %3446 = vmatprep.subr.mxu0 0.0
      %3447 = vmatpush1.msra.mxu0 0.0
      %3448 = vmatprep.subr.mxu0 0.0
      %3449 = vmatpush1.msra.mxu0 0.0
      %3450 = vmatprep.subr.mxu0 0.0
      %3451 = vmatpush1.msra.mxu0 0.0
      %3452 = vmatprep.subr.mxu0 0.0
      %3453 = vmatpush1.msra.mxu0 0.0
      %3454 = vmatprep.subr.mxu0 0.0
      %3455 = vmatpush1.msra.mxu0 0.0
      %3456 = vmatprep.subr.mxu0 0.0
      %3457 = vmatpush1.msra.mxu0 0.0
      %3458 = vmatprep.subr.mxu0 0.0
      %3459 = vmatpush1.msra.mxu0 0.0
      %3460 = vmatprep.subr.mxu0 0.0
      %3461 = vmatpush1.msra.mxu0 0.0
      %3462 = vmatprep.subr.mxu0 0.0
      %v3463 = vand.u32 %v715, 4294901760
      %3464 = vmatpush1.msra.mxu0 %v3463
      %3465 = vmatprep.subr.mxu0 0.0
      %v3466 = vand.u32 %v714, 4294901760
      %3467 = vmatpush1.msra.mxu0 %v3466
      %3468 = vmatprep.subr.mxu0 0.0
      %3469 = vmatpush2.msra.mxu0 0.0
      %3470 = vmatprep.subr.mxu0 0.0
      %3471 = vmatpush2.msra.mxu0 0.0
      %3472 = vmatprep.subr.mxu0 0.0
      %3473 = vmatpush2.msra.mxu0 0.0
      %3474 = vmatprep.subr.mxu0 0.0
      %3475 = vmatpush2.msra.mxu0 0.0
      %3476 = vmatprep.subr.mxu0 0.0
      %3477 = vmatpush2.msra.mxu0 0.0
      %3478 = vmatprep.subr.mxu0 0.0
      %3479 = vmatpush2.msra.mxu0 0.0
      %3480 = vmatprep.subr.mxu0 0.0
      %3481 = vmatpush2.msra.mxu0 0.0
      %3482 = vmatprep.subr.mxu0 0.0
      %3483 = vmatpush2.msra.mxu0 0.0
      %3484 = vmatprep.subr.mxu0 0.0
      %3485 = vmatpush2.msra.mxu0 0.0
      %3486 = vmatprep.subr.mxu0 0.0
      %3487 = vmatpush2.msra.mxu0 0.0
      %3488 = vmatprep.subr.mxu0 0.0
      %3489 = vmatpush2.msra.mxu0 0.0
      %3490 = vmatprep.subr.mxu0 0.0
      %3491 = vmatpush2.msra.mxu0 0.0
      %3492 = vmatprep.subr.mxu0 0.0
      %3493 = vmatpush2.msra.mxu0 0.0
      %3494 = vmatprep.subr.mxu0 0.0
      %3495 = vmatpush2.msra.mxu0 0.0
      %3496 = vmatprep.subr.mxu0 0.0
      %3497 = vmatpush2.msra.mxu0 0.0
      %3498 = vmatprep.subr.mxu0 0.0
      %3499 = vmatpush2.msra.mxu0 0.0
      %3500 = vmatprep.mubr.f32.mxu0 0.0
      %v3501 = vand.u32 %v3046, 4294901760
      %3502 = vmatmul.mubr.f32.gmra.mxu0 %v3501
      %v3503 = vpop.f32.mrf.mxu0
      %v3504 = vadd.f32 %v3431, %v3503
      %v3505 = vpop.f32.mrf.mxu0
      %3506 = vdwg.mxu0
      %v3507 = vmul.f32 %v2588, 0.35355338
      %v3508 = vsel %vm2132, %v3507, -inf
      %v3509 = vrot.slane %v3508, 4
      %v3510 = vmax.f32 %v3508, %v3509
      %v3511 = vrot.slane %v3510, 2
      %v3512 = vmax.f32 %v3510, %v3511
      %v3513 = vrot.slane %v3512, 1
      %v3514 = vmax.f32 %v3512, %v3513
      %v3515 = vsub.f32 %v3507, %v3514
      %v3516 = vmul.f32 %v3515, 1.442695
      %v3517 = vpow.pop %v3516
      %v3518 = vsel %vm2132, %v3517, 0.0
      %v3519 = vrot.slane %v3518, 4
      %v3520 = vadd.f32 %v3518, %v3519
      %v3521 = vrot.slane %v3520, 2
      %v3522 = vadd.f32 %v3520, %v3521
      %v3523 = vrot.slane %v3522, 1
      %v3524 = vadd.f32 %v3522, %v3523
      %v3525 = vrcp.pop %v3524
      %v3526 = vmul.f32 %v3517, %v3525
      %v3527 = vmul.f32 %v3526, %v3504
      %3528 = vst.msk [vmem:[%s711] sm:$0xff] %vm2132, %v3527
      %p3529 = scmp.lt.s32.totalorder %s29, 1
      %s3530 = scalar_select %p3529, %s29, 1
      %p3531 = scmp.lt.s32.totalorder %s30, 1
      %s3532 = scalar_select %p3531, %s30, 1
      %s3533 = smul.addr %s3530, 2
      %s3534 = sadd.s32 %s3532, %s3533
      %s3535 = smul.addr %s3534, 8
      %s3536 = scalar_lea.vmem %s14, %s3535
      // Predicated region
      $region77: #{tpu_custom_call.1} parent=75 // pred_check
        %p3537 = pneg %p421
      $region78: #{tpu_custom_call.1} parent=75 // pred_check_branch
        %3539 = sbr.rel (%p3537) target = $region80
      $region79: #{tpu_custom_call.1} parent=75 // pred_region
        _
      $region80: #{tpu_custom_call.1} parent=75 // pred_fallthru
        _
    $region76: #{tpu_custom_call.1} parent=5 // pred_fallthru
      _
    %p3540 = scmp.le.s32.totalorder 2, %s20
    // Predicated region
    $region81: #{tpu_custom_call.1} parent=5 // pred_check
      %p3541 = pneg %p3540
    $region82: #{tpu_custom_call.1} parent=5 // pred_check_branch
      %3543 = sbr.rel (%p3541) target = $region84
    $region83: #{tpu_custom_call.1} parent=5 // pred_region
      %s3544 = ssub.s32 %s20, 2
      // Predicated region
      $region85: #{tpu_custom_call.1} parent=83 // pred_check
        %p3545 = pneg %p427
      $region86: #{tpu_custom_call.1} parent=83 // pred_check_branch
        %3547 = sbr.rel (%p3545) target = $region88
      $region87: #{tpu_custom_call.1} parent=83 // pred_region
        %p3548 = scmp.lt.s32.totalorder %s31, 1
        %s3549 = scalar_select %p3548, %s31, 1
        %p3550 = scmp.lt.s32.totalorder %s32, 1
        %s3551 = scalar_select %p3550, %s32, 1
        %s3552 = smul.addr %s3549, 2
        %s3553 = sadd.s32 %s3551, %s3552
        %s3554 = smul.addr %s3553, 8
        %s3555 = scalar_lea.vmem %s14, %s3554
      $region88: #{tpu_custom_call.1} parent=83 // pred_fallthru
        _
    $region84: #{tpu_custom_call.1} parent=5 // pred_fallthru
      _
  $region6: #{tpu_custom_call.1} parent=0 // loop_footer
    %s24 = sadd.s32 1, %s20
  $region7: #{tpu_custom_call.1} parent=0 // loop_footer_branch
    %19 = sbr.rel target = $region3
  $region8: #{tpu_custom_call.1} parent=0 // loop_exit
    _

</llo_original>
